<compile_context>
chip_gen: v7x
topology: tpu7x:2x2x1
jax: 0.10.0
libtpu: 0.0.40
codegen_flags: <defaults>
</compile_context>

<pallas_src>
import jax
import jax.numpy as jnp
from jax import lax
from jax.experimental import pallas as pl
from jax.experimental.pallas import tpu as pltpu

C = 128                   # hidden channels
K1 = 7                    # width of first conv kernel (height 2 -> 2 in-chans)
K2 = 15                   # width of convs 2 & 3
NPAIR = (K2 + 1) // 2     # 8 paired taps (1 zero tap + 15 real taps)
PAD = 8                   # zero rows on each side of every sample segment
FEAT1 = 2 * K1 + 2        # conv1 im2col features (14), padded to 16
EPS = 1e-5                # torch BatchNorm default eps
RCHUNK = 512              # rows per in-kernel chunk (bounds vreg live ranges)
TARGET_ROWS = 2048        # matmul rows per grid step (amortizes ~0.35us/step)


def _row_chunks(m):
    """Static (offset, size) row chunks; the last chunk absorbs the remainder."""
    n_full = max(1, m // RCHUNK)
    sizes = [RCHUNK] * n_full
    sizes[-1] += m - RCHUNK * n_full
    out, off = [], 0
    for s in sizes:
        out.append((off, s))
        off += s
    return out


def classifier_kernel(xcol_ref, mask_ref, w1_ref, b1_ref, w2_ref, b2_ref,
                      w3_ref, b3_ref, w4_ref, b4_ref, out_ref, hpad1, hpad2):
    M = out_ref.shape[-1]          # computed rows per grid step (= B * S)
    Mp = hpad1.shape[0]            # slab rows = M + 2*PAD
    chunks = _row_chunks(M)
    paired = (w2_ref.shape[1] == 2 * C)   # (8,256,128) paired vs (15,128,128)

    # Keep the 8-row outer pads of both bf16 slabs zero.  Re-zeroing just the
    # edges every step is 4 tiny stores and stays correct however the parallel
    # grid axis is sharded across TensorCores (each core owns its own scratch).
    edge = jnp.zeros((PAD, C), hpad1.dtype)
    hpad1[pl.ds(0, PAD), :] = edge
    hpad1[pl.ds(Mp - PAD, PAD), :] = edge
    hpad2[pl.ds(0, PAD), :] = edge
    hpad2[pl.ds(Mp - PAD, PAD), :] = edge

    # ---- conv1 (2,7) + BN1 + ReLU: (rc,16)@(16,128) bf16 matmuls -----------
    for r0, rc in chunks:
        h1 = jnp.dot(xcol_ref[0, pl.ds(r0, rc), :], w1_ref[...],
                     preferred_element_type=jnp.float32)
        h1 = jnp.maximum(h1 + b1_ref[...], 0.0) * mask_ref[pl.ds(r0, rc), :]
        hpad1[pl.ds(PAD + r0, rc), :] = h1.astype(hpad1.dtype)   # bf16 slab

    # ---- (1,15) convs as shifted-tap matmuls out of the bf16 slabs ---------
    def conv15(src_ref, w_ref, r0, rc):
        acc = None
        if paired:          # two shifted taps folded into one K=256 matmul
            for j in range(NPAIR):
                lhs = jnp.concatenate(
                    [src_ref[pl.ds(r0 + 2 * j, rc), :],
                     src_ref[pl.ds(r0 + 2 * j + 1, rc), :]], axis=-1)
                term = jnp.dot(lhs, w_ref[j],
                               preferred_element_type=jnp.float32)
                acc = term if acc is None else acc + term
        else:               # v5e-friendly: 15 unpaired K=128 taps
            for t in range(K2):
                term = jnp.dot(src_ref[pl.ds(r0 + t + 1, rc), :], w_ref[t],
                               preferred_element_type=jnp.float32)
                acc = term if acc is None else acc + term
        return acc

    for r0, rc in chunks:
        h2 = jnp.maximum(conv15(hpad1, w2_ref, r0, rc) + b2_ref[...], 0.0)
        h2 = h2 * mask_ref[pl.ds(r0, rc), :]
        hpad2[pl.ds(PAD + r0, rc), :] = h2.astype(hpad2.dtype)

    # ---- conv3 + conv4 (128 -> 1), emitted as a lane-dense (1, M) row ------
    rows = []
    for r0, rc in chunks:
        h3 = jnp.maximum(conv15(hpad2, w3_ref, r0, rc) + b3_ref[...], 0.0)
        # h3 pad rows are unmasked garbage; the wrapper slices them off.
        # (8,128) x (rc,128) contracted on channels -> (8, rc): puts the
        # per-row logits on the lane axis (only row 0 is kept).
        rows.append(lax.dot_general(
            w4_ref[...], h3,
            dimension_numbers=(((1,), (1,)), ((), ())),
            preferred_element_type=jnp.float32))
    full = rows[0] if len(rows) == 1 else jnp.concatenate(rows, axis=-1)
    out_ref[...] = (full[0:1, :] + b4_ref[...])[None]


def _pick_batch_block(n, w, target_rows=TARGET_ROWS):
    """Samples per grid step: ~target_rows matmul rows, >=2 (preferably even)
    grid steps so the parallel grid axis can feed both v7x TensorCores."""
    s = w + 2 * PAD
    divs = [d for d in range(1, n + 1) if n % d == 0 and (d * s) % 8 == 0]
    if not divs:
        return None
    pref = [d for d in divs if n // d >= 2] or divs
    tgt = max(1, target_rows // s)
    under = [d for d in pref if d <= tgt]

    def pick(cand, fn):
        even = [d for d in cand if (n // d) % 2 == 0]
        return fn(even) if even else fn(cand)

    return pick(under, max) if under else pick(pref, min)


def classifier_forward(x_nchw, params, batch_block=None, pair_taps=True):
    N, cin, H, W = x_nchw.shape
    assert cin == 1 and H == 2, "classifier forward implies (N, 1, 2, W) input"
    S = W + 2 * PAD            # per-sample segment rows: [8 zero | W | 8 zero]

    Np, B = N, batch_block
    if B is None:
        B = _pick_batch_block(N, W)
        if B is None:                      # pad the batch instead of erroring
            Np = -(-N // 8) * 8
            B = _pick_batch_block(Np, W)
    assert B is not None and Np % B == 0 and (B * S) % 8 == 0
    if Np != N:
        x_nchw = jnp.pad(x_nchw, ((0, Np - N), (0, 0), (0, 0), (0, 0)))

    G = Np // B                # grid steps
    M = B * S                  # computed rows per grid step (lane-dense out)
    Mp = M + 2 * PAD           # slab rows (8 zero rows above and below)

    # ---- fold eval-mode BatchNorm into the conv weights / biases -----------
    def fold(w, b, bn):
        gamma, beta, mean, var = bn
        scale = gamma / jnp.sqrt(var + EPS)
        return w * scale[:, None, None, None], (b - mean) * scale + beta

    w1f, b1f = fold(params['w1'], params['b1'], params['bn1'])
    w2f, b2f = fold(params['w2'], params['b2'], params['bn2'])
    w3f, b3f = fold(params['w3'], params['b3'], params['bn3'])

    # conv1 as an im2col matrix; feature index f = 2*tap + height
    w1_col = jnp.transpose(w1f[:, 0], (2, 1, 0)).reshape(2 * K1, C)      # (14,128)
    w1_col = jnp.pad(w1_col, ((0, FEAT1 - 2 * K1), (0, 0))).astype(jnp.bfloat16)

    # conv2/conv3 taps: paired (zero tap + fold taps (2j,2j+1) -> K=256) feeds
    # the 256-deep v6e/v7x MXU; pair_taps=False keeps 15 plain K=128 taps (v5e).
    def taps_matrix(wf):
        wk = jnp.transpose(wf[:, :, 0, :], (2, 1, 0))                    # (15,Cin,Cout)
        if pair_taps:
            wk = jnp.concatenate([jnp.zeros((1, C, C), wk.dtype), wk], 0)
            wk = wk.reshape(NPAIR, 2 * C, C)
        return wk.astype(jnp.bfloat16)

    w2_t, w3_t = taps_matrix(w2f), taps_matrix(w3f)
    b1_k, b2_k, b3_k = b1f[None, :], b2f[None, :], b3f[None, :]
    # conv4 weight replicated to 8 rows so the lane-dense NT matmul has a full
    # sublane tile; only row 0 of its result is used.
    w4_k = jnp.tile(params['w4'][:, :, 0, 0], (8, 1))                    # (8, 128)
    b4_k = params['b4'][None, :]                                         # (1, 1)

    # ---- host im2col of the 2-row input, laid out in slab geometry ---------
    xw = jnp.transpose(x_nchw[:, 0], (0, 2, 1))                 # (Np, W, 2)
    xw = jnp.pad(xw, ((0, 0), (K1 // 2, K1 // 2), (0, 0)))      # (Np, W+6, 2)
    x_col = jnp.concatenate([xw[:, d:d + W, :] for d in range(K1)], -1)  # (Np,W,14)
    x_col = jnp.pad(x_col, ((0, 0), (PAD, PAD), (0, FEAT1 - 2 * K1)))    # (Np,S,16)
    x_col = x_col.reshape(G, M, FEAT1).astype(jnp.bfloat16)

    # 1.0 at data rows, 0.0 at per-sample pad rows (so shifted taps never read
    # activations across a sample boundary)
    pos = jnp.arange(M, dtype=jnp.int32) % S
    mask = ((pos >= PAD) & (pos < PAD + W)).astype(jnp.float32)[:, None]

    out = pl.pallas_call(
        classifier_kernel,
        out_shape=jax.ShapeDtypeStruct((G, 1, M), jnp.float32),
        grid_spec=pltpu.PrefetchScalarGridSpec(
            num_scalar_prefetch=0,
            grid=(G,),
            # weights / mask have constant index maps; the pipeline re-uses the
            # same block each step, so their DMA cost is paid once.
            in_specs=[
                pl.BlockSpec((1, M, FEAT1), lambda g: (g, 0, 0)),
                pl.BlockSpec((M, 1), lambda g: (0, 0)),
                pl.BlockSpec((FEAT1, C), lambda g: (0, 0)),
                pl.BlockSpec((1, C), lambda g: (0, 0)),
                pl.BlockSpec(w2_t.shape, lambda g: (0, 0, 0)),
                pl.BlockSpec((1, C), lambda g: (0, 0)),
                pl.BlockSpec(w3_t.shape, lambda g: (0, 0, 0)),
                pl.BlockSpec((1, C), lambda g: (0, 0)),
                pl.BlockSpec((8, C), lambda g: (0, 0)),
                pl.BlockSpec((1, 1), lambda g: (0, 0)),
            ],
            out_specs=pl.BlockSpec((1, 1, M), lambda g: (g, 0, 0)),
            scratch_shapes=[
                pltpu.VMEM((Mp, C), jnp.bfloat16),   # padded h1 slab (bf16)
                pltpu.VMEM((Mp, C), jnp.bfloat16),   # padded h2 slab (bf16)
            ],
        ),
        compiler_params=pltpu.CompilerParams(
            dimension_semantics=("parallel",)),
    )(x_col, mask, w1_col, b1_k, w2_t, b2_k, w3_t, b3_k, w4_k, b4_k)

    # un-slab: keep each sample's W interior logits, drop padded batch samples
    out = out.reshape(G, B, S)[:, :, PAD:PAD + W].reshape(Np, W)
    return out[:N]


def reference_forward(x, params):
    """Pure-JAX reference: conv -> BN(eval) -> ReLU chain, NCHW like PyTorch."""
    def conv(x, w, b, pad):
        y = lax.conv_general_dilated(
            x, w, window_strides=(1, 1), padding=((0, 0), (pad, pad)),
            dimension_numbers=('NCHW', 'OIHW', 'NCHW'))
        return y + b[None, :, None, None]

    def bn(x, p):
        gamma, beta, mean, var = p
        return ((x - mean[None, :, None, None])
                / jnp.sqrt(var[None, :, None, None] + EPS)
                * gamma[None, :, None, None] + beta[None, :, None, None])

    y = jax.nn.relu(bn(conv(x, params['w1'], params['b1'], 3), params['bn1']))
    y = jax.nn.relu(bn(conv(y, params['w2'], params['b2'], 7), params['bn2']))
    y = jax.nn.relu(bn(conv(y, params['w3'], params['b3'], 7), params['bn3']))
    y = conv(y, params['w4'], params['b4'], 0)
    return y[:, 0, 0, :]


def init_params(key):
    ks = jax.random.split(key, 20)

    def conv_w(k, shape):
        fan_in = shape[1] * shape[2] * shape[3]
        return jax.random.normal(k, shape, jnp.float32) / jnp.sqrt(fan_in)

    def bn_params(k):
        k0, k1, k2, k3 = jax.random.split(k, 4)
        gamma = 1.0 + 0.1 * jax.random.normal(k0, (C,), jnp.float32)
        beta = 0.1 * jax.random.normal(k1, (C,), jnp.float32)
        mean = 0.1 * jax.random.normal(k2, (C,), jnp.float32)
        var = 0.5 + jax.random.uniform(k3, (C,), jnp.float32)
        return (gamma, beta, mean, var)

    return {
        'w1': conv_w(ks[0], (C, 1, 2, K1)),
        'b1': 0.01 * jax.random.normal(ks[1], (C,), jnp.float32),
        'bn1': bn_params(ks[2]),
        'w2': conv_w(ks[3], (C, C, 1, K2)),
        'b2': 0.01 * jax.random.normal(ks[4], (C,), jnp.float32),
        'bn2': bn_params(ks[5]),
        'w3': conv_w(ks[6], (C, C, 1, K2)),
        'b3': 0.01 * jax.random.normal(ks[7], (C,), jnp.float32),
        'bn3': bn_params(ks[8]),
        'w4': conv_w(ks[9], (1, C, 1, 1)),
        'b4': 0.01 * jax.random.normal(ks[10], (1,), jnp.float32),
    }


if __name__ == "__main__":
    key = jax.random.PRNGKey(0)
    kx, kp = jax.random.split(key)

    N, W = 8, 16
    x = jax.random.normal(kx, (N, 1, 2, W), jnp.float32)   # NCHW, H=2
    params = init_params(kp)

    out = jax.block_until_ready(classifier_forward(x, params))  # B=4 -> grid of 2
    ref = jax.block_until_ready(reference_forward(x, params))

    assert out.shape == (N, W), out.shape
    max_err = float(jnp.max(jnp.abs(out - ref)))
    # bf16 matmul operands (f32 accumulation) add ~1e-2 of rounding noise over
    # the 1920-term contractions; allow for it vs the f32 reference.
    assert max_err < 5e-2, f"mismatch vs reference: {max_err}"
    print("KERNEL_OK")
</pallas_src>

<mosaic_0001>
module attributes {stable_mosaic.version = 11 : i64} {
  func.func @classifier_kernel(%arg0: i32, %arg1: memref<1x128x16xbf16, #tpu.memory_space<vmem>>, %arg2: memref<128x1xf32, #tpu.memory_space<vmem>>, %arg3: memref<16x128xbf16, #tpu.memory_space<vmem>>, %arg4: memref<1x128xf32, #tpu.memory_space<vmem>>, %arg5: memref<8x256x128xbf16, #tpu.memory_space<vmem>>, %arg6: memref<1x128xf32, #tpu.memory_space<vmem>>, %arg7: memref<8x256x128xbf16, #tpu.memory_space<vmem>>, %arg8: memref<1x128xf32, #tpu.memory_space<vmem>>, %arg9: memref<8x128xf32, #tpu.memory_space<vmem>>, %arg10: memref<1x1xf32, #tpu.memory_space<vmem>>, %arg11: memref<1x1x128xf32, #tpu.memory_space<vmem>>, %arg12: memref<144x128xbf16, #tpu.memory_space<vmem>>, %arg13: memref<144x128xbf16, #tpu.memory_space<vmem>>) attributes {dimension_semantics = [#tpu.dimension_semantics<parallel>], iteration_bounds = array<i64: 2>, scalar_prefetch = 0 : i64, scratch_operands = 2 : i64, tpu.core_type = #tpu.core_type<tc>, window_params = [{transform_indices = @transform_0, window_bounds = array<i64: 1, 128, 16>}, {pipeline_mode = #tpu.pipeline_mode<synchronous>, transform_indices = @transform_1, window_bounds = array<i64: 128, 1>}, {pipeline_mode = #tpu.pipeline_mode<synchronous>, transform_indices = @transform_2, window_bounds = array<i64: 16, 128>}, {pipeline_mode = #tpu.pipeline_mode<synchronous>, transform_indices = @transform_3, window_bounds = array<i64: 1, 128>}, {pipeline_mode = #tpu.pipeline_mode<synchronous>, transform_indices = @transform_4, window_bounds = array<i64: 8, 256, 128>}, {pipeline_mode = #tpu.pipeline_mode<synchronous>, transform_indices = @transform_5, window_bounds = array<i64: 1, 128>}, {pipeline_mode = #tpu.pipeline_mode<synchronous>, transform_indices = @transform_6, window_bounds = array<i64: 8, 256, 128>}, {pipeline_mode = #tpu.pipeline_mode<synchronous>, transform_indices = @transform_7, window_bounds = array<i64: 1, 128>}, {pipeline_mode = #tpu.pipeline_mode<synchronous>, transform_indices = @transform_8, window_bounds = array<i64: 8, 128>}, {pipeline_mode = #tpu.pipeline_mode<synchronous>, transform_indices = @transform_9, window_bounds = array<i64: 1, 1>}, {transform_indices = @transform_10, window_bounds = array<i64: 1, 1, 128>}]} {
    %cst = arith.constant 0.000000e+00 : bf16
    %0 = vector.broadcast %cst : bf16 to vector<8x128xbf16>
    %c0 = arith.constant 0 : index
    %c0_0 = arith.constant 0 : index
    %1 = vector.load %arg12[%c0, %c0_0] : memref<144x128xbf16, #tpu.memory_space<vmem>>, vector<8x128xbf16>
    tpu.vector_store %arg12[%c0, %c0_0], %0 {strides = array<i32>} : memref<144x128xbf16, #tpu.memory_space<vmem>>, vector<8x128xbf16>,
    %c136 = arith.constant 136 : index
    %c0_1 = arith.constant 0 : index
    %2 = vector.load %arg12[%c136, %c0_1] : memref<144x128xbf16, #tpu.memory_space<vmem>>, vector<8x128xbf16>
    tpu.vector_store %arg12[%c136, %c0_1], %0 {strides = array<i32>} : memref<144x128xbf16, #tpu.memory_space<vmem>>, vector<8x128xbf16>,
    %c0_2 = arith.constant 0 : index
    %c0_3 = arith.constant 0 : index
    %3 = vector.load %arg13[%c0_2, %c0_3] : memref<144x128xbf16, #tpu.memory_space<vmem>>, vector<8x128xbf16>
    tpu.vector_store %arg13[%c0_2, %c0_3], %0 {strides = array<i32>} : memref<144x128xbf16, #tpu.memory_space<vmem>>, vector<8x128xbf16>,
    %c136_4 = arith.constant 136 : index
    %c0_5 = arith.constant 0 : index
    %4 = vector.load %arg13[%c136_4, %c0_5] : memref<144x128xbf16, #tpu.memory_space<vmem>>, vector<8x128xbf16>
    tpu.vector_store %arg13[%c136_4, %c0_5], %0 {strides = array<i32>} : memref<144x128xbf16, #tpu.memory_space<vmem>>, vector<8x128xbf16>,
    %c0_6 = arith.constant 0 : index
    %c0_7 = arith.constant 0 : index
    %c0_8 = arith.constant 0 : index
    %5 = vector.load %arg1[%c0_6, %c0_7, %c0_8] : memref<1x128x16xbf16, #tpu.memory_space<vmem>>, vector<1x128x16xbf16>
    %6 = vector.shape_cast %5 : vector<1x128x16xbf16> to vector<128x16xbf16>
    %c0_9 = arith.constant 0 : index
    %c0_10 = arith.constant 0 : index
    %7 = vector.load %arg3[%c0_9, %c0_10] : memref<16x128xbf16, #tpu.memory_space<vmem>>, vector<16x128xbf16>
    %cst_11 = arith.constant dense<0.000000e+00> : vector<128x128xf32>
    %8 = tpu.matmul %6, %7, %cst_11 {dimension_numbers = #tpu.dot_dimension_numbers<[1], [0], [0], [1], [0, 0, 1, 1], [], []>} : vector<128x16xbf16>, vector<16x128xbf16>, vector<128x128xf32> -> vector<128x128xf32>
    %c0_12 = arith.constant 0 : index
    %c0_13 = arith.constant 0 : index
    %9 = vector.load %arg4[%c0_12, %c0_13] : memref<1x128xf32, #tpu.memory_space<vmem>>, vector<1x128xf32>
    %10 = vector.broadcast %9 : vector<1x128xf32> to vector<128x128xf32>
    %11 = arith.addf %8, %10 : vector<128x128xf32>
    %cst_14 = arith.constant 0.000000e+00 : f32
    %12 = vector.broadcast %cst_14 : f32 to vector<128x128xf32>
    %13 = arith.maximumf %11, %12 : vector<128x128xf32>
    %c0_15 = arith.constant 0 : index
    %c0_16 = arith.constant 0 : index
    %14 = vector.load %arg2[%c0_15, %c0_16] : memref<128x1xf32, #tpu.memory_space<vmem>>, vector<128x1xf32>
    %15 = vector.broadcast %14 : vector<128x1xf32> to vector<128x128xf32>
    %16 = arith.mulf %13, %15 : vector<128x128xf32>
    %17 = arith.truncf %16 : vector<128x128xf32> to vector<128x128xbf16>
    %c8 = arith.constant 8 : index
    %c0_17 = arith.constant 0 : index
    %18 = vector.load %arg12[%c8, %c0_17] : memref<144x128xbf16, #tpu.memory_space<vmem>>, vector<128x128xbf16>
    tpu.vector_store %arg12[%c8, %c0_17], %17 {strides = array<i32>} : memref<144x128xbf16, #tpu.memory_space<vmem>>, vector<128x128xbf16>,
    %c0_18 = arith.constant 0 : index
    %c0_19 = arith.constant 0 : index
    %19 = vector.load %arg12[%c0_18, %c0_19] : memref<144x128xbf16, #tpu.memory_space<vmem>>, vector<128x128xbf16>
    %c1 = arith.constant 1 : index
    %c0_20 = arith.constant 0 : index
    %20 = vector.load %arg12[%c1, %c0_20] : memref<144x128xbf16, #tpu.memory_space<vmem>>, vector<128x128xbf16>
    %21 = tpu.concatenate %19, %20 in 1 : vector<128x128xbf16>, vector<128x128xbf16> -> vector<128x256xbf16>
    %c0_21 = arith.constant 0 : index
    %c0_22 = arith.constant 0 : index
    %c0_23 = arith.constant 0 : index
    %22 = vector.load %arg5[%c0_21, %c0_22, %c0_23] : memref<8x256x128xbf16, #tpu.memory_space<vmem>>, vector<1x256x128xbf16>
    %23 = vector.shape_cast %22 : vector<1x256x128xbf16> to vector<256x128xbf16>
    %cst_24 = arith.constant dense<0.000000e+00> : vector<128x128xf32>
    %24 = tpu.matmul %21, %23, %cst_24 {dimension_numbers = #tpu.dot_dimension_numbers<[1], [0], [0], [1], [0, 0, 1, 1], [], []>} : vector<128x256xbf16>, vector<256x128xbf16>, vector<128x128xf32> -> vector<128x128xf32>
    %c2 = arith.constant 2 : index
    %c0_25 = arith.constant 0 : index
    %25 = vector.load %arg12[%c2, %c0_25] : memref<144x128xbf16, #tpu.memory_space<vmem>>, vector<128x128xbf16>
    %c3 = arith.constant 3 : index
    %c0_26 = arith.constant 0 : index
    %26 = vector.load %arg12[%c3, %c0_26] : memref<144x128xbf16, #tpu.memory_space<vmem>>, vector<128x128xbf16>
    %27 = tpu.concatenate %25, %26 in 1 : vector<128x128xbf16>, vector<128x128xbf16> -> vector<128x256xbf16>
    %c1_27 = arith.constant 1 : index
    %c0_28 = arith.constant 0 : index
    %c0_29 = arith.constant 0 : index
    %28 = vector.load %arg5[%c1_27, %c0_28, %c0_29] : memref<8x256x128xbf16, #tpu.memory_space<vmem>>, vector<1x256x128xbf16>
    %29 = vector.shape_cast %28 : vector<1x256x128xbf16> to vector<256x128xbf16>
    %cst_30 = arith.constant dense<0.000000e+00> : vector<128x128xf32>
    %30 = tpu.matmul %27, %29, %cst_30 {dimension_numbers = #tpu.dot_dimension_numbers<[1], [0], [0], [1], [0, 0, 1, 1], [], []>} : vector<128x256xbf16>, vector<256x128xbf16>, vector<128x128xf32> -> vector<128x128xf32>
    %31 = arith.addf %24, %30 : vector<128x128xf32>
    %c4 = arith.constant 4 : index
    %c0_31 = arith.constant 0 : index
    %32 = vector.load %arg12[%c4, %c0_31] : memref<144x128xbf16, #tpu.memory_space<vmem>>, vector<128x128xbf16>
    %c5 = arith.constant 5 : index
    %c0_32 = arith.constant 0 : index
    %33 = vector.load %arg12[%c5, %c0_32] : memref<144x128xbf16, #tpu.memory_space<vmem>>, vector<128x128xbf16>
    %34 = tpu.concatenate %32, %33 in 1 : vector<128x128xbf16>, vector<128x128xbf16> -> vector<128x256xbf16>
    %c2_33 = arith.constant 2 : index
    %c0_34 = arith.constant 0 : index
    %c0_35 = arith.constant 0 : index
    %35 = vector.load %arg5[%c2_33, %c0_34, %c0_35] : memref<8x256x128xbf16, #tpu.memory_space<vmem>>, vector<1x256x128xbf16>
    %36 = vector.shape_cast %35 : vector<1x256x128xbf16> to vector<256x128xbf16>
    %cst_36 = arith.constant dense<0.000000e+00> : vector<128x128xf32>
    %37 = tpu.matmul %34, %36, %cst_36 {dimension_numbers = #tpu.dot_dimension_numbers<[1], [0], [0], [1], [0, 0, 1, 1], [], []>} : vector<128x256xbf16>, vector<256x128xbf16>, vector<128x128xf32> -> vector<128x128xf32>
    %38 = arith.addf %31, %37 : vector<128x128xf32>
    %c6 = arith.constant 6 : index
    %c0_37 = arith.constant 0 : index
    %39 = vector.load %arg12[%c6, %c0_37] : memref<144x128xbf16, #tpu.memory_space<vmem>>, vector<128x128xbf16>
    %c7 = arith.constant 7 : index
    %c0_38 = arith.constant 0 : index
    %40 = vector.load %arg12[%c7, %c0_38] : memref<144x128xbf16, #tpu.memory_space<vmem>>, vector<128x128xbf16>
    %41 = tpu.concatenate %39, %40 in 1 : vector<128x128xbf16>, vector<128x128xbf16> -> vector<128x256xbf16>
    %c3_39 = arith.constant 3 : index
    %c0_40 = arith.constant 0 : index
    %c0_41 = arith.constant 0 : index
    %42 = vector.load %arg5[%c3_39, %c0_40, %c0_41] : memref<8x256x128xbf16, #tpu.memory_space<vmem>>, vector<1x256x128xbf16>
    %43 = vector.shape_cast %42 : vector<1x256x128xbf16> to vector<256x128xbf16>
    %cst_42 = arith.constant dense<0.000000e+00> : vector<128x128xf32>
    %44 = tpu.matmul %41, %43, %cst_42 {dimension_numbers = #tpu.dot_dimension_numbers<[1], [0], [0], [1], [0, 0, 1, 1], [], []>} : vector<128x256xbf16>, vector<256x128xbf16>, vector<128x128xf32> -> vector<128x128xf32>
    %45 = arith.addf %38, %44 : vector<128x128xf32>
    %c8_43 = arith.constant 8 : index
    %c0_44 = arith.constant 0 : index
    %46 = vector.load %arg12[%c8_43, %c0_44] : memref<144x128xbf16, #tpu.memory_space<vmem>>, vector<128x128xbf16>
    %c9 = arith.constant 9 : index
    %c0_45 = arith.constant 0 : index
    %47 = vector.load %arg12[%c9, %c0_45] : memref<144x128xbf16, #tpu.memory_space<vmem>>, vector<128x128xbf16>
    %48 = tpu.concatenate %46, %47 in 1 : vector<128x128xbf16>, vector<128x128xbf16> -> vector<128x256xbf16>
    %c4_46 = arith.constant 4 : index
    %c0_47 = arith.constant 0 : index
    %c0_48 = arith.constant 0 : index
    %49 = vector.load %arg5[%c4_46, %c0_47, %c0_48] : memref<8x256x128xbf16, #tpu.memory_space<vmem>>, vector<1x256x128xbf16>
    %50 = vector.shape_cast %49 : vector<1x256x128xbf16> to vector<256x128xbf16>
    %cst_49 = arith.constant dense<0.000000e+00> : vector<128x128xf32>
    %51 = tpu.matmul %48, %50, %cst_49 {dimension_numbers = #tpu.dot_dimension_numbers<[1], [0], [0], [1], [0, 0, 1, 1], [], []>} : vector<128x256xbf16>, vector<256x128xbf16>, vector<128x128xf32> -> vector<128x128xf32>
    %52 = arith.addf %45, %51 : vector<128x128xf32>
    %c10 = arith.constant 10 : index
    %c0_50 = arith.constant 0 : index
    %53 = vector.load %arg12[%c10, %c0_50] : memref<144x128xbf16, #tpu.memory_space<vmem>>, vector<128x128xbf16>
    %c11 = arith.constant 11 : index
    %c0_51 = arith.constant 0 : index
    %54 = vector.load %arg12[%c11, %c0_51] : memref<144x128xbf16, #tpu.memory_space<vmem>>, vector<128x128xbf16>
    %55 = tpu.concatenate %53, %54 in 1 : vector<128x128xbf16>, vector<128x128xbf16> -> vector<128x256xbf16>
    %c5_52 = arith.constant 5 : index
    %c0_53 = arith.constant 0 : index
    %c0_54 = arith.constant 0 : index
    %56 = vector.load %arg5[%c5_52, %c0_53, %c0_54] : memref<8x256x128xbf16, #tpu.memory_space<vmem>>, vector<1x256x128xbf16>
    %57 = vector.shape_cast %56 : vector<1x256x128xbf16> to vector<256x128xbf16>
    %cst_55 = arith.constant dense<0.000000e+00> : vector<128x128xf32>
    %58 = tpu.matmul %55, %57, %cst_55 {dimension_numbers = #tpu.dot_dimension_numbers<[1], [0], [0], [1], [0, 0, 1, 1], [], []>} : vector<128x256xbf16>, vector<256x128xbf16>, vector<128x128xf32> -> vector<128x128xf32>
    %59 = arith.addf %52, %58 : vector<128x128xf32>
    %c12 = arith.constant 12 : index
    %c0_56 = arith.constant 0 : index
    %60 = vector.load %arg12[%c12, %c0_56] : memref<144x128xbf16, #tpu.memory_space<vmem>>, vector<128x128xbf16>
    %c13 = arith.constant 13 : index
    %c0_57 = arith.constant 0 : index
    %61 = vector.load %arg12[%c13, %c0_57] : memref<144x128xbf16, #tpu.memory_space<vmem>>, vector<128x128xbf16>
    %62 = tpu.concatenate %60, %61 in 1 : vector<128x128xbf16>, vector<128x128xbf16> -> vector<128x256xbf16>
    %c6_58 = arith.constant 6 : index
    %c0_59 = arith.constant 0 : index
    %c0_60 = arith.constant 0 : index
    %63 = vector.load %arg5[%c6_58, %c0_59, %c0_60] : memref<8x256x128xbf16, #tpu.memory_space<vmem>>, vector<1x256x128xbf16>
    %64 = vector.shape_cast %63 : vector<1x256x128xbf16> to vector<256x128xbf16>
    %cst_61 = arith.constant dense<0.000000e+00> : vector<128x128xf32>
    %65 = tpu.matmul %62, %64, %cst_61 {dimension_numbers = #tpu.dot_dimension_numbers<[1], [0], [0], [1], [0, 0, 1, 1], [], []>} : vector<128x256xbf16>, vector<256x128xbf16>, vector<128x128xf32> -> vector<128x128xf32>
    %66 = arith.addf %59, %65 : vector<128x128xf32>
    %c14 = arith.constant 14 : index
    %c0_62 = arith.constant 0 : index
    %67 = vector.load %arg12[%c14, %c0_62] : memref<144x128xbf16, #tpu.memory_space<vmem>>, vector<128x128xbf16>
    %c15 = arith.constant 15 : index
    %c0_63 = arith.constant 0 : index
    %68 = vector.load %arg12[%c15, %c0_63] : memref<144x128xbf16, #tpu.memory_space<vmem>>, vector<128x128xbf16>
    %69 = tpu.concatenate %67, %68 in 1 : vector<128x128xbf16>, vector<128x128xbf16> -> vector<128x256xbf16>
    %c7_64 = arith.constant 7 : index
    %c0_65 = arith.constant 0 : index
    %c0_66 = arith.constant 0 : index
    %70 = vector.load %arg5[%c7_64, %c0_65, %c0_66] : memref<8x256x128xbf16, #tpu.memory_space<vmem>>, vector<1x256x128xbf16>
    %71 = vector.shape_cast %70 : vector<1x256x128xbf16> to vector<256x128xbf16>
    %cst_67 = arith.constant dense<0.000000e+00> : vector<128x128xf32>
    %72 = tpu.matmul %69, %71, %cst_67 {dimension_numbers = #tpu.dot_dimension_numbers<[1], [0], [0], [1], [0, 0, 1, 1], [], []>} : vector<128x256xbf16>, vector<256x128xbf16>, vector<128x128xf32> -> vector<128x128xf32>
    %73 = arith.addf %66, %72 : vector<128x128xf32>
    %c0_68 = arith.constant 0 : index
    %c0_69 = arith.constant 0 : index
    %74 = vector.load %arg6[%c0_68, %c0_69] : memref<1x128xf32, #tpu.memory_space<vmem>>, vector<1x128xf32>
    %75 = vector.broadcast %74 : vector<1x128xf32> to vector<128x128xf32>
    %76 = arith.addf %73, %75 : vector<128x128xf32>
    %cst_70 = arith.constant 0.000000e+00 : f32
    %77 = vector.broadcast %cst_70 : f32 to vector<128x128xf32>
    %78 = arith.maximumf %76, %77 : vector<128x128xf32>
    %c0_71 = arith.constant 0 : index
    %c0_72 = arith.constant 0 : index
    %79 = vector.load %arg2[%c0_71, %c0_72] : memref<128x1xf32, #tpu.memory_space<vmem>>, vector<128x1xf32>
    %80 = vector.broadcast %79 : vector<128x1xf32> to vector<128x128xf32>
    %81 = arith.mulf %78, %80 : vector<128x128xf32>
    %82 = arith.truncf %81 : vector<128x128xf32> to vector<128x128xbf16>
    %c8_73 = arith.constant 8 : index
    %c0_74 = arith.constant 0 : index
    %83 = vector.load %arg13[%c8_73, %c0_74] : memref<144x128xbf16, #tpu.memory_space<vmem>>, vector<128x128xbf16>
    tpu.vector_store %arg13[%c8_73, %c0_74], %82 {strides = array<i32>} : memref<144x128xbf16, #tpu.memory_space<vmem>>, vector<128x128xbf16>,
    %c0_75 = arith.constant 0 : index
    %c0_76 = arith.constant 0 : index
    %84 = vector.load %arg13[%c0_75, %c0_76] : memref<144x128xbf16, #tpu.memory_space<vmem>>, vector<128x128xbf16>
    %c1_77 = arith.constant 1 : index
    %c0_78 = arith.constant 0 : index
    %85 = vector.load %arg13[%c1_77, %c0_78] : memref<144x128xbf16, #tpu.memory_space<vmem>>, vector<128x128xbf16>
    %86 = tpu.concatenate %84, %85 in 1 : vector<128x128xbf16>, vector<128x128xbf16> -> vector<128x256xbf16>
    %c0_79 = arith.constant 0 : index
    %c0_80 = arith.constant 0 : index
    %c0_81 = arith.constant 0 : index
    %87 = vector.load %arg7[%c0_79, %c0_80, %c0_81] : memref<8x256x128xbf16, #tpu.memory_space<vmem>>, vector<1x256x128xbf16>
    %88 = vector.shape_cast %87 : vector<1x256x128xbf16> to vector<256x128xbf16>
    %cst_82 = arith.constant dense<0.000000e+00> : vector<128x128xf32>
    %89 = tpu.matmul %86, %88, %cst_82 {dimension_numbers = #tpu.dot_dimension_numbers<[1], [0], [0], [1], [0, 0, 1, 1], [], []>} : vector<128x256xbf16>, vector<256x128xbf16>, vector<128x128xf32> -> vector<128x128xf32>
    %c2_83 = arith.constant 2 : index
    %c0_84 = arith.constant 0 : index
    %90 = vector.load %arg13[%c2_83, %c0_84] : memref<144x128xbf16, #tpu.memory_space<vmem>>, vector<128x128xbf16>
    %c3_85 = arith.constant 3 : index
    %c0_86 = arith.constant 0 : index
    %91 = vector.load %arg13[%c3_85, %c0_86] : memref<144x128xbf16, #tpu.memory_space<vmem>>, vector<128x128xbf16>
    %92 = tpu.concatenate %90, %91 in 1 : vector<128x128xbf16>, vector<128x128xbf16> -> vector<128x256xbf16>
    %c1_87 = arith.constant 1 : index
    %c0_88 = arith.constant 0 : index
    %c0_89 = arith.constant 0 : index
    %93 = vector.load %arg7[%c1_87, %c0_88, %c0_89] : memref<8x256x128xbf16, #tpu.memory_space<vmem>>, vector<1x256x128xbf16>
    %94 = vector.shape_cast %93 : vector<1x256x128xbf16> to vector<256x128xbf16>
    %cst_90 = arith.constant dense<0.000000e+00> : vector<128x128xf32>
    %95 = tpu.matmul %92, %94, %cst_90 {dimension_numbers = #tpu.dot_dimension_numbers<[1], [0], [0], [1], [0, 0, 1, 1], [], []>} : vector<128x256xbf16>, vector<256x128xbf16>, vector<128x128xf32> -> vector<128x128xf32>
    %96 = arith.addf %89, %95 : vector<128x128xf32>
    %c4_91 = arith.constant 4 : index
    %c0_92 = arith.constant 0 : index
    %97 = vector.load %arg13[%c4_91, %c0_92] : memref<144x128xbf16, #tpu.memory_space<vmem>>, vector<128x128xbf16>
    %c5_93 = arith.constant 5 : index
    %c0_94 = arith.constant 0 : index
    %98 = vector.load %arg13[%c5_93, %c0_94] : memref<144x128xbf16, #tpu.memory_space<vmem>>, vector<128x128xbf16>
    %99 = tpu.concatenate %97, %98 in 1 : vector<128x128xbf16>, vector<128x128xbf16> -> vector<128x256xbf16>
    %c2_95 = arith.constant 2 : index
    %c0_96 = arith.constant 0 : index
    %c0_97 = arith.constant 0 : index
    %100 = vector.load %arg7[%c2_95, %c0_96, %c0_97] : memref<8x256x128xbf16, #tpu.memory_space<vmem>>, vector<1x256x128xbf16>
    %101 = vector.shape_cast %100 : vector<1x256x128xbf16> to vector<256x128xbf16>
    %cst_98 = arith.constant dense<0.000000e+00> : vector<128x128xf32>
    %102 = tpu.matmul %99, %101, %cst_98 {dimension_numbers = #tpu.dot_dimension_numbers<[1], [0], [0], [1], [0, 0, 1, 1], [], []>} : vector<128x256xbf16>, vector<256x128xbf16>, vector<128x128xf32> -> vector<128x128xf32>
    %103 = arith.addf %96, %102 : vector<128x128xf32>
    %c6_99 = arith.constant 6 : index
    %c0_100 = arith.constant 0 : index
    %104 = vector.load %arg13[%c6_99, %c0_100] : memref<144x128xbf16, #tpu.memory_space<vmem>>, vector<128x128xbf16>
    %c7_101 = arith.constant 7 : index
    %c0_102 = arith.constant 0 : index
    %105 = vector.load %arg13[%c7_101, %c0_102] : memref<144x128xbf16, #tpu.memory_space<vmem>>, vector<128x128xbf16>
    %106 = tpu.concatenate %104, %105 in 1 : vector<128x128xbf16>, vector<128x128xbf16> -> vector<128x256xbf16>
    %c3_103 = arith.constant 3 : index
    %c0_104 = arith.constant 0 : index
    %c0_105 = arith.constant 0 : index
    %107 = vector.load %arg7[%c3_103, %c0_104, %c0_105] : memref<8x256x128xbf16, #tpu.memory_space<vmem>>, vector<1x256x128xbf16>
    %108 = vector.shape_cast %107 : vector<1x256x128xbf16> to vector<256x128xbf16>
    %cst_106 = arith.constant dense<0.000000e+00> : vector<128x128xf32>
    %109 = tpu.matmul %106, %108, %cst_106 {dimension_numbers = #tpu.dot_dimension_numbers<[1], [0], [0], [1], [0, 0, 1, 1], [], []>} : vector<128x256xbf16>, vector<256x128xbf16>, vector<128x128xf32> -> vector<128x128xf32>
    %110 = arith.addf %103, %109 : vector<128x128xf32>
    %c8_107 = arith.constant 8 : index
    %c0_108 = arith.constant 0 : index
    %111 = vector.load %arg13[%c8_107, %c0_108] : memref<144x128xbf16, #tpu.memory_space<vmem>>, vector<128x128xbf16>
    %c9_109 = arith.constant 9 : index
    %c0_110 = arith.constant 0 : index
    %112 = vector.load %arg13[%c9_109, %c0_110] : memref<144x128xbf16, #tpu.memory_space<vmem>>, vector<128x128xbf16>
    %113 = tpu.concatenate %111, %112 in 1 : vector<128x128xbf16>, vector<128x128xbf16> -> vector<128x256xbf16>
    %c4_111 = arith.constant 4 : index
    %c0_112 = arith.constant 0 : index
    %c0_113 = arith.constant 0 : index
    %114 = vector.load %arg7[%c4_111, %c0_112, %c0_113] : memref<8x256x128xbf16, #tpu.memory_space<vmem>>, vector<1x256x128xbf16>
    %115 = vector.shape_cast %114 : vector<1x256x128xbf16> to vector<256x128xbf16>
    %cst_114 = arith.constant dense<0.000000e+00> : vector<128x128xf32>
    %116 = tpu.matmul %113, %115, %cst_114 {dimension_numbers = #tpu.dot_dimension_numbers<[1], [0], [0], [1], [0, 0, 1, 1], [], []>} : vector<128x256xbf16>, vector<256x128xbf16>, vector<128x128xf32> -> vector<128x128xf32>
    %117 = arith.addf %110, %116 : vector<128x128xf32>
    %c10_115 = arith.constant 10 : index
    %c0_116 = arith.constant 0 : index
    %118 = vector.load %arg13[%c10_115, %c0_116] : memref<144x128xbf16, #tpu.memory_space<vmem>>, vector<128x128xbf16>
    %c11_117 = arith.constant 11 : index
    %c0_118 = arith.constant 0 : index
    %119 = vector.load %arg13[%c11_117, %c0_118] : memref<144x128xbf16, #tpu.memory_space<vmem>>, vector<128x128xbf16>
    %120 = tpu.concatenate %118, %119 in 1 : vector<128x128xbf16>, vector<128x128xbf16> -> vector<128x256xbf16>
    %c5_119 = arith.constant 5 : index
    %c0_120 = arith.constant 0 : index
    %c0_121 = arith.constant 0 : index
    %121 = vector.load %arg7[%c5_119, %c0_120, %c0_121] : memref<8x256x128xbf16, #tpu.memory_space<vmem>>, vector<1x256x128xbf16>
    %122 = vector.shape_cast %121 : vector<1x256x128xbf16> to vector<256x128xbf16>
    %cst_122 = arith.constant dense<0.000000e+00> : vector<128x128xf32>
    %123 = tpu.matmul %120, %122, %cst_122 {dimension_numbers = #tpu.dot_dimension_numbers<[1], [0], [0], [1], [0, 0, 1, 1], [], []>} : vector<128x256xbf16>, vector<256x128xbf16>, vector<128x128xf32> -> vector<128x128xf32>
    %124 = arith.addf %117, %123 : vector<128x128xf32>
    %c12_123 = arith.constant 12 : index
    %c0_124 = arith.constant 0 : index
    %125 = vector.load %arg13[%c12_123, %c0_124] : memref<144x128xbf16, #tpu.memory_space<vmem>>, vector<128x128xbf16>
    %c13_125 = arith.constant 13 : index
    %c0_126 = arith.constant 0 : index
    %126 = vector.load %arg13[%c13_125, %c0_126] : memref<144x128xbf16, #tpu.memory_space<vmem>>, vector<128x128xbf16>
    %127 = tpu.concatenate %125, %126 in 1 : vector<128x128xbf16>, vector<128x128xbf16> -> vector<128x256xbf16>
    %c6_127 = arith.constant 6 : index
    %c0_128 = arith.constant 0 : index
    %c0_129 = arith.constant 0 : index
    %128 = vector.load %arg7[%c6_127, %c0_128, %c0_129] : memref<8x256x128xbf16, #tpu.memory_space<vmem>>, vector<1x256x128xbf16>
    %129 = vector.shape_cast %128 : vector<1x256x128xbf16> to vector<256x128xbf16>
    %cst_130 = arith.constant dense<0.000000e+00> : vector<128x128xf32>
    %130 = tpu.matmul %127, %129, %cst_130 {dimension_numbers = #tpu.dot_dimension_numbers<[1], [0], [0], [1], [0, 0, 1, 1], [], []>} : vector<128x256xbf16>, vector<256x128xbf16>, vector<128x128xf32> -> vector<128x128xf32>
    %131 = arith.addf %124, %130 : vector<128x128xf32>
    %c14_131 = arith.constant 14 : index
    %c0_132 = arith.constant 0 : index
    %132 = vector.load %arg13[%c14_131, %c0_132] : memref<144x128xbf16, #tpu.memory_space<vmem>>, vector<128x128xbf16>
    %c15_133 = arith.constant 15 : index
    %c0_134 = arith.constant 0 : index
    %133 = vector.load %arg13[%c15_133, %c0_134] : memref<144x128xbf16, #tpu.memory_space<vmem>>, vector<128x128xbf16>
    %134 = tpu.concatenate %132, %133 in 1 : vector<128x128xbf16>, vector<128x128xbf16> -> vector<128x256xbf16>
    %c7_135 = arith.constant 7 : index
    %c0_136 = arith.constant 0 : index
    %c0_137 = arith.constant 0 : index
    %135 = vector.load %arg7[%c7_135, %c0_136, %c0_137] : memref<8x256x128xbf16, #tpu.memory_space<vmem>>, vector<1x256x128xbf16>
    %136 = vector.shape_cast %135 : vector<1x256x128xbf16> to vector<256x128xbf16>
    %cst_138 = arith.constant dense<0.000000e+00> : vector<128x128xf32>
    %137 = tpu.matmul %134, %136, %cst_138 {dimension_numbers = #tpu.dot_dimension_numbers<[1], [0], [0], [1], [0, 0, 1, 1], [], []>} : vector<128x256xbf16>, vector<256x128xbf16>, vector<128x128xf32> -> vector<128x128xf32>
    %138 = arith.addf %131, %137 : vector<128x128xf32>
    %c0_139 = arith.constant 0 : index
    %c0_140 = arith.constant 0 : index
    %139 = vector.load %arg8[%c0_139, %c0_140] : memref<1x128xf32, #tpu.memory_space<vmem>>, vector<1x128xf32>
    %140 = vector.broadcast %139 : vector<1x128xf32> to vector<128x128xf32>
    %141 = arith.addf %138, %140 : vector<128x128xf32>
    %cst_141 = arith.constant 0.000000e+00 : f32
    %142 = vector.broadcast %cst_141 : f32 to vector<128x128xf32>
    %143 = arith.maximumf %141, %142 : vector<128x128xf32>
    %c0_142 = arith.constant 0 : index
    %c0_143 = arith.constant 0 : index
    %144 = vector.load %arg9[%c0_142, %c0_143] : memref<8x128xf32, #tpu.memory_space<vmem>>, vector<8x128xf32>
    %cst_144 = arith.constant dense<0.000000e+00> : vector<8x128xf32>
    %145 = tpu.matmul %144, %143, %cst_144 {dimension_numbers = #tpu.dot_dimension_numbers<[1], [1], [0], [0], [0, 0, 1, 0], [], []>} : vector<8x128xf32>, vector<128x128xf32>, vector<8x128xf32> -> vector<8x128xf32>
    %146 = vector.extract_strided_slice %145 {offsets = [0, 0], sizes = [1, 128], strides = [1, 1]} : vector<8x128xf32> to vector<1x128xf32>
    %c0_145 = arith.constant 0 : index
    %c0_146 = arith.constant 0 : index
    %147 = vector.load %arg10[%c0_145, %c0_146] : memref<1x1xf32, #tpu.memory_space<vmem>>, vector<1x1xf32>
    %148 = vector.broadcast %147 : vector<1x1xf32> to vector<1x128xf32>
    %149 = arith.addf %146, %148 : vector<1x128xf32>
    %150 = vector.shape_cast %149 : vector<1x128xf32> to vector<1x1x128xf32>
    %c0_147 = arith.constant 0 : index
    %c0_148 = arith.constant 0 : index
    %c0_149 = arith.constant 0 : index
    %151 = vector.load %arg11[%c0_147, %c0_148, %c0_149] : memref<1x1x128xf32, #tpu.memory_space<vmem>>, vector<1x1x128xf32>
    tpu.vector_store %arg11[%c0_147, %c0_148, %c0_149], %150 {strides = array<i32>} : memref<1x1x128xf32, #tpu.memory_space<vmem>>, vector<1x1x128xf32>,
    return
  }
  func.func @transform_0(%arg0: i32) -> (i32, i32, i32) {
    %c0_i32 = arith.constant 0 : i32
    %c0_i32_0 = arith.constant 0 : i32
    %c0_i32_1 = arith.constant 0 : i32
    return %arg0, %c0_i32, %c0_i32_0 : i32, i32, i32
  }
  func.func @transform_1(%arg0: i32) -> (i32, i32) {
    %c0_i32 = arith.constant 0 : i32
    %c0_i32_0 = arith.constant 0 : i32
    %c0_i32_1 = arith.constant 0 : i32
    return %c0_i32, %c0_i32_0 : i32, i32
  }
  func.func @transform_2(%arg0: i32) -> (i32, i32) {
    %c0_i32 = arith.constant 0 : i32
    %c0_i32_0 = arith.constant 0 : i32
    %c0_i32_1 = arith.constant 0 : i32
    return %c0_i32, %c0_i32_0 : i32, i32
  }
  func.func @transform_3(%arg0: i32) -> (i32, i32) {
    %c0_i32 = arith.constant 0 : i32
    %c0_i32_0 = arith.constant 0 : i32
    %c0_i32_1 = arith.constant 0 : i32
    return %c0_i32, %c0_i32_0 : i32, i32
  }
  func.func @transform_4(%arg0: i32) -> (i32, i32, i32) {
    %c0_i32 = arith.constant 0 : i32
    %c0_i32_0 = arith.constant 0 : i32
    %c0_i32_1 = arith.constant 0 : i32
    %c0_i32_2 = arith.constant 0 : i32
    return %c0_i32, %c0_i32_0, %c0_i32_1 : i32, i32, i32
  }
  func.func @transform_5(%arg0: i32) -> (i32, i32) {
    %c0_i32 = arith.constant 0 : i32
    %c0_i32_0 = arith.constant 0 : i32
    %c0_i32_1 = arith.constant 0 : i32
    return %c0_i32, %c0_i32_0 : i32, i32
  }
  func.func @transform_6(%arg0: i32) -> (i32, i32, i32) {
    %c0_i32 = arith.constant 0 : i32
    %c0_i32_0 = arith.constant 0 : i32
    %c0_i32_1 = arith.constant 0 : i32
    %c0_i32_2 = arith.constant 0 : i32
    return %c0_i32, %c0_i32_0, %c0_i32_1 : i32, i32, i32
  }
  func.func @transform_7(%arg0: i32) -> (i32, i32) {
    %c0_i32 = arith.constant 0 : i32
    %c0_i32_0 = arith.constant 0 : i32
    %c0_i32_1 = arith.constant 0 : i32
    return %c0_i32, %c0_i32_0 : i32, i32
  }
  func.func @transform_8(%arg0: i32) -> (i32, i32) {
    %c0_i32 = arith.constant 0 : i32
    %c0_i32_0 = arith.constant 0 : i32
    %c0_i32_1 = arith.constant 0 : i32
    return %c0_i32, %c0_i32_0 : i32, i32
  }
  func.func @transform_9(%arg0: i32) -> (i32, i32) {
    %c0_i32 = arith.constant 0 : i32
    %c0_i32_0 = arith.constant 0 : i32
    %c0_i32_1 = arith.constant 0 : i32
    return %c0_i32, %c0_i32_0 : i32, i32
  }
  func.func @transform_10(%arg0: i32) -> (i32, i32, i32) {
    %c0_i32 = arith.constant 0 : i32
    %c0_i32_0 = arith.constant 0 : i32
    %c0_i32_1 = arith.constant 0 : i32
    return %arg0, %c0_i32, %c0_i32_0 : i32, i32, i32
  }
}

</mosaic_0001>

<llo_original>
// kernel: tpu_custom_call.1
$region0: #{tpu_custom_call.1}
  #allocation0 [shape = 'u32[]', space=smem, size = 0x4, offset = 0x4, fixed_abs, tag = 'smem constant byte address 0x4 - core index']
  #allocation1 [shape = 'u32[144,128]{1,0:T(1,128)}', space=vmem, size = 0x12000, scoped, tag = 'internal scratch']
  #allocation2 [shape = 'bf16[144,128]{1,0:T(16,128)(2,1)}', space=vmem, size = 0x9000, scoped, tag = 'scratch operand']
  #allocation3 [shape = 'bf16[144,128]{1,0:T(16,128)(2,1)}', space=vmem, size = 0x9000, scoped, tag = 'scratch operand']
  #allocation4 [shape = 'f32[1,1]{1,0:T(1,128)S(1)}', space=vmem, size = 0x200, scoped, tag = 'scoped memory for tpu_custom_call.1']
  %s0 = inlined_call_operand.vmem [shape: bf16[2,128,16], index: 0, kind: input, shape index: {}]
  %s1 = inlined_call_operand.vmem [shape: f32[128,1], index: 1, kind: input, shape index: {}]
  %s2 = inlined_call_operand.vmem [shape: bf16[16,128], index: 2, kind: input, shape index: {}]
  %s3 = inlined_call_operand.vmem [shape: f32[1,128], index: 3, kind: input, shape index: {}]
  %s4 = inlined_call_operand.hbm [shape: bf16[8,256,128], index: 4, kind: input, shape index: {}]
  %s5 = inlined_call_operand.vmem [shape: f32[1,128], index: 5, kind: input, shape index: {}]
  %s6 = inlined_call_operand.hbm [shape: bf16[8,256,128], index: 6, kind: input, shape index: {}]
  %s7 = inlined_call_operand.vmem [shape: f32[1,128], index: 7, kind: input, shape index: {}]
  %s8 = inlined_call_operand.vmem [shape: f32[8,128], index: 8, kind: input, shape index: {}]
  %s9 = inlined_call_operand.<no memory space> [shape: f32[1,1], index: 9, kind: input, shape index: {}]
  %s10 = inlined_call_operand.hbm [shape: f32[2,1,128], index: 10, kind: output, shape index: {}]
  %s11 = sld [smem:[#allocation0]]
  $region81: #{tpu_custom_call.1} parent=0
    _
  %s13 = ssub.s32 1, %s11
  %s14 = scalar_select 0, %s13, %s11
  %v15 = vstv %s9
  %16 = vst [vmem:[#allocation4] sm:$0x1] %v15
  $region1: #{tpu_custom_call.1} parent=0
    #allocation5 [shape = 'u8[524288]{0}', space=vmem, size = 0x80000, scoped, tag = 'input window, operand 4, single buffered']
    #allocation6 [shape = 's32[2]{0}', space=sflag, size = 0x8, scoped, tag = 'scoped memory for tpu_custom_call.1']
    #allocation7 [shape = 's32[2]{0}', space=sflag, size = 0x8, scoped, tag = 'scoped memory for tpu_custom_call.1']
    #allocation8 [shape = 'u8[524288]{0}', space=vmem, size = 0x80000, scoped, tag = 'input window, operand 6, single buffered']
    #allocation9 [shape = 's32[1]{0}', space=sflag, size = 0x4, scoped, tag = 'scoped memory for tpu_custom_call.1']
    #allocation10 [shape = 'u8[1024]{0}', space=vmem, size = 0x400, scoped, tag = 'output window, operand 0']
    %17 = vsyncpa [#allocation6], 0
    %18 = vsyncpa [#allocation9], 0
    %19 = vsyncpa [#allocation7], 0
    %s20 = scalar_lea.sflag [#allocation7], 1
    %21 = vsyncpa %s20, 0
    loop: start=0, step=1, limit=4
    $region2: #{tpu_custom_call.1} parent=1 // loop_pre_header
      _
    $region3: #{tpu_custom_call.1} parent=1 // loop_header
      %s23 = sphi 0, %s27
      %p24 = scmp.ge.s32.totalorder %s23, 4
      %s33 = sphi 0, %s35
      %s36 = sphi 0, %s33
      %s37 = sphi 0, %s36
      %s53 = sphi 0, %s37
      %s57 = sphi 0, %s57
      %s59 = sphi 0, %s57
      %s60 = sphi 0, %s59
      %s74 = sphi 0, %s60
      %s78 = sphi 0, %s78
      %s80 = sphi 0, %s78
      %s81 = sphi 0, %s80
      %s95 = sphi 0, %s81
      %s99 = sphi 0, %s99
      %s101 = sphi 0, %s99
      %s102 = sphi 0, %s101
      %s116 = sphi 0, %s102
      %s120 = sphi 0, %s120
      %s122 = sphi 0, %s120
      %s123 = sphi 0, %s122
      %s137 = sphi 0, %s123
      %s141 = sphi 0, %s141
      %s143 = sphi 0, %s141
      %s144 = sphi 0, %s143
      %s158 = sphi 0, %s144
      %s162 = sphi 0, %s162
      %s164 = sphi 0, %s162
      %s165 = sphi 0, %s164
      %s179 = sphi 0, %s165
      %s183 = sphi 0, %s183
      %s185 = sphi 0, %s183
      %s186 = sphi 0, %s185
      %s200 = sphi 0, %s186
      %s204 = sphi 0, %s204
      %s206 = sphi 0, %s204
      %s207 = sphi 0, %s206
      %s221 = sphi 0, %s207
      %s225 = sphi 0, %s225
      %s227 = sphi 0, %s225
      %s228 = sphi 0, %s227
      %s242 = sphi 0, %s228
      %s248 = sphi 0, %s250
      %s251 = sphi 0, %s248
      %s252 = sphi 0, %s251
      %s268 = sphi 0, %s252
    $region4: #{tpu_custom_call.1} parent=1 // loop_header_branch
      %26 = sbr.rel (%p24) target = $region8
    $region5: #{tpu_custom_call.1} parent=1 // loop_body
      %s28 = ssub.s32 %s23, 1
      %s29 = ssub.s32 %s23, 2
      %s30 = sadd.s32 %s23, 1
      %s31 = ssub.s32 %s23, %s30
      %p32 = scmp.eq.s32.totalorder %s31, 0
      %s34 = sadd.s32 %s33, 1
      %s35 = scalar_select %p32, %s33, %s34
      %p38 = pneg %p32
      %p39 = scmp.eq.s32.totalorder %s23, 1
      %p40 = por %p38, %p39
      %p41 = scmp.ne.s32.totalorder %s33, %s36
      %p42 = scmp.eq.s32.totalorder %s23, 0
      %p43 = por %p41, %p42
      %p44 = scmp.ne.s32.totalorder %s33, %s36
      %p45 = scmp.eq.s32.totalorder %s28, 1
      %p46 = por %p44, %p45
      %p47 = scmp.ne.s32.totalorder %s36, %s37
      %p48 = scmp.eq.s32.totalorder %s28, 0
      %p49 = por %p47, %p48
      %p50 = scmp.ne.s32.totalorder %s36, %s37
      %p51 = scmp.eq.s32.totalorder %s29, 1
      %p52 = por %p50, %p51
      %p54 = scmp.ne.s32.totalorder %s37, %s53
      %p55 = scmp.eq.s32.totalorder %s29, 0
      %p56 = por %p54, %p55
      %s58 = sadd.s32 %s57, 1
      %p61 = scmp.eq.s32.totalorder %s23, 1
      %p62 = scmp.ne.s32.totalorder %s57, %s59
      %p63 = scmp.eq.s32.totalorder %s23, 0
      %p64 = por %p62, %p63
      %p65 = scmp.ne.s32.totalorder %s57, %s59
      %p66 = scmp.eq.s32.totalorder %s28, 1
      %p67 = por %p65, %p66
      %p68 = scmp.ne.s32.totalorder %s59, %s60
      %p69 = scmp.eq.s32.totalorder %s28, 0
      %p70 = por %p68, %p69
      %p71 = scmp.ne.s32.totalorder %s59, %s60
      %p72 = scmp.eq.s32.totalorder %s29, 1
      %p73 = por %p71, %p72
      %p75 = scmp.ne.s32.totalorder %s60, %s74
      %p76 = scmp.eq.s32.totalorder %s29, 0
      %p77 = por %p75, %p76
      %s79 = sadd.s32 %s78, 1
      %p82 = scmp.eq.s32.totalorder %s23, 1
      %p83 = scmp.ne.s32.totalorder %s78, %s80
      %p84 = scmp.eq.s32.totalorder %s23, 0
      %p85 = por %p83, %p84
      %p86 = scmp.ne.s32.totalorder %s78, %s80
      %p87 = scmp.eq.s32.totalorder %s28, 1
      %p88 = por %p86, %p87
      %p89 = scmp.ne.s32.totalorder %s80, %s81
      %p90 = scmp.eq.s32.totalorder %s28, 0
      %p91 = por %p89, %p90
      %p92 = scmp.ne.s32.totalorder %s80, %s81
      %p93 = scmp.eq.s32.totalorder %s29, 1
      %p94 = por %p92, %p93
      %p96 = scmp.ne.s32.totalorder %s81, %s95
      %p97 = scmp.eq.s32.totalorder %s29, 0
      %p98 = por %p96, %p97
      %s100 = sadd.s32 %s99, 1
      %p103 = scmp.eq.s32.totalorder %s23, 1
      %p104 = scmp.ne.s32.totalorder %s99, %s101
      %p105 = scmp.eq.s32.totalorder %s23, 0
      %p106 = por %p104, %p105
      %p107 = scmp.ne.s32.totalorder %s99, %s101
      %p108 = scmp.eq.s32.totalorder %s28, 1
      %p109 = por %p107, %p108
      %p110 = scmp.ne.s32.totalorder %s101, %s102
      %p111 = scmp.eq.s32.totalorder %s28, 0
      %p112 = por %p110, %p111
      %p113 = scmp.ne.s32.totalorder %s101, %s102
      %p114 = scmp.eq.s32.totalorder %s29, 1
      %p115 = por %p113, %p114
      %p117 = scmp.ne.s32.totalorder %s102, %s116
      %p118 = scmp.eq.s32.totalorder %s29, 0
      %p119 = por %p117, %p118
      %s121 = sadd.s32 %s120, 1
      %p124 = scmp.eq.s32.totalorder %s23, 1
      %p125 = scmp.ne.s32.totalorder %s120, %s122
      %p126 = scmp.eq.s32.totalorder %s23, 0
      %p127 = por %p125, %p126
      %p128 = scmp.ne.s32.totalorder %s120, %s122
      %p129 = scmp.eq.s32.totalorder %s28, 1
      %p130 = por %p128, %p129
      %p131 = scmp.ne.s32.totalorder %s122, %s123
      %p132 = scmp.eq.s32.totalorder %s28, 0
      %p133 = por %p131, %p132
      %p134 = scmp.ne.s32.totalorder %s122, %s123
      %p135 = scmp.eq.s32.totalorder %s29, 1
      %p136 = por %p134, %p135
      %p138 = scmp.ne.s32.totalorder %s123, %s137
      %p139 = scmp.eq.s32.totalorder %s29, 0
      %p140 = por %p138, %p139
      %s142 = sadd.s32 %s141, 1
      %p145 = scmp.eq.s32.totalorder %s23, 1
      %p146 = scmp.ne.s32.totalorder %s141, %s143
      %p147 = scmp.eq.s32.totalorder %s23, 0
      %p148 = por %p146, %p147
      %p149 = scmp.ne.s32.totalorder %s141, %s143
      %p150 = scmp.eq.s32.totalorder %s28, 1
      %p151 = por %p149, %p150
      %p152 = scmp.ne.s32.totalorder %s143, %s144
      %p153 = scmp.eq.s32.totalorder %s28, 0
      %p154 = por %p152, %p153
      %p155 = scmp.ne.s32.totalorder %s143, %s144
      %p156 = scmp.eq.s32.totalorder %s29, 1
      %p157 = por %p155, %p156
      %p159 = scmp.ne.s32.totalorder %s144, %s158
      %p160 = scmp.eq.s32.totalorder %s29, 0
      %p161 = por %p159, %p160
      %s163 = sadd.s32 %s162, 1
      %p166 = scmp.eq.s32.totalorder %s23, 1
      %p167 = scmp.ne.s32.totalorder %s162, %s164
      %p168 = scmp.eq.s32.totalorder %s23, 0
      %p169 = por %p167, %p168
      %p170 = scmp.ne.s32.totalorder %s162, %s164
      %p171 = scmp.eq.s32.totalorder %s28, 1
      %p172 = por %p170, %p171
      %p173 = scmp.ne.s32.totalorder %s164, %s165
      %p174 = scmp.eq.s32.totalorder %s28, 0
      %p175 = por %p173, %p174
      %p176 = scmp.ne.s32.totalorder %s164, %s165
      %p177 = scmp.eq.s32.totalorder %s29, 1
      %p178 = por %p176, %p177
      %p180 = scmp.ne.s32.totalorder %s165, %s179
      %p181 = scmp.eq.s32.totalorder %s29, 0
      %p182 = por %p180, %p181
      %s184 = sadd.s32 %s183, 1
      %p187 = scmp.eq.s32.totalorder %s23, 1
      %p188 = scmp.ne.s32.totalorder %s183, %s185
      %p189 = scmp.eq.s32.totalorder %s23, 0
      %p190 = por %p188, %p189
      %p191 = scmp.ne.s32.totalorder %s183, %s185
      %p192 = scmp.eq.s32.totalorder %s28, 1
      %p193 = por %p191, %p192
      %p194 = scmp.ne.s32.totalorder %s185, %s186
      %p195 = scmp.eq.s32.totalorder %s28, 0
      %p196 = por %p194, %p195
      %p197 = scmp.ne.s32.totalorder %s185, %s186
      %p198 = scmp.eq.s32.totalorder %s29, 1
      %p199 = por %p197, %p198
      %p201 = scmp.ne.s32.totalorder %s186, %s200
      %p202 = scmp.eq.s32.totalorder %s29, 0
      %p203 = por %p201, %p202
      %s205 = sadd.s32 %s204, 1
      %p208 = scmp.eq.s32.totalorder %s23, 1
      %p209 = scmp.ne.s32.totalorder %s204, %s206
      %p210 = scmp.eq.s32.totalorder %s23, 0
      %p211 = por %p209, %p210
      %p212 = scmp.ne.s32.totalorder %s204, %s206
      %p213 = scmp.eq.s32.totalorder %s28, 1
      %p214 = por %p212, %p213
      %p215 = scmp.ne.s32.totalorder %s206, %s207
      %p216 = scmp.eq.s32.totalorder %s28, 0
      %p217 = por %p215, %p216
      %p218 = scmp.ne.s32.totalorder %s206, %s207
      %p219 = scmp.eq.s32.totalorder %s29, 1
      %p220 = por %p218, %p219
      %p222 = scmp.ne.s32.totalorder %s207, %s221
      %p223 = scmp.eq.s32.totalorder %s29, 0
      %p224 = por %p222, %p223
      %s226 = sadd.s32 %s225, 1
      %p229 = scmp.eq.s32.totalorder %s23, 1
      %p230 = scmp.ne.s32.totalorder %s225, %s227
      %p231 = scmp.eq.s32.totalorder %s23, 0
      %p232 = por %p230, %p231
      %p233 = scmp.ne.s32.totalorder %s225, %s227
      %p234 = scmp.eq.s32.totalorder %s28, 1
      %p235 = por %p233, %p234
      %p236 = scmp.ne.s32.totalorder %s227, %s228
      %p237 = scmp.eq.s32.totalorder %s28, 0
      %p238 = por %p236, %p237
      %p239 = scmp.ne.s32.totalorder %s227, %s228
      %p240 = scmp.eq.s32.totalorder %s29, 1
      %p241 = por %p239, %p240
      %p243 = scmp.ne.s32.totalorder %s228, %s242
      %p244 = scmp.eq.s32.totalorder %s29, 0
      %p245 = por %p243, %p244
      %s246 = ssub.s32 %s23, %s30
      %p247 = scmp.eq.s32.totalorder %s246, 0
      %s249 = sadd.s32 %s248, 1
      %s250 = scalar_select %p247, %s248, %s249
      %p253 = pneg %p247
      %p254 = scmp.eq.s32.totalorder %s23, 1
      %p255 = por %p253, %p254
      %p256 = scmp.ne.s32.totalorder %s248, %s251
      %p257 = scmp.eq.s32.totalorder %s23, 0
      %p258 = por %p256, %p257
      %p259 = scmp.ne.s32.totalorder %s248, %s251
      %p260 = scmp.eq.s32.totalorder %s28, 1
      %p261 = por %p259, %p260
      %p262 = scmp.ne.s32.totalorder %s251, %s252
      %p263 = scmp.eq.s32.totalorder %s28, 0
      %p264 = por %p262, %p263
      %p265 = scmp.ne.s32.totalorder %s251, %s252
      %p266 = scmp.eq.s32.totalorder %s29, 1
      %p267 = por %p265, %p266
      %p269 = scmp.ne.s32.totalorder %s252, %s268
      %p270 = scmp.eq.s32.totalorder %s29, 0
      %p271 = por %p269, %p270
      %p272 = scmp.le.s32.totalorder 1, %s23
      %p273 = scmp.lt.s32.totalorder %s23, 3
      %p274 = pnand %p272, %p273
      %p275 = pneg %p274
      // Predicated region
      $region9: #{tpu_custom_call.1} parent=5 // pred_check
        _
      $region10: #{tpu_custom_call.1} parent=5 // pred_check_branch
        %277 = sbr.rel (%p274) target = $region12
      $region11: #{tpu_custom_call.1} parent=5 // pred_region
        %s278 = ssub.s32 %s23, 1
        // Predicated region
        $region13: #{tpu_custom_call.1} parent=11 // pred_check
          %p279 = pneg %p70
        $region14: #{tpu_custom_call.1} parent=11 // pred_check_branch
          %281 = sbr.rel (%p279) target = $region16
        $region15: #{tpu_custom_call.1} parent=11 // pred_region
          _
        $region16: #{tpu_custom_call.1} parent=11 // pred_fallthru
          _
        // Predicated region
        $region17: #{tpu_custom_call.1} parent=11 // pred_check
          %p282 = pneg %p91
        $region18: #{tpu_custom_call.1} parent=11 // pred_check_branch
          %284 = sbr.rel (%p282) target = $region20
        $region19: #{tpu_custom_call.1} parent=11 // pred_region
          _
        $region20: #{tpu_custom_call.1} parent=11 // pred_fallthru
          _
        // Predicated region
        $region21: #{tpu_custom_call.1} parent=11 // pred_check
          %p285 = pneg %p112
        $region22: #{tpu_custom_call.1} parent=11 // pred_check_branch
          %287 = sbr.rel (%p285) target = $region24
        $region23: #{tpu_custom_call.1} parent=11 // pred_region
          _
        $region24: #{tpu_custom_call.1} parent=11 // pred_fallthru
          _
        // Predicated region
        $region25: #{tpu_custom_call.1} parent=11 // pred_check
          %p288 = pneg %p133
        $region26: #{tpu_custom_call.1} parent=11 // pred_check_branch
          %290 = sbr.rel (%p288) target = $region28
        $region27: #{tpu_custom_call.1} parent=11 // pred_region
          %s292 = ssub.s32 16384, 16384
          %293 = vsyncadd [#allocation6], %s292
          %s294 = sshll.u32 [#allocation5], 4
          %s295 = int_to_ptr.vmem [resolvable:$true] %s294
          %300 = dma.hbm_to_vmem [thread:$0]  %s4, 16384, %s295, [#allocation6], 64, 64, 4
        $region28: #{tpu_custom_call.1} parent=11 // pred_fallthru
          _
        // Predicated region
        $region29: #{tpu_custom_call.1} parent=11 // pred_check
          %p301 = pneg %p154
        $region30: #{tpu_custom_call.1} parent=11 // pred_check_branch
          %303 = sbr.rel (%p301) target = $region32
        $region31: #{tpu_custom_call.1} parent=11 // pred_region
          _
        $region32: #{tpu_custom_call.1} parent=11 // pred_fallthru
          _
        // Predicated region
        $region33: #{tpu_custom_call.1} parent=11 // pred_check
          %p304 = pneg %p175
        $region34: #{tpu_custom_call.1} parent=11 // pred_check_branch
          %306 = sbr.rel (%p304) target = $region36
        $region35: #{tpu_custom_call.1} parent=11 // pred_region
          %s308 = ssub.s32 16384, 16384
          %309 = vsyncadd [#allocation9], %s308
          %s310 = sshll.u32 [#allocation8], 4
          %s311 = int_to_ptr.vmem [resolvable:$true] %s310
          %316 = dma.hbm_to_vmem [thread:$0]  %s6, 16384, %s311, [#allocation9], 64, 64, 4
        $region36: #{tpu_custom_call.1} parent=11 // pred_fallthru
          _
        // Predicated region
        $region37: #{tpu_custom_call.1} parent=11 // pred_check
          %p317 = pneg %p196
        $region38: #{tpu_custom_call.1} parent=11 // pred_check_branch
          %319 = sbr.rel (%p317) target = $region40
        $region39: #{tpu_custom_call.1} parent=11 // pred_region
          _
        $region40: #{tpu_custom_call.1} parent=11 // pred_fallthru
          _
        // Predicated region
        $region41: #{tpu_custom_call.1} parent=11 // pred_check
          %p320 = pneg %p217
        $region42: #{tpu_custom_call.1} parent=11 // pred_check_branch
          %322 = sbr.rel (%p320) target = $region44
        $region43: #{tpu_custom_call.1} parent=11 // pred_region
          _
        $region44: #{tpu_custom_call.1} parent=11 // pred_fallthru
          _
        // Predicated region
        $region45: #{tpu_custom_call.1} parent=11 // pred_check
          %p323 = pneg %p238
        $region46: #{tpu_custom_call.1} parent=11 // pred_check_branch
          %325 = sbr.rel (%p323) target = $region48
        $region47: #{tpu_custom_call.1} parent=11 // pred_region
          _
        $region48: #{tpu_custom_call.1} parent=11 // pred_fallthru
          _
      $region12: #{tpu_custom_call.1} parent=5 // pred_fallthru
        _
      %p326 = scmp.lt.s32.totalorder %s23, 2
      // Predicated region
      $region49: #{tpu_custom_call.1} parent=5 // pred_check
        %p327 = pneg %p326
      $region50: #{tpu_custom_call.1} parent=5 // pred_check_branch
        %329 = sbr.rel (%p327) target = $region52
      $region51: #{tpu_custom_call.1} parent=5 // pred_region
        // Predicated region
        $region53: #{tpu_custom_call.1} parent=51 // pred_check
          %p330 = pneg %p43
        $region54: #{tpu_custom_call.1} parent=51 // pred_check_branch
          %332 = sbr.rel (%p330) target = $region56
        $region55: #{tpu_custom_call.1} parent=51 // pred_region
          %p333 = scmp.lt.s32.totalorder %s23, 1
          %s334 = scalar_select %p333, %s23, 1
          %s335 = smul.addr %s334, 16
          %s336 = smul.addr %s335, 4
          %s337 = scalar_lea.vmem %s0, %s336
        $region56: #{tpu_custom_call.1} parent=51 // pred_fallthru
          _
      $region52: #{tpu_custom_call.1} parent=5 // pred_fallthru
        _
      %p338 = scmp.le.s32.totalorder 1, %s23
      %p339 = scmp.lt.s32.totalorder %s23, 3
      %p340 = pnand %p338, %p339
      %p341 = pneg %p340
      // Predicated region
      $region57: #{tpu_custom_call.1} parent=5 // pred_check
        _
      $region58: #{tpu_custom_call.1} parent=5 // pred_check_branch
        %343 = sbr.rel (%p340) target = $region60
      $region59: #{tpu_custom_call.1} parent=5 // pred_region
        %s344 = ssub.s32 %s23, 1
        // Predicated region
        $region61: #{tpu_custom_call.1} parent=59 // pred_check
          %p345 = pneg %p133
        $region62: #{tpu_custom_call.1} parent=59 // pred_check_branch
          %347 = sbr.rel (%p345) target = $region64
        $region63: #{tpu_custom_call.1} parent=59 // pred_region
          %348 = dma.done [#allocation6], 16384
        $region64: #{tpu_custom_call.1} parent=59 // pred_fallthru
          _
        // Predicated region
        $region65: #{tpu_custom_call.1} parent=59 // pred_check
          %p349 = pneg %p175
        $region66: #{tpu_custom_call.1} parent=59 // pred_check_branch
          %351 = sbr.rel (%p349) target = $region68
        $region67: #{tpu_custom_call.1} parent=59 // pred_region
          %352 = dma.done [#allocation9], 16384
        $region68: #{tpu_custom_call.1} parent=59 // pred_fallthru
          _
        %p353 = scmp.lt.s32.totalorder %s28, 1
        %s354 = scalar_select %p353, %s28, 1
        %s355 = smul.addr %s354, 16
        %s356 = smul.addr %s355, 4
        %s357 = scalar_lea.vmem %s0, %s356
        %p358 = pneg %p49
        %p359 = pneg %p46
        %p360 = pneg %p70
        %p361 = pneg %p67
        %p362 = pneg %p91
        %p363 = pneg %p88
        %p364 = pneg %p112
        %p365 = pneg %p109
        %p366 = pneg %p133
        %p367 = pneg %p130
        %p368 = pneg %p154
        %p369 = pneg %p151
        %p370 = pneg %p175
        %p371 = pneg %p172
        %p372 = pneg %p196
        %p373 = pneg %p193
        %p374 = pneg %p217
        %p375 = pneg %p214
        %p376 = pneg %p238
        %p377 = pneg %p235
        %p378 = pneg %p264
        %p379 = pneg %p261
        %s380 = sand.u32 %s251, 1
        %s381 = scalar_lea.sflag [#allocation7], %s380
        %s382 = sand.u32 %s251, 1
        %s383 = scalar_lea.vmem [#allocation10], %s382
        %p384 = scmp.lt.s32.totalorder %s28, 1
        %s385 = scalar_select %p384, %s28, 1
        %s386 = smul.addr %s385, 16
        %s387 = smul.addr %s386, 4
        %s388 = scalar_lea.vmem %s0, %s387
        %390 = vst [vmem:[#allocation2] sm:$0xf] 0
        %391 = vst [vmem:[#allocation2 + $0x40] sm:$0xf0] 0
        %392 = vst [vmem:[#allocation3] sm:$0xf] 0
        %393 = vst [vmem:[#allocation3 + $0x40] sm:$0xf0] 0
        %v394 = vld [vmem:[%s388] sm:$0xf]
        %v395 = vld [vmem:[%s388 + $0x4] sm:$0xf]
        %v396 = vld [vmem:[%s388 + $0x8] sm:$0xf]
        %v397 = vld [vmem:[%s388 + $0xc] sm:$0xf]
        %v398 = vld [vmem:[%s388 + $0x10] sm:$0xf]
        %v399 = vld [vmem:[%s388 + $0x14] sm:$0xf]
        %v400 = vld [vmem:[%s388 + $0x18] sm:$0xf]
        %v401 = vld [vmem:[%s388 + $0x1c] sm:$0xf]
        %v402 = vld [vmem:[%s388 + $0x20] sm:$0xf]
        %v403 = vld [vmem:[%s388 + $0x24] sm:$0xf]
        %v404 = vld [vmem:[%s388 + $0x28] sm:$0xf]
        %v405 = vld [vmem:[%s388 + $0x2c] sm:$0xf]
        %v406 = vld [vmem:[%s388 + $0x30] sm:$0xf]
        %v407 = vld [vmem:[%s388 + $0x34] sm:$0xf]
        %v408 = vld [vmem:[%s388 + $0x38] sm:$0xf]
        %v409 = vld [vmem:[%s388 + $0x3c] sm:$0xf]
        %v410 = vld [vmem:[%s2] sm:$0xf]
        %v411 = vld [vmem:[%s2 + $0x4] sm:$0xf]
        %v412 = vld [vmem:[%s3] sm:$0x1]
        %v414 = vlaneseq
        %v415 = vshrl.u32 %v414, 7
        %v416 = vsub.s32 0, %v415
        %v417 = vrot.slane %v412, %v416
        %v435 = vunpack.c.l.b16 %v394
        %v436 = vunpack.c.l.b16 %v395
        %v437 = vunpack.c.l.b16 %v396
        %v438 = vunpack.c.l.b16 %v397
        %v439 = vunpack.c.l.b16 %v398
        %v440 = vunpack.c.l.b16 %v399
        %v441 = vunpack.c.l.b16 %v400
        %v442 = vunpack.c.l.b16 %v401
        %v443 = vunpack.c.l.b16 %v402
        %v444 = vunpack.c.l.b16 %v403
        %v445 = vunpack.c.l.b16 %v404
        %v446 = vunpack.c.l.b16 %v405
        %v447 = vunpack.c.l.b16 %v406
        %v448 = vunpack.c.l.b16 %v407
        %v449 = vunpack.c.l.b16 %v408
        %v450 = vunpack.c.l.b16 %v409
        %v451 = vpack.c.b16 %v436, %v435
        %v452 = vpack.c.b16 %v438, %v437
        %v453 = vpack.c.b16 %v440, %v439
        %v454 = vpack.c.b16 %v442, %v441
        %v455 = vpack.c.b16 %v444, %v443
        %v456 = vpack.c.b16 %v446, %v445
        %v457 = vpack.c.b16 %v448, %v447
        %v458 = vpack.c.b16 %v450, %v449
        %v461 = vunpack.c.l.b16 %v410
        %v462 = vunpack.c.l.b16 %v411
        %v463 = vpack.c.b16 %v462, %v461
        %vm465 = vcmask 130048
        %v467 = vsel %vm465, %v451, 0
        %v470 = vsel %vm465, %v452, 0
        %v473 = vsel %vm465, %v453, 0
        %v476 = vsel %vm465, %v454, 0
        %v479 = vsel %vm465, %v455, 0
        %v482 = vsel %vm465, %v456, 0
        %v485 = vsel %vm465, %v457, 0
        %v488 = vsel %vm465, %v458, 0
        %490 = vmatprep.subr.bf16.mxu0 0
        %491 = vmatpush1.bf16.msra.mxu0 %v463
        %492 = vmatprep.subr.bf16.mxu0 0
        %493 = vmatpush1.bf16.msra.mxu0 0
        %494 = vmatprep.subr.bf16.mxu0 0
        %495 = vmatpush1.bf16.msra.mxu0 0
        %496 = vmatprep.subr.bf16.mxu0 0
        %497 = vmatpush1.bf16.msra.mxu0 0
        %498 = vmatprep.subr.bf16.mxu0 0
        %499 = vmatpush1.bf16.msra.mxu0 0
        %500 = vmatprep.subr.bf16.mxu0 0
        %501 = vmatpush1.bf16.msra.mxu0 0
        %502 = vmatprep.subr.bf16.mxu0 0
        %503 = vmatpush1.bf16.msra.mxu0 0
        %504 = vmatprep.subr.bf16.mxu0 0
        %505 = vmatpush1.bf16.msra.mxu0 0
        %506 = vmatprep.subr.bf16.mxu0 0
        %507 = vmatpush1.bf16.msra.mxu0 0
        %508 = vmatprep.subr.bf16.mxu0 0
        %509 = vmatpush1.bf16.msra.mxu0 0
        %510 = vmatprep.subr.bf16.mxu0 0
        %511 = vmatpush1.bf16.msra.mxu0 0
        %512 = vmatprep.subr.bf16.mxu0 0
        %513 = vmatpush1.bf16.msra.mxu0 0
        %514 = vmatprep.subr.bf16.mxu0 0
        %515 = vmatpush1.bf16.msra.mxu0 0
        %516 = vmatprep.subr.bf16.mxu0 0
        %517 = vmatpush1.bf16.msra.mxu0 0
        %518 = vmatprep.subr.bf16.mxu0 0
        %519 = vmatpush1.bf16.msra.mxu0 0
        %520 = vmatprep.subr.bf16.mxu0 0
        %521 = vmatpush1.bf16.msra.mxu0 0
        %522 = vmatprep.mubr.bf16.mxu0 0
        %523 = vmatmul.mubr.bf16.gmra.mrb[0].mxu0 %v467
        %v524 = vpop.f32.mrb[0].mxu0
        %v525 = vadd.f32 %v417, %v524
        %v526 = vpop.f32.mrb[0].mxu0
        %v527 = vpop.f32.mrb[0].mxu0
        %v528 = vadd.f32 %v417, %v527
        %v529 = vpop.f32.mrb[0].mxu0
        %530 = vmatprep.mubr.bf16.mxu0 0
        %531 = vmatmul.mubr.bf16.gmra.mrb[0].mxu0 %v470
        %v532 = vpop.f32.mrb[0].mxu0
        %v533 = vadd.f32 %v417, %v532
        %v534 = vpop.f32.mrb[0].mxu0
        %v535 = vpop.f32.mrb[0].mxu0
        %v536 = vadd.f32 %v417, %v535
        %v537 = vpop.f32.mrb[0].mxu0
        %538 = vmatprep.mubr.bf16.mxu0 0
        %539 = vmatmul.mubr.bf16.gmra.mrb[0].mxu0 %v473
        %v540 = vpop.f32.mrb[0].mxu0
        %v541 = vadd.f32 %v417, %v540
        %v542 = vpop.f32.mrb[0].mxu0
        %v543 = vpop.f32.mrb[0].mxu0
        %v544 = vadd.f32 %v417, %v543
        %v545 = vpop.f32.mrb[0].mxu0
        %546 = vmatprep.mubr.bf16.mxu0 0
        %547 = vmatmul.mubr.bf16.gmra.mrb[0].mxu0 %v476
        %v548 = vpop.f32.mrb[0].mxu0
        %v549 = vadd.f32 %v417, %v548
        %v550 = vpop.f32.mrb[0].mxu0
        %v551 = vpop.f32.mrb[0].mxu0
        %v552 = vadd.f32 %v417, %v551
        %v553 = vpop.f32.mrb[0].mxu0
        %554 = vmatprep.mubr.bf16.mxu0 0
        %555 = vmatmul.mubr.bf16.gmra.mrb[0].mxu0 %v479
        %v556 = vpop.f32.mrb[0].mxu0
        %v557 = vadd.f32 %v417, %v556
        %v558 = vpop.f32.mrb[0].mxu0
        %v559 = vpop.f32.mrb[0].mxu0
        %v560 = vadd.f32 %v417, %v559
        %v561 = vpop.f32.mrb[0].mxu0
        %562 = vmatprep.mubr.bf16.mxu0 0
        %563 = vmatmul.mubr.bf16.gmra.mrb[0].mxu0 %v482
        %v564 = vpop.f32.mrb[0].mxu0
        %v565 = vadd.f32 %v417, %v564
        %v566 = vpop.f32.mrb[0].mxu0
        %v567 = vpop.f32.mrb[0].mxu0
        %v568 = vadd.f32 %v417, %v567
        %v569 = vpop.f32.mrb[0].mxu0
        %570 = vmatprep.mubr.bf16.mxu0 0
        %571 = vmatmul.mubr.bf16.gmra.mrb[0].mxu0 %v485
        %v572 = vpop.f32.mrb[0].mxu0
        %v573 = vadd.f32 %v417, %v572
        %v574 = vpop.f32.mrb[0].mxu0
        %v575 = vpop.f32.mrb[0].mxu0
        %v576 = vadd.f32 %v417, %v575
        %v577 = vpop.f32.mrb[0].mxu0
        %578 = vmatprep.mubr.bf16.mxu0 0
        %579 = vmatmul.mubr.bf16.gmra.mrb[0].mxu0 %v488
        %v580 = vpop.f32.mrb[0].mxu0
        %v581 = vadd.f32 %v417, %v580
        %v582 = vpop.f32.mrb[0].mxu0
        %v583 = vpop.f32.mrb[0].mxu0
        %v584 = vadd.f32 %v417, %v583
        %v585 = vpop.f32.mrb[0].mxu0
        %586 = vdwg.mxu0
        %v587 = vmax.f32 %v525, 0.0
        %v588 = vmax.f32 %v528, 0.0
        %v589 = vmax.f32 %v533, 0.0
        %v590 = vmax.f32 %v536, 0.0
        %v591 = vmax.f32 %v541, 0.0
        %v592 = vmax.f32 %v544, 0.0
        %v593 = vmax.f32 %v549, 0.0
        %v594 = vmax.f32 %v552, 0.0
        %v595 = vmax.f32 %v557, 0.0
        %v596 = vmax.f32 %v560, 0.0
        %v597 = vmax.f32 %v565, 0.0
        %v598 = vmax.f32 %v568, 0.0
        %v599 = vmax.f32 %v573, 0.0
        %v600 = vmax.f32 %v576, 0.0
        %v601 = vmax.f32 %v581, 0.0
        %v602 = vmax.f32 %v584, 0.0
        %v603 = vld [vmem:[%s1] sm:$0xff]
        %v604 = vld [vmem:[%s1 + $0x8] sm:$0xff]
        %v605 = vld [vmem:[%s1 + $0x10] sm:$0xff]
        %v606 = vld [vmem:[%s1 + $0x18] sm:$0xff]
        %v607 = vld [vmem:[%s1 + $0x20] sm:$0xff]
        %v608 = vld [vmem:[%s1 + $0x28] sm:$0xff]
        %v609 = vld [vmem:[%s1 + $0x30] sm:$0xff]
        %v610 = vld [vmem:[%s1 + $0x38] sm:$0xff]
        %v611 = vld [vmem:[%s1 + $0x40] sm:$0xff]
        %v612 = vld [vmem:[%s1 + $0x48] sm:$0xff]
        %v613 = vld [vmem:[%s1 + $0x50] sm:$0xff]
        %v614 = vld [vmem:[%s1 + $0x58] sm:$0xff]
        %v615 = vld [vmem:[%s1 + $0x60] sm:$0xff]
        %v616 = vld [vmem:[%s1 + $0x68] sm:$0xff]
        %v617 = vld [vmem:[%s1 + $0x70] sm:$0xff]
        %v618 = vld [vmem:[%s1 + $0x78] sm:$0xff]
        %620 = vset.pattern.permute.xlu0 0
        %621 = vperm.xlu0 %620, %v603
        %v622 = vpop.permute.xlu0 %621
        %625 = vset.pattern.permute.xlu0 0
        %626 = vperm.xlu0 %625, %v604
        %v627 = vpop.permute.xlu0 %626
        %630 = vset.pattern.permute.xlu0 0
        %631 = vperm.xlu0 %630, %v605
        %v632 = vpop.permute.xlu0 %631
        %635 = vset.pattern.permute.xlu0 0
        %636 = vperm.xlu0 %635, %v606
        %v637 = vpop.permute.xlu0 %636
        %640 = vset.pattern.permute.xlu0 0
        %641 = vperm.xlu0 %640, %v607
        %v642 = vpop.permute.xlu0 %641
        %645 = vset.pattern.permute.xlu0 0
        %646 = vperm.xlu0 %645, %v608
        %v647 = vpop.permute.xlu0 %646
        %650 = vset.pattern.permute.xlu0 0
        %651 = vperm.xlu0 %650, %v609
        %v652 = vpop.permute.xlu0 %651
        %655 = vset.pattern.permute.xlu0 0
        %656 = vperm.xlu0 %655, %v610
        %v657 = vpop.permute.xlu0 %656
        %660 = vset.pattern.permute.xlu0 0
        %661 = vperm.xlu0 %660, %v611
        %v662 = vpop.permute.xlu0 %661
        %665 = vset.pattern.permute.xlu0 0
        %666 = vperm.xlu0 %665, %v612
        %v667 = vpop.permute.xlu0 %666
        %670 = vset.pattern.permute.xlu0 0
        %671 = vperm.xlu0 %670, %v613
        %v672 = vpop.permute.xlu0 %671
        %675 = vset.pattern.permute.xlu0 0
        %676 = vperm.xlu0 %675, %v614
        %v677 = vpop.permute.xlu0 %676
        %680 = vset.pattern.permute.xlu0 0
        %681 = vperm.xlu0 %680, %v615
        %v682 = vpop.permute.xlu0 %681
        %685 = vset.pattern.permute.xlu0 0
        %686 = vperm.xlu0 %685, %v616
        %v687 = vpop.permute.xlu0 %686
        %690 = vset.pattern.permute.xlu0 0
        %691 = vperm.xlu0 %690, %v617
        %v692 = vpop.permute.xlu0 %691
        %695 = vset.pattern.permute.xlu0 0
        %696 = vperm.xlu0 %695, %v618
        %v697 = vpop.permute.xlu0 %696
        %v699 = vmul.f32 %v587, %v622
        %v700 = vmul.f32 %v588, %v627
        %v701 = vmul.f32 %v589, %v632
        %v702 = vmul.f32 %v590, %v637
        %v703 = vmul.f32 %v591, %v642
        %v704 = vmul.f32 %v592, %v647
        %v705 = vmul.f32 %v593, %v652
        %v706 = vmul.f32 %v594, %v657
        %v707 = vmul.f32 %v595, %v662
        %v708 = vmul.f32 %v596, %v667
        %v709 = vmul.f32 %v597, %v672
        %v710 = vmul.f32 %v598, %v677
        %v711 = vmul.f32 %v599, %v682
        %v712 = vmul.f32 %v600, %v687
        %v713 = vmul.f32 %v601, %v692
        %v714 = vmul.f32 %v602, %v697
        %v715 = vpack.c.bf16 %v700, %v699
        %v716 = vpack.c.bf16 %v702, %v701
        %v717 = vpack.c.bf16 %v704, %v703
        %v718 = vpack.c.bf16 %v706, %v705
        %v719 = vpack.c.bf16 %v708, %v707
        %v720 = vpack.c.bf16 %v710, %v709
        %v721 = vpack.c.bf16 %v712, %v711
        %v722 = vpack.c.bf16 %v714, %v713
        %vm731 = vcmask 1043456
        %v732 = vrot.slane %v715, 4
        %v733 = vrot.slane %v716, 4
        %v734 = vsel %vm731, %v732, %v733
        %v735 = vrot.slane %v717, 4
        %v736 = vsel %vm731, %v733, %v735
        %v737 = vrot.slane %v718, 4
        %v738 = vsel %vm731, %v735, %v737
        %v739 = vrot.slane %v719, 4
        %v740 = vsel %vm731, %v737, %v739
        %v741 = vrot.slane %v720, 4
        %v742 = vsel %vm731, %v739, %v741
        %v743 = vrot.slane %v721, 4
        %v744 = vsel %vm731, %v741, %v743
        %v745 = vrot.slane %v722, 4
        %v746 = vsel %vm731, %v743, %v745
        %756 = vst [vmem:[#allocation2] sm:$0xf0] %v732
        %757 = vst [vmem:[#allocation2 + $0x8] sm:$0xff] %v734
        %758 = vst [vmem:[#allocation2 + $0x10] sm:$0xff] %v736
        %759 = vst [vmem:[#allocation2 + $0x18] sm:$0xff] %v738
        %760 = vst [vmem:[#allocation2 + $0x20] sm:$0xff] %v740
        %761 = vst [vmem:[#allocation2 + $0x28] sm:$0xff] %v742
        %762 = vst [vmem:[#allocation2 + $0x30] sm:$0xff] %v744
        %763 = vst [vmem:[#allocation2 + $0x38] sm:$0xff] %v746
        %764 = vst [vmem:[#allocation2 + $0x40] sm:$0xf] %v745
        %v765 = vld [vmem:[#allocation2] sm:$0xff]
        %v766 = vld [vmem:[#allocation2 + $0x8] sm:$0xff]
        %v767 = vld [vmem:[#allocation2 + $0x10] sm:$0xff]
        %v768 = vld [vmem:[#allocation2 + $0x18] sm:$0xff]
        %v769 = vld [vmem:[#allocation2 + $0x20] sm:$0xff]
        %v770 = vld [vmem:[#allocation2 + $0x28] sm:$0xff]
        %v771 = vld [vmem:[#allocation2 + $0x30] sm:$0xff]
        %v772 = vld [vmem:[#allocation2 + $0x38] sm:$0xff]
        %v773 = vld [vmem:[#allocation2] sm:$0xff]
        %v774 = vld [vmem:[#allocation2 + $0x8] sm:$0xff]
        %v775 = vld [vmem:[#allocation2 + $0x10] sm:$0xff]
        %v776 = vld [vmem:[#allocation2 + $0x18] sm:$0xff]
        %v777 = vld [vmem:[#allocation2 + $0x20] sm:$0xff]
        %v778 = vld [vmem:[#allocation2 + $0x28] sm:$0xff]
        %v779 = vld [vmem:[#allocation2 + $0x30] sm:$0xff]
        %v780 = vld [vmem:[#allocation2 + $0x38] sm:$0xff]
        %v781 = vld [vmem:[#allocation2 + $0x40] sm:$0x1]
        %vm782 = vsmask.f32 7424
        %v784 = vshrl.u32 %v773, 16
        %v786 = vshll.u32 %v773, 16
        %v788 = vrot.slane %v786, 1
        %v789 = vor.u32 %v784, %v788
        %v791 = vshll.u32 %v774, 16
        %v793 = vrot.slane %v791, 1
        %v794 = vsel %vm782, %v789, %v793
        %v795 = vshrl.u32 %v774, 16
        %v797 = vor.u32 %v795, %v793
        %v799 = vshll.u32 %v775, 16
        %v801 = vrot.slane %v799, 1
        %v802 = vsel %vm782, %v797, %v801
        %v803 = vshrl.u32 %v775, 16
        %v805 = vor.u32 %v803, %v801
        %v807 = vshll.u32 %v776, 16
        %v809 = vrot.slane %v807, 1
        %v810 = vsel %vm782, %v805, %v809
        %v811 = vshrl.u32 %v776, 16
        %v813 = vor.u32 %v811, %v809
        %v815 = vshll.u32 %v777, 16
        %v817 = vrot.slane %v815, 1
        %v818 = vsel %vm782, %v813, %v817
        %v819 = vshrl.u32 %v777, 16
        %v821 = vor.u32 %v819, %v817
        %v823 = vshll.u32 %v778, 16
        %v825 = vrot.slane %v823, 1
        %v826 = vsel %vm782, %v821, %v825
        %v827 = vshrl.u32 %v778, 16
        %v829 = vor.u32 %v827, %v825
        %v831 = vshll.u32 %v779, 16
        %v833 = vrot.slane %v831, 1
        %v834 = vsel %vm782, %v829, %v833
        %v835 = vshrl.u32 %v779, 16
        %v837 = vor.u32 %v835, %v833
        %v839 = vshll.u32 %v780, 16
        %v841 = vrot.slane %v839, 1
        %v842 = vsel %vm782, %v837, %v841
        %v843 = vshrl.u32 %v780, 16
        %v845 = vor.u32 %v843, %v841
        %v847 = vshll.u32 %v781, 16
        %v849 = vrot.slane %v847, 1
        %v850 = vsel %vm782, %v845, %v849
        %v859 = vld [vmem:[#allocation5] sm:$0xf]
        %v860 = vld [vmem:[#allocation5 + $0x4] sm:$0xf]
        %v861 = vld [vmem:[#allocation5 + $0x8] sm:$0xf]
        %v862 = vld [vmem:[#allocation5 + $0xc] sm:$0xf]
        %v863 = vld [vmem:[#allocation5 + $0x10] sm:$0xf]
        %v864 = vld [vmem:[#allocation5 + $0x14] sm:$0xf]
        %v865 = vld [vmem:[#allocation5 + $0x18] sm:$0xf]
        %v866 = vld [vmem:[#allocation5 + $0x1c] sm:$0xf]
        %v867 = vld [vmem:[#allocation5 + $0x20] sm:$0xf]
        %v868 = vld [vmem:[#allocation5 + $0x24] sm:$0xf]
        %v869 = vld [vmem:[#allocation5 + $0x28] sm:$0xf]
        %v870 = vld [vmem:[#allocation5 + $0x2c] sm:$0xf]
        %v871 = vld [vmem:[#allocation5 + $0x30] sm:$0xf]
        %v872 = vld [vmem:[#allocation5 + $0x34] sm:$0xf]
        %v873 = vld [vmem:[#allocation5 + $0x38] sm:$0xf]
        %v874 = vld [vmem:[#allocation5 + $0x3c] sm:$0xf]
        %v875 = vld [vmem:[#allocation5 + $0x40] sm:$0xf]
        %v876 = vld [vmem:[#allocation5 + $0x44] sm:$0xf]
        %v877 = vld [vmem:[#allocation5 + $0x48] sm:$0xf]
        %v878 = vld [vmem:[#allocation5 + $0x4c] sm:$0xf]
        %v879 = vld [vmem:[#allocation5 + $0x50] sm:$0xf]
        %v880 = vld [vmem:[#allocation5 + $0x54] sm:$0xf]
        %v881 = vld [vmem:[#allocation5 + $0x58] sm:$0xf]
        %v882 = vld [vmem:[#allocation5 + $0x5c] sm:$0xf]
        %v883 = vld [vmem:[#allocation5 + $0x60] sm:$0xf]
        %v884 = vld [vmem:[#allocation5 + $0x64] sm:$0xf]
        %v885 = vld [vmem:[#allocation5 + $0x68] sm:$0xf]
        %v886 = vld [vmem:[#allocation5 + $0x6c] sm:$0xf]
        %v887 = vld [vmem:[#allocation5 + $0x70] sm:$0xf]
        %v888 = vld [vmem:[#allocation5 + $0x74] sm:$0xf]
        %v889 = vld [vmem:[#allocation5 + $0x78] sm:$0xf]
        %v890 = vld [vmem:[#allocation5 + $0x7c] sm:$0xf]
        %v891 = vld [vmem:[#allocation2] sm:$0xfe]
        %v892 = vld [vmem:[#allocation2 + $0x40] sm:$0x3]
        %v894 = vshrl.u32 %v891, 16
        %v896 = vshll.u32 %v891, 16
        %v898 = vrot.slane %v896, 1
        %v899 = vor.u32 %v894, %v898
        %v900 = vsel %vm782, %v899, %v793
        %v902 = vshll.u32 %v892, 16
        %v904 = vrot.slane %v902, 1
        %v905 = vsel %vm782, %v845, %v904
        %v906 = vshrl.u32 %v892, 16
        %v908 = vor.u32 %v906, %v904
        %s909 = scalar_lea.vmem [#allocation5], 128
        %v910 = vld [vmem:[%s909] sm:$0xf]
        %v911 = vld [vmem:[%s909 + $0x4] sm:$0xf]
        %v912 = vld [vmem:[%s909 + $0x8] sm:$0xf]
        %v913 = vld [vmem:[%s909 + $0xc] sm:$0xf]
        %v914 = vld [vmem:[%s909 + $0x10] sm:$0xf]
        %v915 = vld [vmem:[%s909 + $0x14] sm:$0xf]
        %v916 = vld [vmem:[%s909 + $0x18] sm:$0xf]
        %v917 = vld [vmem:[%s909 + $0x1c] sm:$0xf]
        %v918 = vld [vmem:[%s909 + $0x20] sm:$0xf]
        %v919 = vld [vmem:[%s909 + $0x24] sm:$0xf]
        %v920 = vld [vmem:[%s909 + $0x28] sm:$0xf]
        %v921 = vld [vmem:[%s909 + $0x2c] sm:$0xf]
        %v922 = vld [vmem:[%s909 + $0x30] sm:$0xf]
        %v923 = vld [vmem:[%s909 + $0x34] sm:$0xf]
        %v924 = vld [vmem:[%s909 + $0x38] sm:$0xf]
        %v925 = vld [vmem:[%s909 + $0x3c] sm:$0xf]
        %v926 = vld [vmem:[%s909 + $0x40] sm:$0xf]
        %v927 = vld [vmem:[%s909 + $0x44] sm:$0xf]
        %v928 = vld [vmem:[%s909 + $0x48] sm:$0xf]
        %v929 = vld [vmem:[%s909 + $0x4c] sm:$0xf]
        %v930 = vld [vmem:[%s909 + $0x50] sm:$0xf]
        %v931 = vld [vmem:[%s909 + $0x54] sm:$0xf]
        %v932 = vld [vmem:[%s909 + $0x58] sm:$0xf]
        %v933 = vld [vmem:[%s909 + $0x5c] sm:$0xf]
        %v934 = vld [vmem:[%s909 + $0x60] sm:$0xf]
        %v935 = vld [vmem:[%s909 + $0x64] sm:$0xf]
        %v936 = vld [vmem:[%s909 + $0x68] sm:$0xf]
        %v937 = vld [vmem:[%s909 + $0x6c] sm:$0xf]
        %v938 = vld [vmem:[%s909 + $0x70] sm:$0xf]
        %v939 = vld [vmem:[%s909 + $0x74] sm:$0xf]
        %v940 = vld [vmem:[%s909 + $0x78] sm:$0xf]
        %v941 = vld [vmem:[%s909 + $0x7c] sm:$0xf]
        %vm951 = vcmask 1046528
        %v952 = vrot.slane %v891, 1
        %v953 = vrot.slane %v774, 1
        %v954 = vsel %vm951, %v952, %v953
        %v955 = vrot.slane %v900, 1
        %v956 = vrot.slane %v802, 1
        %v957 = vsel %vm951, %v955, %v956
        %v958 = vrot.slane %v775, 1
        %v959 = vsel %vm951, %v953, %v958
        %v960 = vrot.slane %v810, 1
        %v961 = vsel %vm951, %v956, %v960
        %v962 = vrot.slane %v776, 1
        %v963 = vsel %vm951, %v958, %v962
        %v964 = vrot.slane %v818, 1
        %v965 = vsel %vm951, %v960, %v964
        %v966 = vrot.slane %v777, 1
        %v967 = vsel %vm951, %v962, %v966
        %v968 = vrot.slane %v826, 1
        %v969 = vsel %vm951, %v964, %v968
        %v970 = vrot.slane %v778, 1
        %v971 = vsel %vm951, %v966, %v970
        %v972 = vrot.slane %v834, 1
        %v973 = vsel %vm951, %v968, %v972
        %v974 = vrot.slane %v779, 1
        %v975 = vsel %vm951, %v970, %v974
        %v976 = vrot.slane %v842, 1
        %v977 = vsel %vm951, %v972, %v976
        %v978 = vrot.slane %v780, 1
        %v979 = vsel %vm951, %v974, %v978
        %v980 = vrot.slane %v905, 1
        %v981 = vsel %vm951, %v976, %v980
        %v982 = vrot.slane %v781, 1
        %v983 = vsel %vm951, %v978, %v982
        %v984 = vrot.slane %v908, 1
        %v985 = vsel %vm951, %v980, %v984
        %v1034 = vunpack.c.l.b16 %v910
        %v1035 = vunpack.c.l.b16 %v911
        %v1036 = vunpack.c.l.b16 %v912
        %v1037 = vunpack.c.l.b16 %v913
        %v1038 = vunpack.c.l.b16 %v914
        %v1039 = vunpack.c.l.b16 %v915
        %v1040 = vunpack.c.l.b16 %v916
        %v1041 = vunpack.c.l.b16 %v917
        %v1042 = vunpack.c.l.b16 %v918
        %v1043 = vunpack.c.l.b16 %v919
        %v1044 = vunpack.c.l.b16 %v920
        %v1045 = vunpack.c.l.b16 %v921
        %v1046 = vunpack.c.l.b16 %v922
        %v1047 = vunpack.c.l.b16 %v923
        %v1048 = vunpack.c.l.b16 %v924
        %v1049 = vunpack.c.l.b16 %v925
        %v1050 = vunpack.c.l.b16 %v926
        %v1051 = vunpack.c.l.b16 %v927
        %v1052 = vunpack.c.l.b16 %v928
        %v1053 = vunpack.c.l.b16 %v929
        %v1054 = vunpack.c.l.b16 %v930
        %v1055 = vunpack.c.l.b16 %v931
        %v1056 = vunpack.c.l.b16 %v932
        %v1057 = vunpack.c.l.b16 %v933
        %v1058 = vunpack.c.l.b16 %v934
        %v1059 = vunpack.c.l.b16 %v935
        %v1060 = vunpack.c.l.b16 %v936
        %v1061 = vunpack.c.l.b16 %v937
        %v1062 = vunpack.c.l.b16 %v938
        %v1063 = vunpack.c.l.b16 %v939
        %v1064 = vunpack.c.l.b16 %v940
        %v1065 = vunpack.c.l.b16 %v941
        %v1066 = vpack.c.b16 %v1035, %v1034
        %v1067 = vpack.c.b16 %v1037, %v1036
        %v1068 = vpack.c.b16 %v1039, %v1038
        %v1069 = vpack.c.b16 %v1041, %v1040
        %v1070 = vpack.c.b16 %v1043, %v1042
        %v1071 = vpack.c.b16 %v1045, %v1044
        %v1072 = vpack.c.b16 %v1047, %v1046
        %v1073 = vpack.c.b16 %v1049, %v1048
        %v1074 = vpack.c.b16 %v1051, %v1050
        %v1075 = vpack.c.b16 %v1053, %v1052
        %v1076 = vpack.c.b16 %v1055, %v1054
        %v1077 = vpack.c.b16 %v1057, %v1056
        %v1078 = vpack.c.b16 %v1059, %v1058
        %v1079 = vpack.c.b16 %v1061, %v1060
        %v1080 = vpack.c.b16 %v1063, %v1062
        %v1081 = vpack.c.b16 %v1065, %v1064
        %1098 = vmatprep.subr.bf16.mxu0 0
        %1099 = vmatpush1.bf16.msra.mxu0 %v1066
        %1100 = vmatprep.subr.bf16.mxu0 0
        %1101 = vmatpush1.bf16.msra.mxu0 %v1067
        %1102 = vmatprep.subr.bf16.mxu0 0
        %1103 = vmatpush1.bf16.msra.mxu0 %v1068
        %1104 = vmatprep.subr.bf16.mxu0 0
        %1105 = vmatpush1.bf16.msra.mxu0 %v1069
        %1106 = vmatprep.subr.bf16.mxu0 0
        %1107 = vmatpush1.bf16.msra.mxu0 %v1070
        %1108 = vmatprep.subr.bf16.mxu0 0
        %1109 = vmatpush1.bf16.msra.mxu0 %v1071
        %1110 = vmatprep.subr.bf16.mxu0 0
        %1111 = vmatpush1.bf16.msra.mxu0 %v1072
        %1112 = vmatprep.subr.bf16.mxu0 0
        %1113 = vmatpush1.bf16.msra.mxu0 %v1073
        %1114 = vmatprep.subr.bf16.mxu0 0
        %1115 = vmatpush1.bf16.msra.mxu0 %v1074
        %1116 = vmatprep.subr.bf16.mxu0 0
        %1117 = vmatpush1.bf16.msra.mxu0 %v1075
        %1118 = vmatprep.subr.bf16.mxu0 0
        %1119 = vmatpush1.bf16.msra.mxu0 %v1076
        %1120 = vmatprep.subr.bf16.mxu0 0
        %1121 = vmatpush1.bf16.msra.mxu0 %v1077
        %1122 = vmatprep.subr.bf16.mxu0 0
        %1123 = vmatpush1.bf16.msra.mxu0 %v1078
        %1124 = vmatprep.subr.bf16.mxu0 0
        %1125 = vmatpush1.bf16.msra.mxu0 %v1079
        %1126 = vmatprep.subr.bf16.mxu0 0
        %1127 = vmatpush1.bf16.msra.mxu0 %v1080
        %1128 = vmatprep.subr.bf16.mxu0 0
        %1129 = vmatpush1.bf16.msra.mxu0 %v1081
        %1130 = vmatprep.mubr.bf16.mxu0 %v957
        %1131 = vmatmul.mubr.bf16.gmra.mrb[0].mxu0 %v954
        %v1132 = vpop.f32.mrb[0].mxu0
        %v1133 = vadd.f32 0.0, %v1132
        %v1134 = vpop.f32.mrb[0].mxu0
        %v1135 = vpop.f32.mrb[0].mxu0
        %v1136 = vadd.f32 0.0, %v1135
        %v1137 = vpop.f32.mrb[0].mxu0
        %1138 = vmatprep.mubr.bf16.mxu0 %v961
        %1139 = vmatmul.mubr.bf16.gmra.mrb[0].mxu0 %v959
        %v1140 = vpop.f32.mrb[0].mxu0
        %v1141 = vadd.f32 0.0, %v1140
        %v1142 = vpop.f32.mrb[0].mxu0
        %v1143 = vpop.f32.mrb[0].mxu0
        %v1144 = vadd.f32 0.0, %v1143
        %v1145 = vpop.f32.mrb[0].mxu0
        %1146 = vmatprep.mubr.bf16.mxu0 %v965
        %1147 = vmatmul.mubr.bf16.gmra.mrb[0].mxu0 %v963
        %v1148 = vpop.f32.mrb[0].mxu0
        %v1149 = vadd.f32 0.0, %v1148
        %v1150 = vpop.f32.mrb[0].mxu0
        %v1151 = vpop.f32.mrb[0].mxu0
        %v1152 = vadd.f32 0.0, %v1151
        %v1153 = vpop.f32.mrb[0].mxu0
        %1154 = vmatprep.mubr.bf16.mxu0 %v969
        %1155 = vmatmul.mubr.bf16.gmra.mrb[0].mxu0 %v967
        %v1156 = vpop.f32.mrb[0].mxu0
        %v1157 = vadd.f32 0.0, %v1156
        %v1158 = vpop.f32.mrb[0].mxu0
        %v1159 = vpop.f32.mrb[0].mxu0
        %v1160 = vadd.f32 0.0, %v1159
        %v1161 = vpop.f32.mrb[0].mxu0
        %1162 = vmatprep.mubr.bf16.mxu0 %v973
        %1163 = vmatmul.mubr.bf16.gmra.mrb[0].mxu0 %v971
        %v1164 = vpop.f32.mrb[0].mxu0
        %v1165 = vadd.f32 0.0, %v1164
        %v1166 = vpop.f32.mrb[0].mxu0
        %v1167 = vpop.f32.mrb[0].mxu0
        %v1168 = vadd.f32 0.0, %v1167
        %v1169 = vpop.f32.mrb[0].mxu0
        %1170 = vmatprep.mubr.bf16.mxu0 %v977
        %1171 = vmatmul.mubr.bf16.gmra.mrb[0].mxu0 %v975
        %v1172 = vpop.f32.mrb[0].mxu0
        %v1173 = vadd.f32 0.0, %v1172
        %v1174 = vpop.f32.mrb[0].mxu0
        %v1175 = vpop.f32.mrb[0].mxu0
        %v1176 = vadd.f32 0.0, %v1175
        %v1177 = vpop.f32.mrb[0].mxu0
        %1178 = vmatprep.mubr.bf16.mxu0 %v981
        %1179 = vmatmul.mubr.bf16.gmra.mrb[0].mxu0 %v979
        %v1180 = vpop.f32.mrb[0].mxu0
        %v1181 = vadd.f32 0.0, %v1180
        %v1182 = vpop.f32.mrb[0].mxu0
        %v1183 = vpop.f32.mrb[0].mxu0
        %v1184 = vadd.f32 0.0, %v1183
        %v1185 = vpop.f32.mrb[0].mxu0
        %1186 = vmatprep.mubr.bf16.mxu0 %v985
        %1187 = vmatmul.mubr.bf16.gmra.mrb[0].mxu0 %v983
        %v1188 = vpop.f32.mrb[0].mxu0
        %v1189 = vadd.f32 0.0, %v1188
        %v1190 = vpop.f32.mrb[0].mxu0
        %v1191 = vpop.f32.mrb[0].mxu0
        %v1192 = vadd.f32 0.0, %v1191
        %v1193 = vpop.f32.mrb[0].mxu0
        %1194 = vdwg.mxu0
        %v1227 = vunpack.c.l.b16 %v859
        %v1228 = vunpack.c.l.b16 %v860
        %v1229 = vunpack.c.l.b16 %v861
        %v1230 = vunpack.c.l.b16 %v862
        %v1231 = vunpack.c.l.b16 %v863
        %v1232 = vunpack.c.l.b16 %v864
        %v1233 = vunpack.c.l.b16 %v865
        %v1234 = vunpack.c.l.b16 %v866
        %v1235 = vunpack.c.l.b16 %v867
        %v1236 = vunpack.c.l.b16 %v868
        %v1237 = vunpack.c.l.b16 %v869
        %v1238 = vunpack.c.l.b16 %v870
        %v1239 = vunpack.c.l.b16 %v871
        %v1240 = vunpack.c.l.b16 %v872
        %v1241 = vunpack.c.l.b16 %v873
        %v1242 = vunpack.c.l.b16 %v874
        %v1243 = vunpack.c.l.b16 %v875
        %v1244 = vunpack.c.l.b16 %v876
        %v1245 = vunpack.c.l.b16 %v877
        %v1246 = vunpack.c.l.b16 %v878
        %v1247 = vunpack.c.l.b16 %v879
        %v1248 = vunpack.c.l.b16 %v880
        %v1249 = vunpack.c.l.b16 %v881
        %v1250 = vunpack.c.l.b16 %v882
        %v1251 = vunpack.c.l.b16 %v883
        %v1252 = vunpack.c.l.b16 %v884
        %v1253 = vunpack.c.l.b16 %v885
        %v1254 = vunpack.c.l.b16 %v886
        %v1255 = vunpack.c.l.b16 %v887
        %v1256 = vunpack.c.l.b16 %v888
        %v1257 = vunpack.c.l.b16 %v889
        %v1258 = vunpack.c.l.b16 %v890
        %v1259 = vpack.c.b16 %v1228, %v1227
        %v1260 = vpack.c.b16 %v1230, %v1229
        %v1261 = vpack.c.b16 %v1232, %v1231
        %v1262 = vpack.c.b16 %v1234, %v1233
        %v1263 = vpack.c.b16 %v1236, %v1235
        %v1264 = vpack.c.b16 %v1238, %v1237
        %v1265 = vpack.c.b16 %v1240, %v1239
        %v1266 = vpack.c.b16 %v1242, %v1241
        %v1267 = vpack.c.b16 %v1244, %v1243
        %v1268 = vpack.c.b16 %v1246, %v1245
        %v1269 = vpack.c.b16 %v1248, %v1247
        %v1270 = vpack.c.b16 %v1250, %v1249
        %v1271 = vpack.c.b16 %v1252, %v1251
        %v1272 = vpack.c.b16 %v1254, %v1253
        %v1273 = vpack.c.b16 %v1256, %v1255
        %v1274 = vpack.c.b16 %v1258, %v1257
        %1291 = vmatprep.subr.bf16.mxu0 0
        %1292 = vmatpush1.bf16.msra.mxu0 %v1259
        %1293 = vmatprep.subr.bf16.mxu0 0
        %1294 = vmatpush1.bf16.msra.mxu0 %v1260
        %1295 = vmatprep.subr.bf16.mxu0 0
        %1296 = vmatpush1.bf16.msra.mxu0 %v1261
        %1297 = vmatprep.subr.bf16.mxu0 0
        %1298 = vmatpush1.bf16.msra.mxu0 %v1262
        %1299 = vmatprep.subr.bf16.mxu0 0
        %1300 = vmatpush1.bf16.msra.mxu0 %v1263
        %1301 = vmatprep.subr.bf16.mxu0 0
        %1302 = vmatpush1.bf16.msra.mxu0 %v1264
        %1303 = vmatprep.subr.bf16.mxu0 0
        %1304 = vmatpush1.bf16.msra.mxu0 %v1265
        %1305 = vmatprep.subr.bf16.mxu0 0
        %1306 = vmatpush1.bf16.msra.mxu0 %v1266
        %1307 = vmatprep.subr.bf16.mxu0 0
        %1308 = vmatpush1.bf16.msra.mxu0 %v1267
        %1309 = vmatprep.subr.bf16.mxu0 0
        %1310 = vmatpush1.bf16.msra.mxu0 %v1268
        %1311 = vmatprep.subr.bf16.mxu0 0
        %1312 = vmatpush1.bf16.msra.mxu0 %v1269
        %1313 = vmatprep.subr.bf16.mxu0 0
        %1314 = vmatpush1.bf16.msra.mxu0 %v1270
        %1315 = vmatprep.subr.bf16.mxu0 0
        %1316 = vmatpush1.bf16.msra.mxu0 %v1271
        %1317 = vmatprep.subr.bf16.mxu0 0
        %1318 = vmatpush1.bf16.msra.mxu0 %v1272
        %1319 = vmatprep.subr.bf16.mxu0 0
        %1320 = vmatpush1.bf16.msra.mxu0 %v1273
        %1321 = vmatprep.subr.bf16.mxu0 0
        %1322 = vmatpush1.bf16.msra.mxu0 %v1274
        %1323 = vmatprep.mubr.bf16.mxu0 %v794
        %1324 = vmatmul.mubr.bf16.gmra.mrb[0].mxu0 %v765
        %v1325 = vpop.f32.mrb[0].mxu0
        %v1326 = vadd.f32 %v1133, %v1325
        %v1327 = vpop.f32.mrb[0].mxu0
        %v1328 = vpop.f32.mrb[0].mxu0
        %v1329 = vadd.f32 %v1136, %v1328
        %v1330 = vpop.f32.mrb[0].mxu0
        %1331 = vmatprep.mubr.bf16.mxu0 %v802
        %1332 = vmatmul.mubr.bf16.gmra.mrb[0].mxu0 %v766
        %v1333 = vpop.f32.mrb[0].mxu0
        %v1334 = vadd.f32 %v1141, %v1333
        %v1335 = vpop.f32.mrb[0].mxu0
        %v1336 = vpop.f32.mrb[0].mxu0
        %v1337 = vadd.f32 %v1144, %v1336
        %v1338 = vpop.f32.mrb[0].mxu0
        %1339 = vmatprep.mubr.bf16.mxu0 %v810
        %1340 = vmatmul.mubr.bf16.gmra.mrb[0].mxu0 %v767
        %v1341 = vpop.f32.mrb[0].mxu0
        %v1342 = vadd.f32 %v1149, %v1341
        %v1343 = vpop.f32.mrb[0].mxu0
        %v1344 = vpop.f32.mrb[0].mxu0
        %v1345 = vadd.f32 %v1152, %v1344
        %v1346 = vpop.f32.mrb[0].mxu0
        %1347 = vmatprep.mubr.bf16.mxu0 %v818
        %1348 = vmatmul.mubr.bf16.gmra.mrb[0].mxu0 %v768
        %v1349 = vpop.f32.mrb[0].mxu0
        %v1350 = vadd.f32 %v1157, %v1349
        %v1351 = vpop.f32.mrb[0].mxu0
        %v1352 = vpop.f32.mrb[0].mxu0
        %v1353 = vadd.f32 %v1160, %v1352
        %v1354 = vpop.f32.mrb[0].mxu0
        %1355 = vmatprep.mubr.bf16.mxu0 %v826
        %1356 = vmatmul.mubr.bf16.gmra.mrb[0].mxu0 %v769
        %v1357 = vpop.f32.mrb[0].mxu0
        %v1358 = vadd.f32 %v1165, %v1357
        %v1359 = vpop.f32.mrb[0].mxu0
        %v1360 = vpop.f32.mrb[0].mxu0
        %v1361 = vadd.f32 %v1168, %v1360
        %v1362 = vpop.f32.mrb[0].mxu0
        %1363 = vmatprep.mubr.bf16.mxu0 %v834
        %1364 = vmatmul.mubr.bf16.gmra.mrb[0].mxu0 %v770
        %v1365 = vpop.f32.mrb[0].mxu0
        %v1366 = vadd.f32 %v1173, %v1365
        %v1367 = vpop.f32.mrb[0].mxu0
        %v1368 = vpop.f32.mrb[0].mxu0
        %v1369 = vadd.f32 %v1176, %v1368
        %v1370 = vpop.f32.mrb[0].mxu0
        %1371 = vmatprep.mubr.bf16.mxu0 %v842
        %1372 = vmatmul.mubr.bf16.gmra.mrb[0].mxu0 %v771
        %v1373 = vpop.f32.mrb[0].mxu0
        %v1374 = vadd.f32 %v1181, %v1373
        %v1375 = vpop.f32.mrb[0].mxu0
        %v1376 = vpop.f32.mrb[0].mxu0
        %v1377 = vadd.f32 %v1184, %v1376
        %v1378 = vpop.f32.mrb[0].mxu0
        %1379 = vmatprep.mubr.bf16.mxu0 %v850
        %1380 = vmatmul.mubr.bf16.gmra.mrb[0].mxu0 %v772
        %v1381 = vpop.f32.mrb[0].mxu0
        %v1382 = vadd.f32 %v1189, %v1381
        %v1383 = vpop.f32.mrb[0].mxu0
        %v1384 = vpop.f32.mrb[0].mxu0
        %v1385 = vadd.f32 %v1192, %v1384
        %v1386 = vpop.f32.mrb[0].mxu0
        %1387 = vdwg.mxu0
        %v1388 = vld [vmem:[#allocation2] sm:$0xfc]
        %v1389 = vld [vmem:[#allocation2 + $0x40] sm:$0x7]
        %v1391 = vshrl.u32 %v1388, 16
        %v1393 = vshll.u32 %v1388, 16
        %v1395 = vrot.slane %v1393, 1
        %v1396 = vor.u32 %v1391, %v1395
        %v1397 = vsel %vm782, %v1396, %v793
        %v1399 = vshll.u32 %v1389, 16
        %v1401 = vrot.slane %v1399, 1
        %v1402 = vsel %vm782, %v845, %v1401
        %v1403 = vshrl.u32 %v1389, 16
        %v1405 = vor.u32 %v1403, %v1401
        %s1406 = scalar_lea.vmem [#allocation5], 256
        %v1407 = vld [vmem:[%s1406] sm:$0xf]
        %v1408 = vld [vmem:[%s1406 + $0x4] sm:$0xf]
        %v1409 = vld [vmem:[%s1406 + $0x8] sm:$0xf]
        %v1410 = vld [vmem:[%s1406 + $0xc] sm:$0xf]
        %v1411 = vld [vmem:[%s1406 + $0x10] sm:$0xf]
        %v1412 = vld [vmem:[%s1406 + $0x14] sm:$0xf]
        %v1413 = vld [vmem:[%s1406 + $0x18] sm:$0xf]
        %v1414 = vld [vmem:[%s1406 + $0x1c] sm:$0xf]
        %v1415 = vld [vmem:[%s1406 + $0x20] sm:$0xf]
        %v1416 = vld [vmem:[%s1406 + $0x24] sm:$0xf]
        %v1417 = vld [vmem:[%s1406 + $0x28] sm:$0xf]
        %v1418 = vld [vmem:[%s1406 + $0x2c] sm:$0xf]
        %v1419 = vld [vmem:[%s1406 + $0x30] sm:$0xf]
        %v1420 = vld [vmem:[%s1406 + $0x34] sm:$0xf]
        %v1421 = vld [vmem:[%s1406 + $0x38] sm:$0xf]
        %v1422 = vld [vmem:[%s1406 + $0x3c] sm:$0xf]
        %v1423 = vld [vmem:[%s1406 + $0x40] sm:$0xf]
        %v1424 = vld [vmem:[%s1406 + $0x44] sm:$0xf]
        %v1425 = vld [vmem:[%s1406 + $0x48] sm:$0xf]
        %v1426 = vld [vmem:[%s1406 + $0x4c] sm:$0xf]
        %v1427 = vld [vmem:[%s1406 + $0x50] sm:$0xf]
        %v1428 = vld [vmem:[%s1406 + $0x54] sm:$0xf]
        %v1429 = vld [vmem:[%s1406 + $0x58] sm:$0xf]
        %v1430 = vld [vmem:[%s1406 + $0x5c] sm:$0xf]
        %v1431 = vld [vmem:[%s1406 + $0x60] sm:$0xf]
        %v1432 = vld [vmem:[%s1406 + $0x64] sm:$0xf]
        %v1433 = vld [vmem:[%s1406 + $0x68] sm:$0xf]
        %v1434 = vld [vmem:[%s1406 + $0x6c] sm:$0xf]
        %v1435 = vld [vmem:[%s1406 + $0x70] sm:$0xf]
        %v1436 = vld [vmem:[%s1406 + $0x74] sm:$0xf]
        %v1437 = vld [vmem:[%s1406 + $0x78] sm:$0xf]
        %v1438 = vld [vmem:[%s1406 + $0x7c] sm:$0xf]
        %vm1441 = vcmask 1045504
        %v1442 = vrot.slane %v1388, 2
        %v1443 = vrot.slane %v774, 2
        %v1444 = vsel %vm1441, %v1442, %v1443
        %v1445 = vrot.slane %v1397, 2
        %v1446 = vrot.slane %v802, 2
        %v1447 = vsel %vm1441, %v1445, %v1446
        %v1448 = vrot.slane %v775, 2
        %v1449 = vsel %vm1441, %v1443, %v1448
        %v1450 = vrot.slane %v810, 2
        %v1451 = vsel %vm1441, %v1446, %v1450
        %v1452 = vrot.slane %v776, 2
        %v1453 = vsel %vm1441, %v1448, %v1452
        %v1454 = vrot.slane %v818, 2
        %v1455 = vsel %vm1441, %v1450, %v1454
        %v1456 = vrot.slane %v777, 2
        %v1457 = vsel %vm1441, %v1452, %v1456
        %v1458 = vrot.slane %v826, 2
        %v1459 = vsel %vm1441, %v1454, %v1458
        %v1460 = vrot.slane %v778, 2
        %v1461 = vsel %vm1441, %v1456, %v1460
        %v1462 = vrot.slane %v834, 2
        %v1463 = vsel %vm1441, %v1458, %v1462
        %v1464 = vrot.slane %v779, 2
        %v1465 = vsel %vm1441, %v1460, %v1464
        %v1466 = vrot.slane %v842, 2
        %v1467 = vsel %vm1441, %v1462, %v1466
        %v1468 = vrot.slane %v780, 2
        %v1469 = vsel %vm1441, %v1464, %v1468
        %v1470 = vrot.slane %v1402, 2
        %v1471 = vsel %vm1441, %v1466, %v1470
        %v1472 = vrot.slane %v892, 2
        %v1473 = vsel %vm1441, %v1468, %v1472
        %v1474 = vrot.slane %v1405, 2
        %v1475 = vsel %vm1441, %v1470, %v1474
        %v1524 = vunpack.c.l.b16 %v1407
        %v1525 = vunpack.c.l.b16 %v1408
        %v1526 = vunpack.c.l.b16 %v1409
        %v1527 = vunpack.c.l.b16 %v1410
        %v1528 = vunpack.c.l.b16 %v1411
        %v1529 = vunpack.c.l.b16 %v1412
        %v1530 = vunpack.c.l.b16 %v1413
        %v1531 = vunpack.c.l.b16 %v1414
        %v1532 = vunpack.c.l.b16 %v1415
        %v1533 = vunpack.c.l.b16 %v1416
        %v1534 = vunpack.c.l.b16 %v1417
        %v1535 = vunpack.c.l.b16 %v1418
        %v1536 = vunpack.c.l.b16 %v1419
        %v1537 = vunpack.c.l.b16 %v1420
        %v1538 = vunpack.c.l.b16 %v1421
        %v1539 = vunpack.c.l.b16 %v1422
        %v1540 = vunpack.c.l.b16 %v1423
        %v1541 = vunpack.c.l.b16 %v1424
        %v1542 = vunpack.c.l.b16 %v1425
        %v1543 = vunpack.c.l.b16 %v1426
        %v1544 = vunpack.c.l.b16 %v1427
        %v1545 = vunpack.c.l.b16 %v1428
        %v1546 = vunpack.c.l.b16 %v1429
        %v1547 = vunpack.c.l.b16 %v1430
        %v1548 = vunpack.c.l.b16 %v1431
        %v1549 = vunpack.c.l.b16 %v1432
        %v1550 = vunpack.c.l.b16 %v1433
        %v1551 = vunpack.c.l.b16 %v1434
        %v1552 = vunpack.c.l.b16 %v1435
        %v1553 = vunpack.c.l.b16 %v1436
        %v1554 = vunpack.c.l.b16 %v1437
        %v1555 = vunpack.c.l.b16 %v1438
        %v1556 = vpack.c.b16 %v1525, %v1524
        %v1557 = vpack.c.b16 %v1527, %v1526
        %v1558 = vpack.c.b16 %v1529, %v1528
        %v1559 = vpack.c.b16 %v1531, %v1530
        %v1560 = vpack.c.b16 %v1533, %v1532
        %v1561 = vpack.c.b16 %v1535, %v1534
        %v1562 = vpack.c.b16 %v1537, %v1536
        %v1563 = vpack.c.b16 %v1539, %v1538
        %v1564 = vpack.c.b16 %v1541, %v1540
        %v1565 = vpack.c.b16 %v1543, %v1542
        %v1566 = vpack.c.b16 %v1545, %v1544
        %v1567 = vpack.c.b16 %v1547, %v1546
        %v1568 = vpack.c.b16 %v1549, %v1548
        %v1569 = vpack.c.b16 %v1551, %v1550
        %v1570 = vpack.c.b16 %v1553, %v1552
        %v1571 = vpack.c.b16 %v1555, %v1554
        %1588 = vmatprep.subr.bf16.mxu0 0
        %1589 = vmatpush1.bf16.msra.mxu0 %v1556
        %1590 = vmatprep.subr.bf16.mxu0 0
        %1591 = vmatpush1.bf16.msra.mxu0 %v1557
        %1592 = vmatprep.subr.bf16.mxu0 0
        %1593 = vmatpush1.bf16.msra.mxu0 %v1558
        %1594 = vmatprep.subr.bf16.mxu0 0
        %1595 = vmatpush1.bf16.msra.mxu0 %v1559
        %1596 = vmatprep.subr.bf16.mxu0 0
        %1597 = vmatpush1.bf16.msra.mxu0 %v1560
        %1598 = vmatprep.subr.bf16.mxu0 0
        %1599 = vmatpush1.bf16.msra.mxu0 %v1561
        %1600 = vmatprep.subr.bf16.mxu0 0
        %1601 = vmatpush1.bf16.msra.mxu0 %v1562
        %1602 = vmatprep.subr.bf16.mxu0 0
        %1603 = vmatpush1.bf16.msra.mxu0 %v1563
        %1604 = vmatprep.subr.bf16.mxu0 0
        %1605 = vmatpush1.bf16.msra.mxu0 %v1564
        %1606 = vmatprep.subr.bf16.mxu0 0
        %1607 = vmatpush1.bf16.msra.mxu0 %v1565
        %1608 = vmatprep.subr.bf16.mxu0 0
        %1609 = vmatpush1.bf16.msra.mxu0 %v1566
        %1610 = vmatprep.subr.bf16.mxu0 0
        %1611 = vmatpush1.bf16.msra.mxu0 %v1567
        %1612 = vmatprep.subr.bf16.mxu0 0
        %1613 = vmatpush1.bf16.msra.mxu0 %v1568
        %1614 = vmatprep.subr.bf16.mxu0 0
        %1615 = vmatpush1.bf16.msra.mxu0 %v1569
        %1616 = vmatprep.subr.bf16.mxu0 0
        %1617 = vmatpush1.bf16.msra.mxu0 %v1570
        %1618 = vmatprep.subr.bf16.mxu0 0
        %1619 = vmatpush1.bf16.msra.mxu0 %v1571
        %1620 = vmatprep.mubr.bf16.mxu0 %v1447
        %1621 = vmatmul.mubr.bf16.gmra.mrb[0].mxu0 %v1444
        %v1622 = vpop.f32.mrb[0].mxu0
        %v1623 = vadd.f32 0.0, %v1622
        %v1624 = vpop.f32.mrb[0].mxu0
        %v1625 = vpop.f32.mrb[0].mxu0
        %v1626 = vadd.f32 0.0, %v1625
        %v1627 = vpop.f32.mrb[0].mxu0
        %1628 = vmatprep.mubr.bf16.mxu0 %v1451
        %1629 = vmatmul.mubr.bf16.gmra.mrb[0].mxu0 %v1449
        %v1630 = vpop.f32.mrb[0].mxu0
        %v1631 = vadd.f32 0.0, %v1630
        %v1632 = vpop.f32.mrb[0].mxu0
        %v1633 = vpop.f32.mrb[0].mxu0
        %v1634 = vadd.f32 0.0, %v1633
        %v1635 = vpop.f32.mrb[0].mxu0
        %1636 = vmatprep.mubr.bf16.mxu0 %v1455
        %1637 = vmatmul.mubr.bf16.gmra.mrb[0].mxu0 %v1453
        %v1638 = vpop.f32.mrb[0].mxu0
        %v1639 = vadd.f32 0.0, %v1638
        %v1640 = vpop.f32.mrb[0].mxu0
        %v1641 = vpop.f32.mrb[0].mxu0
        %v1642 = vadd.f32 0.0, %v1641
        %v1643 = vpop.f32.mrb[0].mxu0
        %1644 = vmatprep.mubr.bf16.mxu0 %v1459
        %1645 = vmatmul.mubr.bf16.gmra.mrb[0].mxu0 %v1457
        %v1646 = vpop.f32.mrb[0].mxu0
        %v1647 = vadd.f32 0.0, %v1646
        %v1648 = vpop.f32.mrb[0].mxu0
        %v1649 = vpop.f32.mrb[0].mxu0
        %v1650 = vadd.f32 0.0, %v1649
        %v1651 = vpop.f32.mrb[0].mxu0
        %1652 = vmatprep.mubr.bf16.mxu0 %v1463
        %1653 = vmatmul.mubr.bf16.gmra.mrb[0].mxu0 %v1461
        %v1654 = vpop.f32.mrb[0].mxu0
        %v1655 = vadd.f32 0.0, %v1654
        %v1656 = vpop.f32.mrb[0].mxu0
        %v1657 = vpop.f32.mrb[0].mxu0
        %v1658 = vadd.f32 0.0, %v1657
        %v1659 = vpop.f32.mrb[0].mxu0
        %1660 = vmatprep.mubr.bf16.mxu0 %v1467
        %1661 = vmatmul.mubr.bf16.gmra.mrb[0].mxu0 %v1465
        %v1662 = vpop.f32.mrb[0].mxu0
        %v1663 = vadd.f32 0.0, %v1662
        %v1664 = vpop.f32.mrb[0].mxu0
        %v1665 = vpop.f32.mrb[0].mxu0
        %v1666 = vadd.f32 0.0, %v1665
        %v1667 = vpop.f32.mrb[0].mxu0
        %1668 = vmatprep.mubr.bf16.mxu0 %v1471
        %1669 = vmatmul.mubr.bf16.gmra.mrb[0].mxu0 %v1469
        %v1670 = vpop.f32.mrb[0].mxu0
        %v1671 = vadd.f32 0.0, %v1670
        %v1672 = vpop.f32.mrb[0].mxu0
        %v1673 = vpop.f32.mrb[0].mxu0
        %v1674 = vadd.f32 0.0, %v1673
        %v1675 = vpop.f32.mrb[0].mxu0
        %1676 = vmatprep.mubr.bf16.mxu0 %v1475
        %1677 = vmatmul.mubr.bf16.gmra.mrb[0].mxu0 %v1473
        %v1678 = vpop.f32.mrb[0].mxu0
        %v1679 = vadd.f32 0.0, %v1678
        %v1680 = vpop.f32.mrb[0].mxu0
        %v1681 = vpop.f32.mrb[0].mxu0
        %v1682 = vadd.f32 0.0, %v1681
        %v1683 = vpop.f32.mrb[0].mxu0
        %1684 = vdwg.mxu0
        %v1685 = vadd.f32 %v1326, %v1623
        %v1686 = vadd.f32 %v1329, %v1626
        %v1687 = vadd.f32 %v1334, %v1631
        %v1688 = vadd.f32 %v1337, %v1634
        %v1689 = vadd.f32 %v1342, %v1639
        %v1690 = vadd.f32 %v1345, %v1642
        %v1691 = vadd.f32 %v1350, %v1647
        %v1692 = vadd.f32 %v1353, %v1650
        %v1693 = vadd.f32 %v1358, %v1655
        %v1694 = vadd.f32 %v1361, %v1658
        %v1695 = vadd.f32 %v1366, %v1663
        %v1696 = vadd.f32 %v1369, %v1666
        %v1697 = vadd.f32 %v1374, %v1671
        %v1698 = vadd.f32 %v1377, %v1674
        %v1699 = vadd.f32 %v1382, %v1679
        %v1700 = vadd.f32 %v1385, %v1682
        %v1701 = vld [vmem:[#allocation2] sm:$0xf8]
        %v1702 = vld [vmem:[#allocation2 + $0x40] sm:$0xf]
        %v1704 = vshrl.u32 %v1701, 16
        %v1706 = vshll.u32 %v1701, 16
        %v1708 = vrot.slane %v1706, 1
        %v1709 = vor.u32 %v1704, %v1708
        %v1710 = vsel %vm782, %v1709, %v793
        %v1712 = vshll.u32 %v1702, 16
        %v1714 = vrot.slane %v1712, 1
        %v1715 = vsel %vm782, %v845, %v1714
        %v1716 = vshrl.u32 %v1702, 16
        %v1718 = vor.u32 %v1716, %v1714
        %s1719 = scalar_lea.vmem [#allocation5], 384
        %v1720 = vld [vmem:[%s1719] sm:$0xf]
        %v1721 = vld [vmem:[%s1719 + $0x4] sm:$0xf]
        %v1722 = vld [vmem:[%s1719 + $0x8] sm:$0xf]
        %v1723 = vld [vmem:[%s1719 + $0xc] sm:$0xf]
        %v1724 = vld [vmem:[%s1719 + $0x10] sm:$0xf]
        %v1725 = vld [vmem:[%s1719 + $0x14] sm:$0xf]
        %v1726 = vld [vmem:[%s1719 + $0x18] sm:$0xf]
        %v1727 = vld [vmem:[%s1719 + $0x1c] sm:$0xf]
        %v1728 = vld [vmem:[%s1719 + $0x20] sm:$0xf]
        %v1729 = vld [vmem:[%s1719 + $0x24] sm:$0xf]
        %v1730 = vld [vmem:[%s1719 + $0x28] sm:$0xf]
        %v1731 = vld [vmem:[%s1719 + $0x2c] sm:$0xf]
        %v1732 = vld [vmem:[%s1719 + $0x30] sm:$0xf]
        %v1733 = vld [vmem:[%s1719 + $0x34] sm:$0xf]
        %v1734 = vld [vmem:[%s1719 + $0x38] sm:$0xf]
        %v1735 = vld [vmem:[%s1719 + $0x3c] sm:$0xf]
        %v1736 = vld [vmem:[%s1719 + $0x40] sm:$0xf]
        %v1737 = vld [vmem:[%s1719 + $0x44] sm:$0xf]
        %v1738 = vld [vmem:[%s1719 + $0x48] sm:$0xf]
        %v1739 = vld [vmem:[%s1719 + $0x4c] sm:$0xf]
        %v1740 = vld [vmem:[%s1719 + $0x50] sm:$0xf]
        %v1741 = vld [vmem:[%s1719 + $0x54] sm:$0xf]
        %v1742 = vld [vmem:[%s1719 + $0x58] sm:$0xf]
        %v1743 = vld [vmem:[%s1719 + $0x5c] sm:$0xf]
        %v1744 = vld [vmem:[%s1719 + $0x60] sm:$0xf]
        %v1745 = vld [vmem:[%s1719 + $0x64] sm:$0xf]
        %v1746 = vld [vmem:[%s1719 + $0x68] sm:$0xf]
        %v1747 = vld [vmem:[%s1719 + $0x6c] sm:$0xf]
        %v1748 = vld [vmem:[%s1719 + $0x70] sm:$0xf]
        %v1749 = vld [vmem:[%s1719 + $0x74] sm:$0xf]
        %v1750 = vld [vmem:[%s1719 + $0x78] sm:$0xf]
        %v1751 = vld [vmem:[%s1719 + $0x7c] sm:$0xf]
        %vm1754 = vcmask 1044480
        %v1755 = vrot.slane %v1701, 3
        %v1756 = vrot.slane %v774, 3
        %v1757 = vsel %vm1754, %v1755, %v1756
        %v1758 = vrot.slane %v1710, 3
        %v1759 = vrot.slane %v802, 3
        %v1760 = vsel %vm1754, %v1758, %v1759
        %v1761 = vrot.slane %v775, 3
        %v1762 = vsel %vm1754, %v1756, %v1761
        %v1763 = vrot.slane %v810, 3
        %v1764 = vsel %vm1754, %v1759, %v1763
        %v1765 = vrot.slane %v776, 3
        %v1766 = vsel %vm1754, %v1761, %v1765
        %v1767 = vrot.slane %v818, 3
        %v1768 = vsel %vm1754, %v1763, %v1767
        %v1769 = vrot.slane %v777, 3
        %v1770 = vsel %vm1754, %v1765, %v1769
        %v1771 = vrot.slane %v826, 3
        %v1772 = vsel %vm1754, %v1767, %v1771
        %v1773 = vrot.slane %v778, 3
        %v1774 = vsel %vm1754, %v1769, %v1773
        %v1775 = vrot.slane %v834, 3
        %v1776 = vsel %vm1754, %v1771, %v1775
        %v1777 = vrot.slane %v779, 3
        %v1778 = vsel %vm1754, %v1773, %v1777
        %v1779 = vrot.slane %v842, 3
        %v1780 = vsel %vm1754, %v1775, %v1779
        %v1781 = vrot.slane %v780, 3
        %v1782 = vsel %vm1754, %v1777, %v1781
        %v1783 = vrot.slane %v1715, 3
        %v1784 = vsel %vm1754, %v1779, %v1783
        %v1785 = vrot.slane %v1389, 3
        %v1786 = vsel %vm1754, %v1781, %v1785
        %v1787 = vrot.slane %v1718, 3
        %v1788 = vsel %vm1754, %v1783, %v1787
        %v1837 = vunpack.c.l.b16 %v1720
        %v1838 = vunpack.c.l.b16 %v1721
        %v1839 = vunpack.c.l.b16 %v1722
        %v1840 = vunpack.c.l.b16 %v1723
        %v1841 = vunpack.c.l.b16 %v1724
        %v1842 = vunpack.c.l.b16 %v1725
        %v1843 = vunpack.c.l.b16 %v1726
        %v1844 = vunpack.c.l.b16 %v1727
        %v1845 = vunpack.c.l.b16 %v1728
        %v1846 = vunpack.c.l.b16 %v1729
        %v1847 = vunpack.c.l.b16 %v1730
        %v1848 = vunpack.c.l.b16 %v1731
        %v1849 = vunpack.c.l.b16 %v1732
        %v1850 = vunpack.c.l.b16 %v1733
        %v1851 = vunpack.c.l.b16 %v1734
        %v1852 = vunpack.c.l.b16 %v1735
        %v1853 = vunpack.c.l.b16 %v1736
        %v1854 = vunpack.c.l.b16 %v1737
        %v1855 = vunpack.c.l.b16 %v1738
        %v1856 = vunpack.c.l.b16 %v1739
        %v1857 = vunpack.c.l.b16 %v1740
        %v1858 = vunpack.c.l.b16 %v1741
        %v1859 = vunpack.c.l.b16 %v1742
        %v1860 = vunpack.c.l.b16 %v1743
        %v1861 = vunpack.c.l.b16 %v1744
        %v1862 = vunpack.c.l.b16 %v1745
        %v1863 = vunpack.c.l.b16 %v1746
        %v1864 = vunpack.c.l.b16 %v1747
        %v1865 = vunpack.c.l.b16 %v1748
        %v1866 = vunpack.c.l.b16 %v1749
        %v1867 = vunpack.c.l.b16 %v1750
        %v1868 = vunpack.c.l.b16 %v1751
        %v1869 = vpack.c.b16 %v1838, %v1837
        %v1870 = vpack.c.b16 %v1840, %v1839
        %v1871 = vpack.c.b16 %v1842, %v1841
        %v1872 = vpack.c.b16 %v1844, %v1843
        %v1873 = vpack.c.b16 %v1846, %v1845
        %v1874 = vpack.c.b16 %v1848, %v1847
        %v1875 = vpack.c.b16 %v1850, %v1849
        %v1876 = vpack.c.b16 %v1852, %v1851
        %v1877 = vpack.c.b16 %v1854, %v1853
        %v1878 = vpack.c.b16 %v1856, %v1855
        %v1879 = vpack.c.b16 %v1858, %v1857
        %v1880 = vpack.c.b16 %v1860, %v1859
        %v1881 = vpack.c.b16 %v1862, %v1861
        %v1882 = vpack.c.b16 %v1864, %v1863
        %v1883 = vpack.c.b16 %v1866, %v1865
        %v1884 = vpack.c.b16 %v1868, %v1867
        %1901 = vmatprep.subr.bf16.mxu0 0
        %1902 = vmatpush1.bf16.msra.mxu0 %v1869
        %1903 = vmatprep.subr.bf16.mxu0 0
        %1904 = vmatpush1.bf16.msra.mxu0 %v1870
        %1905 = vmatprep.subr.bf16.mxu0 0
        %1906 = vmatpush1.bf16.msra.mxu0 %v1871
        %1907 = vmatprep.subr.bf16.mxu0 0
        %1908 = vmatpush1.bf16.msra.mxu0 %v1872
        %1909 = vmatprep.subr.bf16.mxu0 0
        %1910 = vmatpush1.bf16.msra.mxu0 %v1873
        %1911 = vmatprep.subr.bf16.mxu0 0
        %1912 = vmatpush1.bf16.msra.mxu0 %v1874
        %1913 = vmatprep.subr.bf16.mxu0 0
        %1914 = vmatpush1.bf16.msra.mxu0 %v1875
        %1915 = vmatprep.subr.bf16.mxu0 0
        %1916 = vmatpush1.bf16.msra.mxu0 %v1876
        %1917 = vmatprep.subr.bf16.mxu0 0
        %1918 = vmatpush1.bf16.msra.mxu0 %v1877
        %1919 = vmatprep.subr.bf16.mxu0 0
        %1920 = vmatpush1.bf16.msra.mxu0 %v1878
        %1921 = vmatprep.subr.bf16.mxu0 0
        %1922 = vmatpush1.bf16.msra.mxu0 %v1879
        %1923 = vmatprep.subr.bf16.mxu0 0
        %1924 = vmatpush1.bf16.msra.mxu0 %v1880
        %1925 = vmatprep.subr.bf16.mxu0 0
        %1926 = vmatpush1.bf16.msra.mxu0 %v1881
        %1927 = vmatprep.subr.bf16.mxu0 0
        %1928 = vmatpush1.bf16.msra.mxu0 %v1882
        %1929 = vmatprep.subr.bf16.mxu0 0
        %1930 = vmatpush1.bf16.msra.mxu0 %v1883
        %1931 = vmatprep.subr.bf16.mxu0 0
        %1932 = vmatpush1.bf16.msra.mxu0 %v1884
        %1933 = vmatprep.mubr.bf16.mxu0 %v1760
        %1934 = vmatmul.mubr.bf16.gmra.mrb[0].mxu0 %v1757
        %v1935 = vpop.f32.mrb[0].mxu0
        %v1936 = vadd.f32 0.0, %v1935
        %v1937 = vpop.f32.mrb[0].mxu0
        %v1938 = vpop.f32.mrb[0].mxu0
        %v1939 = vadd.f32 0.0, %v1938
        %v1940 = vpop.f32.mrb[0].mxu0
        %1941 = vmatprep.mubr.bf16.mxu0 %v1764
        %1942 = vmatmul.mubr.bf16.gmra.mrb[0].mxu0 %v1762
        %v1943 = vpop.f32.mrb[0].mxu0
        %v1944 = vadd.f32 0.0, %v1943
        %v1945 = vpop.f32.mrb[0].mxu0
        %v1946 = vpop.f32.mrb[0].mxu0
        %v1947 = vadd.f32 0.0, %v1946
        %v1948 = vpop.f32.mrb[0].mxu0
        %1949 = vmatprep.mubr.bf16.mxu0 %v1768
        %1950 = vmatmul.mubr.bf16.gmra.mrb[0].mxu0 %v1766
        %v1951 = vpop.f32.mrb[0].mxu0
        %v1952 = vadd.f32 0.0, %v1951
        %v1953 = vpop.f32.mrb[0].mxu0
        %v1954 = vpop.f32.mrb[0].mxu0
        %v1955 = vadd.f32 0.0, %v1954
        %v1956 = vpop.f32.mrb[0].mxu0
        %1957 = vmatprep.mubr.bf16.mxu0 %v1772
        %1958 = vmatmul.mubr.bf16.gmra.mrb[0].mxu0 %v1770
        %v1959 = vpop.f32.mrb[0].mxu0
        %v1960 = vadd.f32 0.0, %v1959
        %v1961 = vpop.f32.mrb[0].mxu0
        %v1962 = vpop.f32.mrb[0].mxu0
        %v1963 = vadd.f32 0.0, %v1962
        %v1964 = vpop.f32.mrb[0].mxu0
        %1965 = vmatprep.mubr.bf16.mxu0 %v1776
        %1966 = vmatmul.mubr.bf16.gmra.mrb[0].mxu0 %v1774
        %v1967 = vpop.f32.mrb[0].mxu0
        %v1968 = vadd.f32 0.0, %v1967
        %v1969 = vpop.f32.mrb[0].mxu0
        %v1970 = vpop.f32.mrb[0].mxu0
        %v1971 = vadd.f32 0.0, %v1970
        %v1972 = vpop.f32.mrb[0].mxu0
        %1973 = vmatprep.mubr.bf16.mxu0 %v1780
        %1974 = vmatmul.mubr.bf16.gmra.mrb[0].mxu0 %v1778
        %v1975 = vpop.f32.mrb[0].mxu0
        %v1976 = vadd.f32 0.0, %v1975
        %v1977 = vpop.f32.mrb[0].mxu0
        %v1978 = vpop.f32.mrb[0].mxu0
        %v1979 = vadd.f32 0.0, %v1978
        %v1980 = vpop.f32.mrb[0].mxu0
        %1981 = vmatprep.mubr.bf16.mxu0 %v1784
        %1982 = vmatmul.mubr.bf16.gmra.mrb[0].mxu0 %v1782
        %v1983 = vpop.f32.mrb[0].mxu0
        %v1984 = vadd.f32 0.0, %v1983
        %v1985 = vpop.f32.mrb[0].mxu0
        %v1986 = vpop.f32.mrb[0].mxu0
        %v1987 = vadd.f32 0.0, %v1986
        %v1988 = vpop.f32.mrb[0].mxu0
        %1989 = vmatprep.mubr.bf16.mxu0 %v1788
        %1990 = vmatmul.mubr.bf16.gmra.mrb[0].mxu0 %v1786
        %v1991 = vpop.f32.mrb[0].mxu0
        %v1992 = vadd.f32 0.0, %v1991
        %v1993 = vpop.f32.mrb[0].mxu0
        %v1994 = vpop.f32.mrb[0].mxu0
        %v1995 = vadd.f32 0.0, %v1994
        %v1996 = vpop.f32.mrb[0].mxu0
        %1997 = vdwg.mxu0
        %v1998 = vadd.f32 %v1685, %v1936
        %v1999 = vadd.f32 %v1686, %v1939
        %v2000 = vadd.f32 %v1687, %v1944
        %v2001 = vadd.f32 %v1688, %v1947
        %v2002 = vadd.f32 %v1689, %v1952
        %v2003 = vadd.f32 %v1690, %v1955
        %v2004 = vadd.f32 %v1691, %v1960
        %v2005 = vadd.f32 %v1692, %v1963
        %v2006 = vadd.f32 %v1693, %v1968
        %v2007 = vadd.f32 %v1694, %v1971
        %v2008 = vadd.f32 %v1695, %v1976
        %v2009 = vadd.f32 %v1696, %v1979
        %v2010 = vadd.f32 %v1697, %v1984
        %v2011 = vadd.f32 %v1698, %v1987
        %v2012 = vadd.f32 %v1699, %v1992
        %v2013 = vadd.f32 %v1700, %v1995
        %v2014 = vld [vmem:[#allocation2] sm:$0xf0]
        %v2015 = vld [vmem:[#allocation2 + $0x40] sm:$0x1f]
        %v2017 = vshrl.u32 %v2014, 16
        %v2019 = vshll.u32 %v2014, 16
        %v2021 = vrot.slane %v2019, 1
        %v2022 = vor.u32 %v2017, %v2021
        %v2023 = vsel %vm782, %v2022, %v793
        %v2025 = vshll.u32 %v2015, 16
        %v2027 = vrot.slane %v2025, 1
        %v2028 = vsel %vm782, %v845, %v2027
        %v2029 = vshrl.u32 %v2015, 16
        %v2031 = vor.u32 %v2029, %v2027
        %s2032 = scalar_lea.vmem [#allocation5], 512
        %v2033 = vld [vmem:[%s2032] sm:$0xf]
        %v2034 = vld [vmem:[%s2032 + $0x4] sm:$0xf]
        %v2035 = vld [vmem:[%s2032 + $0x8] sm:$0xf]
        %v2036 = vld [vmem:[%s2032 + $0xc] sm:$0xf]
        %v2037 = vld [vmem:[%s2032 + $0x10] sm:$0xf]
        %v2038 = vld [vmem:[%s2032 + $0x14] sm:$0xf]
        %v2039 = vld [vmem:[%s2032 + $0x18] sm:$0xf]
        %v2040 = vld [vmem:[%s2032 + $0x1c] sm:$0xf]
        %v2041 = vld [vmem:[%s2032 + $0x20] sm:$0xf]
        %v2042 = vld [vmem:[%s2032 + $0x24] sm:$0xf]
        %v2043 = vld [vmem:[%s2032 + $0x28] sm:$0xf]
        %v2044 = vld [vmem:[%s2032 + $0x2c] sm:$0xf]
        %v2045 = vld [vmem:[%s2032 + $0x30] sm:$0xf]
        %v2046 = vld [vmem:[%s2032 + $0x34] sm:$0xf]
        %v2047 = vld [vmem:[%s2032 + $0x38] sm:$0xf]
        %v2048 = vld [vmem:[%s2032 + $0x3c] sm:$0xf]
        %v2049 = vld [vmem:[%s2032 + $0x40] sm:$0xf]
        %v2050 = vld [vmem:[%s2032 + $0x44] sm:$0xf]
        %v2051 = vld [vmem:[%s2032 + $0x48] sm:$0xf]
        %v2052 = vld [vmem:[%s2032 + $0x4c] sm:$0xf]
        %v2053 = vld [vmem:[%s2032 + $0x50] sm:$0xf]
        %v2054 = vld [vmem:[%s2032 + $0x54] sm:$0xf]
        %v2055 = vld [vmem:[%s2032 + $0x58] sm:$0xf]
        %v2056 = vld [vmem:[%s2032 + $0x5c] sm:$0xf]
        %v2057 = vld [vmem:[%s2032 + $0x60] sm:$0xf]
        %v2058 = vld [vmem:[%s2032 + $0x64] sm:$0xf]
        %v2059 = vld [vmem:[%s2032 + $0x68] sm:$0xf]
        %v2060 = vld [vmem:[%s2032 + $0x6c] sm:$0xf]
        %v2061 = vld [vmem:[%s2032 + $0x70] sm:$0xf]
        %v2062 = vld [vmem:[%s2032 + $0x74] sm:$0xf]
        %v2063 = vld [vmem:[%s2032 + $0x78] sm:$0xf]
        %v2064 = vld [vmem:[%s2032 + $0x7c] sm:$0xf]
        %v2067 = vrot.slane %v2014, 4
        %v2068 = vrot.slane %v774, 4
        %v2069 = vsel %vm731, %v2067, %v2068
        %v2070 = vrot.slane %v2023, 4
        %v2071 = vrot.slane %v802, 4
        %v2072 = vsel %vm731, %v2070, %v2071
        %v2073 = vrot.slane %v775, 4
        %v2074 = vsel %vm731, %v2068, %v2073
        %v2075 = vrot.slane %v810, 4
        %v2076 = vsel %vm731, %v2071, %v2075
        %v2077 = vrot.slane %v776, 4
        %v2078 = vsel %vm731, %v2073, %v2077
        %v2079 = vrot.slane %v818, 4
        %v2080 = vsel %vm731, %v2075, %v2079
        %v2081 = vrot.slane %v777, 4
        %v2082 = vsel %vm731, %v2077, %v2081
        %v2083 = vrot.slane %v826, 4
        %v2084 = vsel %vm731, %v2079, %v2083
        %v2085 = vrot.slane %v778, 4
        %v2086 = vsel %vm731, %v2081, %v2085
        %v2087 = vrot.slane %v834, 4
        %v2088 = vsel %vm731, %v2083, %v2087
        %v2089 = vrot.slane %v779, 4
        %v2090 = vsel %vm731, %v2085, %v2089
        %v2091 = vrot.slane %v842, 4
        %v2092 = vsel %vm731, %v2087, %v2091
        %v2093 = vrot.slane %v780, 4
        %v2094 = vsel %vm731, %v2089, %v2093
        %v2095 = vrot.slane %v2028, 4
        %v2096 = vsel %vm731, %v2091, %v2095
        %v2097 = vrot.slane %v1702, 4
        %v2098 = vsel %vm731, %v2093, %v2097
        %v2099 = vrot.slane %v2031, 4
        %v2100 = vsel %vm731, %v2095, %v2099
        %v2149 = vunpack.c.l.b16 %v2033
        %v2150 = vunpack.c.l.b16 %v2034
        %v2151 = vunpack.c.l.b16 %v2035
        %v2152 = vunpack.c.l.b16 %v2036
        %v2153 = vunpack.c.l.b16 %v2037
        %v2154 = vunpack.c.l.b16 %v2038
        %v2155 = vunpack.c.l.b16 %v2039
        %v2156 = vunpack.c.l.b16 %v2040
        %v2157 = vunpack.c.l.b16 %v2041
        %v2158 = vunpack.c.l.b16 %v2042
        %v2159 = vunpack.c.l.b16 %v2043
        %v2160 = vunpack.c.l.b16 %v2044
        %v2161 = vunpack.c.l.b16 %v2045
        %v2162 = vunpack.c.l.b16 %v2046
        %v2163 = vunpack.c.l.b16 %v2047
        %v2164 = vunpack.c.l.b16 %v2048
        %v2165 = vunpack.c.l.b16 %v2049
        %v2166 = vunpack.c.l.b16 %v2050
        %v2167 = vunpack.c.l.b16 %v2051
        %v2168 = vunpack.c.l.b16 %v2052
        %v2169 = vunpack.c.l.b16 %v2053
        %v2170 = vunpack.c.l.b16 %v2054
        %v2171 = vunpack.c.l.b16 %v2055
        %v2172 = vunpack.c.l.b16 %v2056
        %v2173 = vunpack.c.l.b16 %v2057
        %v2174 = vunpack.c.l.b16 %v2058
        %v2175 = vunpack.c.l.b16 %v2059
        %v2176 = vunpack.c.l.b16 %v2060
        %v2177 = vunpack.c.l.b16 %v2061
        %v2178 = vunpack.c.l.b16 %v2062
        %v2179 = vunpack.c.l.b16 %v2063
        %v2180 = vunpack.c.l.b16 %v2064
        %v2181 = vpack.c.b16 %v2150, %v2149
        %v2182 = vpack.c.b16 %v2152, %v2151
        %v2183 = vpack.c.b16 %v2154, %v2153
        %v2184 = vpack.c.b16 %v2156, %v2155
        %v2185 = vpack.c.b16 %v2158, %v2157
        %v2186 = vpack.c.b16 %v2160, %v2159
        %v2187 = vpack.c.b16 %v2162, %v2161
        %v2188 = vpack.c.b16 %v2164, %v2163
        %v2189 = vpack.c.b16 %v2166, %v2165
        %v2190 = vpack.c.b16 %v2168, %v2167
        %v2191 = vpack.c.b16 %v2170, %v2169
        %v2192 = vpack.c.b16 %v2172, %v2171
        %v2193 = vpack.c.b16 %v2174, %v2173
        %v2194 = vpack.c.b16 %v2176, %v2175
        %v2195 = vpack.c.b16 %v2178, %v2177
        %v2196 = vpack.c.b16 %v2180, %v2179
        %2213 = vmatprep.subr.bf16.mxu0 0
        %2214 = vmatpush1.bf16.msra.mxu0 %v2181
        %2215 = vmatprep.subr.bf16.mxu0 0
        %2216 = vmatpush1.bf16.msra.mxu0 %v2182
        %2217 = vmatprep.subr.bf16.mxu0 0
        %2218 = vmatpush1.bf16.msra.mxu0 %v2183
        %2219 = vmatprep.subr.bf16.mxu0 0
        %2220 = vmatpush1.bf16.msra.mxu0 %v2184
        %2221 = vmatprep.subr.bf16.mxu0 0
        %2222 = vmatpush1.bf16.msra.mxu0 %v2185
        %2223 = vmatprep.subr.bf16.mxu0 0
        %2224 = vmatpush1.bf16.msra.mxu0 %v2186
        %2225 = vmatprep.subr.bf16.mxu0 0
        %2226 = vmatpush1.bf16.msra.mxu0 %v2187
        %2227 = vmatprep.subr.bf16.mxu0 0
        %2228 = vmatpush1.bf16.msra.mxu0 %v2188
        %2229 = vmatprep.subr.bf16.mxu0 0
        %2230 = vmatpush1.bf16.msra.mxu0 %v2189
        %2231 = vmatprep.subr.bf16.mxu0 0
        %2232 = vmatpush1.bf16.msra.mxu0 %v2190
        %2233 = vmatprep.subr.bf16.mxu0 0
        %2234 = vmatpush1.bf16.msra.mxu0 %v2191
        %2235 = vmatprep.subr.bf16.mxu0 0
        %2236 = vmatpush1.bf16.msra.mxu0 %v2192
        %2237 = vmatprep.subr.bf16.mxu0 0
        %2238 = vmatpush1.bf16.msra.mxu0 %v2193
        %2239 = vmatprep.subr.bf16.mxu0 0
        %2240 = vmatpush1.bf16.msra.mxu0 %v2194
        %2241 = vmatprep.subr.bf16.mxu0 0
        %2242 = vmatpush1.bf16.msra.mxu0 %v2195
        %2243 = vmatprep.subr.bf16.mxu0 0
        %2244 = vmatpush1.bf16.msra.mxu0 %v2196
        %2245 = vmatprep.mubr.bf16.mxu0 %v2072
        %2246 = vmatmul.mubr.bf16.gmra.mrb[0].mxu0 %v2069
        %v2247 = vpop.f32.mrb[0].mxu0
        %v2248 = vadd.f32 0.0, %v2247
        %v2249 = vpop.f32.mrb[0].mxu0
        %v2250 = vpop.f32.mrb[0].mxu0
        %v2251 = vadd.f32 0.0, %v2250
        %v2252 = vpop.f32.mrb[0].mxu0
        %2253 = vmatprep.mubr.bf16.mxu0 %v2076
        %2254 = vmatmul.mubr.bf16.gmra.mrb[0].mxu0 %v2074
        %v2255 = vpop.f32.mrb[0].mxu0
        %v2256 = vadd.f32 0.0, %v2255
        %v2257 = vpop.f32.mrb[0].mxu0
        %v2258 = vpop.f32.mrb[0].mxu0
        %v2259 = vadd.f32 0.0, %v2258
        %v2260 = vpop.f32.mrb[0].mxu0
        %2261 = vmatprep.mubr.bf16.mxu0 %v2080
        %2262 = vmatmul.mubr.bf16.gmra.mrb[0].mxu0 %v2078
        %v2263 = vpop.f32.mrb[0].mxu0
        %v2264 = vadd.f32 0.0, %v2263
        %v2265 = vpop.f32.mrb[0].mxu0
        %v2266 = vpop.f32.mrb[0].mxu0
        %v2267 = vadd.f32 0.0, %v2266
        %v2268 = vpop.f32.mrb[0].mxu0
        %2269 = vmatprep.mubr.bf16.mxu0 %v2084
        %2270 = vmatmul.mubr.bf16.gmra.mrb[0].mxu0 %v2082
        %v2271 = vpop.f32.mrb[0].mxu0
        %v2272 = vadd.f32 0.0, %v2271
        %v2273 = vpop.f32.mrb[0].mxu0
        %v2274 = vpop.f32.mrb[0].mxu0
        %v2275 = vadd.f32 0.0, %v2274
        %v2276 = vpop.f32.mrb[0].mxu0
        %2277 = vmatprep.mubr.bf16.mxu0 %v2088
        %2278 = vmatmul.mubr.bf16.gmra.mrb[0].mxu0 %v2086
        %v2279 = vpop.f32.mrb[0].mxu0
        %v2280 = vadd.f32 0.0, %v2279
        %v2281 = vpop.f32.mrb[0].mxu0
        %v2282 = vpop.f32.mrb[0].mxu0
        %v2283 = vadd.f32 0.0, %v2282
        %v2284 = vpop.f32.mrb[0].mxu0
        %2285 = vmatprep.mubr.bf16.mxu0 %v2092
        %2286 = vmatmul.mubr.bf16.gmra.mrb[0].mxu0 %v2090
        %v2287 = vpop.f32.mrb[0].mxu0
        %v2288 = vadd.f32 0.0, %v2287
        %v2289 = vpop.f32.mrb[0].mxu0
        %v2290 = vpop.f32.mrb[0].mxu0
        %v2291 = vadd.f32 0.0, %v2290
        %v2292 = vpop.f32.mrb[0].mxu0
        %2293 = vmatprep.mubr.bf16.mxu0 %v2096
        %2294 = vmatmul.mubr.bf16.gmra.mrb[0].mxu0 %v2094
        %v2295 = vpop.f32.mrb[0].mxu0
        %v2296 = vadd.f32 0.0, %v2295
        %v2297 = vpop.f32.mrb[0].mxu0
        %v2298 = vpop.f32.mrb[0].mxu0
        %v2299 = vadd.f32 0.0, %v2298
        %v2300 = vpop.f32.mrb[0].mxu0
        %2301 = vmatprep.mubr.bf16.mxu0 %v2100
        %2302 = vmatmul.mubr.bf16.gmra.mrb[0].mxu0 %v2098
        %v2303 = vpop.f32.mrb[0].mxu0
        %v2304 = vadd.f32 0.0, %v2303
        %v2305 = vpop.f32.mrb[0].mxu0
        %v2306 = vpop.f32.mrb[0].mxu0
        %v2307 = vadd.f32 0.0, %v2306
        %v2308 = vpop.f32.mrb[0].mxu0
        %2309 = vdwg.mxu0
        %v2310 = vadd.f32 %v1998, %v2248
        %v2311 = vadd.f32 %v1999, %v2251
        %v2312 = vadd.f32 %v2000, %v2256
        %v2313 = vadd.f32 %v2001, %v2259
        %v2314 = vadd.f32 %v2002, %v2264
        %v2315 = vadd.f32 %v2003, %v2267
        %v2316 = vadd.f32 %v2004, %v2272
        %v2317 = vadd.f32 %v2005, %v2275
        %v2318 = vadd.f32 %v2006, %v2280
        %v2319 = vadd.f32 %v2007, %v2283
        %v2320 = vadd.f32 %v2008, %v2288
        %v2321 = vadd.f32 %v2009, %v2291
        %v2322 = vadd.f32 %v2010, %v2296
        %v2323 = vadd.f32 %v2011, %v2299
        %v2324 = vadd.f32 %v2012, %v2304
        %v2325 = vadd.f32 %v2013, %v2307
        %v2326 = vld [vmem:[#allocation2] sm:$0xe0]
        %v2327 = vld [vmem:[#allocation2 + $0x40] sm:$0x3f]
        %v2329 = vshrl.u32 %v2326, 16
        %v2331 = vshll.u32 %v2326, 16
        %v2333 = vrot.slane %v2331, 1
        %v2334 = vor.u32 %v2329, %v2333
        %v2335 = vsel %vm782, %v2334, %v793
        %v2337 = vshll.u32 %v2327, 16
        %v2339 = vrot.slane %v2337, 1
        %v2340 = vsel %vm782, %v845, %v2339
        %v2341 = vshrl.u32 %v2327, 16
        %v2343 = vor.u32 %v2341, %v2339
        %s2344 = scalar_lea.vmem [#allocation5], 640
        %v2345 = vld [vmem:[%s2344] sm:$0xf]
        %v2346 = vld [vmem:[%s2344 + $0x4] sm:$0xf]
        %v2347 = vld [vmem:[%s2344 + $0x8] sm:$0xf]
        %v2348 = vld [vmem:[%s2344 + $0xc] sm:$0xf]
        %v2349 = vld [vmem:[%s2344 + $0x10] sm:$0xf]
        %v2350 = vld [vmem:[%s2344 + $0x14] sm:$0xf]
        %v2351 = vld [vmem:[%s2344 + $0x18] sm:$0xf]
        %v2352 = vld [vmem:[%s2344 + $0x1c] sm:$0xf]
        %v2353 = vld [vmem:[%s2344 + $0x20] sm:$0xf]
        %v2354 = vld [vmem:[%s2344 + $0x24] sm:$0xf]
        %v2355 = vld [vmem:[%s2344 + $0x28] sm:$0xf]
        %v2356 = vld [vmem:[%s2344 + $0x2c] sm:$0xf]
        %v2357 = vld [vmem:[%s2344 + $0x30] sm:$0xf]
        %v2358 = vld [vmem:[%s2344 + $0x34] sm:$0xf]
        %v2359 = vld [vmem:[%s2344 + $0x38] sm:$0xf]
        %v2360 = vld [vmem:[%s2344 + $0x3c] sm:$0xf]
        %v2361 = vld [vmem:[%s2344 + $0x40] sm:$0xf]
        %v2362 = vld [vmem:[%s2344 + $0x44] sm:$0xf]
        %v2363 = vld [vmem:[%s2344 + $0x48] sm:$0xf]
        %v2364 = vld [vmem:[%s2344 + $0x4c] sm:$0xf]
        %v2365 = vld [vmem:[%s2344 + $0x50] sm:$0xf]
        %v2366 = vld [vmem:[%s2344 + $0x54] sm:$0xf]
        %v2367 = vld [vmem:[%s2344 + $0x58] sm:$0xf]
        %v2368 = vld [vmem:[%s2344 + $0x5c] sm:$0xf]
        %v2369 = vld [vmem:[%s2344 + $0x60] sm:$0xf]
        %v2370 = vld [vmem:[%s2344 + $0x64] sm:$0xf]
        %v2371 = vld [vmem:[%s2344 + $0x68] sm:$0xf]
        %v2372 = vld [vmem:[%s2344 + $0x6c] sm:$0xf]
        %v2373 = vld [vmem:[%s2344 + $0x70] sm:$0xf]
        %v2374 = vld [vmem:[%s2344 + $0x74] sm:$0xf]
        %v2375 = vld [vmem:[%s2344 + $0x78] sm:$0xf]
        %v2376 = vld [vmem:[%s2344 + $0x7c] sm:$0xf]
        %vm2379 = vcmask 1042432
        %v2380 = vrot.slane %v2326, 5
        %v2381 = vrot.slane %v774, 5
        %v2382 = vsel %vm2379, %v2380, %v2381
        %v2383 = vrot.slane %v2335, 5
        %v2384 = vrot.slane %v802, 5
        %v2385 = vsel %vm2379, %v2383, %v2384
        %v2386 = vrot.slane %v775, 5
        %v2387 = vsel %vm2379, %v2381, %v2386
        %v2388 = vrot.slane %v810, 5
        %v2389 = vsel %vm2379, %v2384, %v2388
        %v2390 = vrot.slane %v776, 5
        %v2391 = vsel %vm2379, %v2386, %v2390
        %v2392 = vrot.slane %v818, 5
        %v2393 = vsel %vm2379, %v2388, %v2392
        %v2394 = vrot.slane %v777, 5
        %v2395 = vsel %vm2379, %v2390, %v2394
        %v2396 = vrot.slane %v826, 5
        %v2397 = vsel %vm2379, %v2392, %v2396
        %v2398 = vrot.slane %v778, 5
        %v2399 = vsel %vm2379, %v2394, %v2398
        %v2400 = vrot.slane %v834, 5
        %v2401 = vsel %vm2379, %v2396, %v2400
        %v2402 = vrot.slane %v779, 5
        %v2403 = vsel %vm2379, %v2398, %v2402
        %v2404 = vrot.slane %v842, 5
        %v2405 = vsel %vm2379, %v2400, %v2404
        %v2406 = vrot.slane %v780, 5
        %v2407 = vsel %vm2379, %v2402, %v2406
        %v2408 = vrot.slane %v2340, 5
        %v2409 = vsel %vm2379, %v2404, %v2408
        %v2410 = vrot.slane %v2015, 5
        %v2411 = vsel %vm2379, %v2406, %v2410
        %v2412 = vrot.slane %v2343, 5
        %v2413 = vsel %vm2379, %v2408, %v2412
        %v2462 = vunpack.c.l.b16 %v2345
        %v2463 = vunpack.c.l.b16 %v2346
        %v2464 = vunpack.c.l.b16 %v2347
        %v2465 = vunpack.c.l.b16 %v2348
        %v2466 = vunpack.c.l.b16 %v2349
        %v2467 = vunpack.c.l.b16 %v2350
        %v2468 = vunpack.c.l.b16 %v2351
        %v2469 = vunpack.c.l.b16 %v2352
        %v2470 = vunpack.c.l.b16 %v2353
        %v2471 = vunpack.c.l.b16 %v2354
        %v2472 = vunpack.c.l.b16 %v2355
        %v2473 = vunpack.c.l.b16 %v2356
        %v2474 = vunpack.c.l.b16 %v2357
        %v2475 = vunpack.c.l.b16 %v2358
        %v2476 = vunpack.c.l.b16 %v2359
        %v2477 = vunpack.c.l.b16 %v2360
        %v2478 = vunpack.c.l.b16 %v2361
        %v2479 = vunpack.c.l.b16 %v2362
        %v2480 = vunpack.c.l.b16 %v2363
        %v2481 = vunpack.c.l.b16 %v2364
        %v2482 = vunpack.c.l.b16 %v2365
        %v2483 = vunpack.c.l.b16 %v2366
        %v2484 = vunpack.c.l.b16 %v2367
        %v2485 = vunpack.c.l.b16 %v2368
        %v2486 = vunpack.c.l.b16 %v2369
        %v2487 = vunpack.c.l.b16 %v2370
        %v2488 = vunpack.c.l.b16 %v2371
        %v2489 = vunpack.c.l.b16 %v2372
        %v2490 = vunpack.c.l.b16 %v2373
        %v2491 = vunpack.c.l.b16 %v2374
        %v2492 = vunpack.c.l.b16 %v2375
        %v2493 = vunpack.c.l.b16 %v2376
        %v2494 = vpack.c.b16 %v2463, %v2462
        %v2495 = vpack.c.b16 %v2465, %v2464
        %v2496 = vpack.c.b16 %v2467, %v2466
        %v2497 = vpack.c.b16 %v2469, %v2468
        %v2498 = vpack.c.b16 %v2471, %v2470
        %v2499 = vpack.c.b16 %v2473, %v2472
        %v2500 = vpack.c.b16 %v2475, %v2474
        %v2501 = vpack.c.b16 %v2477, %v2476
        %v2502 = vpack.c.b16 %v2479, %v2478
        %v2503 = vpack.c.b16 %v2481, %v2480
        %v2504 = vpack.c.b16 %v2483, %v2482
        %v2505 = vpack.c.b16 %v2485, %v2484
        %v2506 = vpack.c.b16 %v2487, %v2486
        %v2507 = vpack.c.b16 %v2489, %v2488
        %v2508 = vpack.c.b16 %v2491, %v2490
        %v2509 = vpack.c.b16 %v2493, %v2492
        %2526 = vmatprep.subr.bf16.mxu0 0
        %2527 = vmatpush1.bf16.msra.mxu0 %v2494
        %2528 = vmatprep.subr.bf16.mxu0 0
        %2529 = vmatpush1.bf16.msra.mxu0 %v2495
        %2530 = vmatprep.subr.bf16.mxu0 0
        %2531 = vmatpush1.bf16.msra.mxu0 %v2496
        %2532 = vmatprep.subr.bf16.mxu0 0
        %2533 = vmatpush1.bf16.msra.mxu0 %v2497
        %2534 = vmatprep.subr.bf16.mxu0 0
        %2535 = vmatpush1.bf16.msra.mxu0 %v2498
        %2536 = vmatprep.subr.bf16.mxu0 0
        %2537 = vmatpush1.bf16.msra.mxu0 %v2499
        %2538 = vmatprep.subr.bf16.mxu0 0
        %2539 = vmatpush1.bf16.msra.mxu0 %v2500
        %2540 = vmatprep.subr.bf16.mxu0 0
        %2541 = vmatpush1.bf16.msra.mxu0 %v2501
        %2542 = vmatprep.subr.bf16.mxu0 0
        %2543 = vmatpush1.bf16.msra.mxu0 %v2502
        %2544 = vmatprep.subr.bf16.mxu0 0
        %2545 = vmatpush1.bf16.msra.mxu0 %v2503
        %2546 = vmatprep.subr.bf16.mxu0 0
        %2547 = vmatpush1.bf16.msra.mxu0 %v2504
        %2548 = vmatprep.subr.bf16.mxu0 0
        %2549 = vmatpush1.bf16.msra.mxu0 %v2505
        %2550 = vmatprep.subr.bf16.mxu0 0
        %2551 = vmatpush1.bf16.msra.mxu0 %v2506
        %2552 = vmatprep.subr.bf16.mxu0 0
        %2553 = vmatpush1.bf16.msra.mxu0 %v2507
        %2554 = vmatprep.subr.bf16.mxu0 0
        %2555 = vmatpush1.bf16.msra.mxu0 %v2508
        %2556 = vmatprep.subr.bf16.mxu0 0
        %2557 = vmatpush1.bf16.msra.mxu0 %v2509
        %2558 = vmatprep.mubr.bf16.mxu0 %v2385
        %2559 = vmatmul.mubr.bf16.gmra.mrb[0].mxu0 %v2382
        %v2560 = vpop.f32.mrb[0].mxu0
        %v2561 = vadd.f32 0.0, %v2560
        %v2562 = vpop.f32.mrb[0].mxu0
        %v2563 = vpop.f32.mrb[0].mxu0
        %v2564 = vadd.f32 0.0, %v2563
        %v2565 = vpop.f32.mrb[0].mxu0
        %2566 = vmatprep.mubr.bf16.mxu0 %v2389
        %2567 = vmatmul.mubr.bf16.gmra.mrb[0].mxu0 %v2387
        %v2568 = vpop.f32.mrb[0].mxu0
        %v2569 = vadd.f32 0.0, %v2568
        %v2570 = vpop.f32.mrb[0].mxu0
        %v2571 = vpop.f32.mrb[0].mxu0
        %v2572 = vadd.f32 0.0, %v2571
        %v2573 = vpop.f32.mrb[0].mxu0
        %2574 = vmatprep.mubr.bf16.mxu0 %v2393
        %2575 = vmatmul.mubr.bf16.gmra.mrb[0].mxu0 %v2391
        %v2576 = vpop.f32.mrb[0].mxu0
        %v2577 = vadd.f32 0.0, %v2576
        %v2578 = vpop.f32.mrb[0].mxu0
        %v2579 = vpop.f32.mrb[0].mxu0
        %v2580 = vadd.f32 0.0, %v2579
        %v2581 = vpop.f32.mrb[0].mxu0
        %2582 = vmatprep.mubr.bf16.mxu0 %v2397
        %2583 = vmatmul.mubr.bf16.gmra.mrb[0].mxu0 %v2395
        %v2584 = vpop.f32.mrb[0].mxu0
        %v2585 = vadd.f32 0.0, %v2584
        %v2586 = vpop.f32.mrb[0].mxu0
        %v2587 = vpop.f32.mrb[0].mxu0
        %v2588 = vadd.f32 0.0, %v2587
        %v2589 = vpop.f32.mrb[0].mxu0
        %2590 = vmatprep.mubr.bf16.mxu0 %v2401
        %2591 = vmatmul.mubr.bf16.gmra.mrb[0].mxu0 %v2399
        %v2592 = vpop.f32.mrb[0].mxu0
        %v2593 = vadd.f32 0.0, %v2592
        %v2594 = vpop.f32.mrb[0].mxu0
        %v2595 = vpop.f32.mrb[0].mxu0
        %v2596 = vadd.f32 0.0, %v2595
        %v2597 = vpop.f32.mrb[0].mxu0
        %2598 = vmatprep.mubr.bf16.mxu0 %v2405
        %2599 = vmatmul.mubr.bf16.gmra.mrb[0].mxu0 %v2403
        %v2600 = vpop.f32.mrb[0].mxu0
        %v2601 = vadd.f32 0.0, %v2600
        %v2602 = vpop.f32.mrb[0].mxu0
        %v2603 = vpop.f32.mrb[0].mxu0
        %v2604 = vadd.f32 0.0, %v2603
        %v2605 = vpop.f32.mrb[0].mxu0
        %2606 = vmatprep.mubr.bf16.mxu0 %v2409
        %2607 = vmatmul.mubr.bf16.gmra.mrb[0].mxu0 %v2407
        %v2608 = vpop.f32.mrb[0].mxu0
        %v2609 = vadd.f32 0.0, %v2608
        %v2610 = vpop.f32.mrb[0].mxu0
        %v2611 = vpop.f32.mrb[0].mxu0
        %v2612 = vadd.f32 0.0, %v2611
        %v2613 = vpop.f32.mrb[0].mxu0
        %2614 = vmatprep.mubr.bf16.mxu0 %v2413
        %2615 = vmatmul.mubr.bf16.gmra.mrb[0].mxu0 %v2411
        %v2616 = vpop.f32.mrb[0].mxu0
        %v2617 = vadd.f32 0.0, %v2616
        %v2618 = vpop.f32.mrb[0].mxu0
        %v2619 = vpop.f32.mrb[0].mxu0
        %v2620 = vadd.f32 0.0, %v2619
        %v2621 = vpop.f32.mrb[0].mxu0
        %2622 = vdwg.mxu0
        %v2623 = vadd.f32 %v2310, %v2561
        %v2624 = vadd.f32 %v2311, %v2564
        %v2625 = vadd.f32 %v2312, %v2569
        %v2626 = vadd.f32 %v2313, %v2572
        %v2627 = vadd.f32 %v2314, %v2577
        %v2628 = vadd.f32 %v2315, %v2580
        %v2629 = vadd.f32 %v2316, %v2585
        %v2630 = vadd.f32 %v2317, %v2588
        %v2631 = vadd.f32 %v2318, %v2593
        %v2632 = vadd.f32 %v2319, %v2596
        %v2633 = vadd.f32 %v2320, %v2601
        %v2634 = vadd.f32 %v2321, %v2604
        %v2635 = vadd.f32 %v2322, %v2609
        %v2636 = vadd.f32 %v2323, %v2612
        %v2637 = vadd.f32 %v2324, %v2617
        %v2638 = vadd.f32 %v2325, %v2620
        %v2639 = vld [vmem:[#allocation2] sm:$0xc0]
        %v2640 = vld [vmem:[#allocation2 + $0x40] sm:$0x7f]
        %v2642 = vshrl.u32 %v2639, 16
        %v2644 = vshll.u32 %v2639, 16
        %v2646 = vrot.slane %v2644, 1
        %v2647 = vor.u32 %v2642, %v2646
        %v2648 = vsel %vm782, %v2647, %v793
        %v2650 = vshll.u32 %v2640, 16
        %v2652 = vrot.slane %v2650, 1
        %v2653 = vsel %vm782, %v845, %v2652
        %v2654 = vshrl.u32 %v2640, 16
        %v2656 = vor.u32 %v2654, %v2652
        %s2657 = scalar_lea.vmem [#allocation5], 768
        %v2658 = vld [vmem:[%s2657] sm:$0xf]
        %v2659 = vld [vmem:[%s2657 + $0x4] sm:$0xf]
        %v2660 = vld [vmem:[%s2657 + $0x8] sm:$0xf]
        %v2661 = vld [vmem:[%s2657 + $0xc] sm:$0xf]
        %v2662 = vld [vmem:[%s2657 + $0x10] sm:$0xf]
        %v2663 = vld [vmem:[%s2657 + $0x14] sm:$0xf]
        %v2664 = vld [vmem:[%s2657 + $0x18] sm:$0xf]
        %v2665 = vld [vmem:[%s2657 + $0x1c] sm:$0xf]
        %v2666 = vld [vmem:[%s2657 + $0x20] sm:$0xf]
        %v2667 = vld [vmem:[%s2657 + $0x24] sm:$0xf]
        %v2668 = vld [vmem:[%s2657 + $0x28] sm:$0xf]
        %v2669 = vld [vmem:[%s2657 + $0x2c] sm:$0xf]
        %v2670 = vld [vmem:[%s2657 + $0x30] sm:$0xf]
        %v2671 = vld [vmem:[%s2657 + $0x34] sm:$0xf]
        %v2672 = vld [vmem:[%s2657 + $0x38] sm:$0xf]
        %v2673 = vld [vmem:[%s2657 + $0x3c] sm:$0xf]
        %v2674 = vld [vmem:[%s2657 + $0x40] sm:$0xf]
        %v2675 = vld [vmem:[%s2657 + $0x44] sm:$0xf]
        %v2676 = vld [vmem:[%s2657 + $0x48] sm:$0xf]
        %v2677 = vld [vmem:[%s2657 + $0x4c] sm:$0xf]
        %v2678 = vld [vmem:[%s2657 + $0x50] sm:$0xf]
        %v2679 = vld [vmem:[%s2657 + $0x54] sm:$0xf]
        %v2680 = vld [vmem:[%s2657 + $0x58] sm:$0xf]
        %v2681 = vld [vmem:[%s2657 + $0x5c] sm:$0xf]
        %v2682 = vld [vmem:[%s2657 + $0x60] sm:$0xf]
        %v2683 = vld [vmem:[%s2657 + $0x64] sm:$0xf]
        %v2684 = vld [vmem:[%s2657 + $0x68] sm:$0xf]
        %v2685 = vld [vmem:[%s2657 + $0x6c] sm:$0xf]
        %v2686 = vld [vmem:[%s2657 + $0x70] sm:$0xf]
        %v2687 = vld [vmem:[%s2657 + $0x74] sm:$0xf]
        %v2688 = vld [vmem:[%s2657 + $0x78] sm:$0xf]
        %v2689 = vld [vmem:[%s2657 + $0x7c] sm:$0xf]
        %vm2692 = vcmask 1041408
        %v2693 = vrot.slane %v2639, 6
        %v2694 = vrot.slane %v774, 6
        %v2695 = vsel %vm2692, %v2693, %v2694
        %v2696 = vrot.slane %v2648, 6
        %v2697 = vrot.slane %v802, 6
        %v2698 = vsel %vm2692, %v2696, %v2697
        %v2699 = vrot.slane %v775, 6
        %v2700 = vsel %vm2692, %v2694, %v2699
        %v2701 = vrot.slane %v810, 6
        %v2702 = vsel %vm2692, %v2697, %v2701
        %v2703 = vrot.slane %v776, 6
        %v2704 = vsel %vm2692, %v2699, %v2703
        %v2705 = vrot.slane %v818, 6
        %v2706 = vsel %vm2692, %v2701, %v2705
        %v2707 = vrot.slane %v777, 6
        %v2708 = vsel %vm2692, %v2703, %v2707
        %v2709 = vrot.slane %v826, 6
        %v2710 = vsel %vm2692, %v2705, %v2709
        %v2711 = vrot.slane %v778, 6
        %v2712 = vsel %vm2692, %v2707, %v2711
        %v2713 = vrot.slane %v834, 6
        %v2714 = vsel %vm2692, %v2709, %v2713
        %v2715 = vrot.slane %v779, 6
        %v2716 = vsel %vm2692, %v2711, %v2715
        %v2717 = vrot.slane %v842, 6
        %v2718 = vsel %vm2692, %v2713, %v2717
        %v2719 = vrot.slane %v780, 6
        %v2720 = vsel %vm2692, %v2715, %v2719
        %v2721 = vrot.slane %v2653, 6
        %v2722 = vsel %vm2692, %v2717, %v2721
        %v2723 = vrot.slane %v2327, 6
        %v2724 = vsel %vm2692, %v2719, %v2723
        %v2725 = vrot.slane %v2656, 6
        %v2726 = vsel %vm2692, %v2721, %v2725
        %v2775 = vunpack.c.l.b16 %v2658
        %v2776 = vunpack.c.l.b16 %v2659
        %v2777 = vunpack.c.l.b16 %v2660
        %v2778 = vunpack.c.l.b16 %v2661
        %v2779 = vunpack.c.l.b16 %v2662
        %v2780 = vunpack.c.l.b16 %v2663
        %v2781 = vunpack.c.l.b16 %v2664
        %v2782 = vunpack.c.l.b16 %v2665
        %v2783 = vunpack.c.l.b16 %v2666
        %v2784 = vunpack.c.l.b16 %v2667
        %v2785 = vunpack.c.l.b16 %v2668
        %v2786 = vunpack.c.l.b16 %v2669
        %v2787 = vunpack.c.l.b16 %v2670
        %v2788 = vunpack.c.l.b16 %v2671
        %v2789 = vunpack.c.l.b16 %v2672
        %v2790 = vunpack.c.l.b16 %v2673
        %v2791 = vunpack.c.l.b16 %v2674
        %v2792 = vunpack.c.l.b16 %v2675
        %v2793 = vunpack.c.l.b16 %v2676
        %v2794 = vunpack.c.l.b16 %v2677
        %v2795 = vunpack.c.l.b16 %v2678
        %v2796 = vunpack.c.l.b16 %v2679
        %v2797 = vunpack.c.l.b16 %v2680
        %v2798 = vunpack.c.l.b16 %v2681
        %v2799 = vunpack.c.l.b16 %v2682
        %v2800 = vunpack.c.l.b16 %v2683
        %v2801 = vunpack.c.l.b16 %v2684
        %v2802 = vunpack.c.l.b16 %v2685
        %v2803 = vunpack.c.l.b16 %v2686
        %v2804 = vunpack.c.l.b16 %v2687
        %v2805 = vunpack.c.l.b16 %v2688
        %v2806 = vunpack.c.l.b16 %v2689
        %v2807 = vpack.c.b16 %v2776, %v2775
        %v2808 = vpack.c.b16 %v2778, %v2777
        %v2809 = vpack.c.b16 %v2780, %v2779
        %v2810 = vpack.c.b16 %v2782, %v2781
        %v2811 = vpack.c.b16 %v2784, %v2783
        %v2812 = vpack.c.b16 %v2786, %v2785
        %v2813 = vpack.c.b16 %v2788, %v2787
        %v2814 = vpack.c.b16 %v2790, %v2789
        %v2815 = vpack.c.b16 %v2792, %v2791
        %v2816 = vpack.c.b16 %v2794, %v2793
        %v2817 = vpack.c.b16 %v2796, %v2795
        %v2818 = vpack.c.b16 %v2798, %v2797
        %v2819 = vpack.c.b16 %v2800, %v2799
        %v2820 = vpack.c.b16 %v2802, %v2801
        %v2821 = vpack.c.b16 %v2804, %v2803
        %v2822 = vpack.c.b16 %v2806, %v2805
        %2839 = vmatprep.subr.bf16.mxu0 0
        %2840 = vmatpush1.bf16.msra.mxu0 %v2807
        %2841 = vmatprep.subr.bf16.mxu0 0
        %2842 = vmatpush1.bf16.msra.mxu0 %v2808
        %2843 = vmatprep.subr.bf16.mxu0 0
        %2844 = vmatpush1.bf16.msra.mxu0 %v2809
        %2845 = vmatprep.subr.bf16.mxu0 0
        %2846 = vmatpush1.bf16.msra.mxu0 %v2810
        %2847 = vmatprep.subr.bf16.mxu0 0
        %2848 = vmatpush1.bf16.msra.mxu0 %v2811
        %2849 = vmatprep.subr.bf16.mxu0 0
        %2850 = vmatpush1.bf16.msra.mxu0 %v2812
        %2851 = vmatprep.subr.bf16.mxu0 0
        %2852 = vmatpush1.bf16.msra.mxu0 %v2813
        %2853 = vmatprep.subr.bf16.mxu0 0
        %2854 = vmatpush1.bf16.msra.mxu0 %v2814
        %2855 = vmatprep.subr.bf16.mxu0 0
        %2856 = vmatpush1.bf16.msra.mxu0 %v2815
        %2857 = vmatprep.subr.bf16.mxu0 0
        %2858 = vmatpush1.bf16.msra.mxu0 %v2816
        %2859 = vmatprep.subr.bf16.mxu0 0
        %2860 = vmatpush1.bf16.msra.mxu0 %v2817
        %2861 = vmatprep.subr.bf16.mxu0 0
        %2862 = vmatpush1.bf16.msra.mxu0 %v2818
        %2863 = vmatprep.subr.bf16.mxu0 0
        %2864 = vmatpush1.bf16.msra.mxu0 %v2819
        %2865 = vmatprep.subr.bf16.mxu0 0
        %2866 = vmatpush1.bf16.msra.mxu0 %v2820
        %2867 = vmatprep.subr.bf16.mxu0 0
        %2868 = vmatpush1.bf16.msra.mxu0 %v2821
        %2869 = vmatprep.subr.bf16.mxu0 0
        %2870 = vmatpush1.bf16.msra.mxu0 %v2822
        %2871 = vmatprep.mubr.bf16.mxu0 %v2698
        %2872 = vmatmul.mubr.bf16.gmra.mrb[0].mxu0 %v2695
        %v2873 = vpop.f32.mrb[0].mxu0
        %v2874 = vadd.f32 0.0, %v2873
        %v2875 = vpop.f32.mrb[0].mxu0
        %v2876 = vpop.f32.mrb[0].mxu0
        %v2877 = vadd.f32 0.0, %v2876
        %v2878 = vpop.f32.mrb[0].mxu0
        %2879 = vmatprep.mubr.bf16.mxu0 %v2702
        %2880 = vmatmul.mubr.bf16.gmra.mrb[0].mxu0 %v2700
        %v2881 = vpop.f32.mrb[0].mxu0
        %v2882 = vadd.f32 0.0, %v2881
        %v2883 = vpop.f32.mrb[0].mxu0
        %v2884 = vpop.f32.mrb[0].mxu0
        %v2885 = vadd.f32 0.0, %v2884
        %v2886 = vpop.f32.mrb[0].mxu0
        %2887 = vmatprep.mubr.bf16.mxu0 %v2706
        %2888 = vmatmul.mubr.bf16.gmra.mrb[0].mxu0 %v2704
        %v2889 = vpop.f32.mrb[0].mxu0
        %v2890 = vadd.f32 0.0, %v2889
        %v2891 = vpop.f32.mrb[0].mxu0
        %v2892 = vpop.f32.mrb[0].mxu0
        %v2893 = vadd.f32 0.0, %v2892
        %v2894 = vpop.f32.mrb[0].mxu0
        %2895 = vmatprep.mubr.bf16.mxu0 %v2710
        %2896 = vmatmul.mubr.bf16.gmra.mrb[0].mxu0 %v2708
        %v2897 = vpop.f32.mrb[0].mxu0
        %v2898 = vadd.f32 0.0, %v2897
        %v2899 = vpop.f32.mrb[0].mxu0
        %v2900 = vpop.f32.mrb[0].mxu0
        %v2901 = vadd.f32 0.0, %v2900
        %v2902 = vpop.f32.mrb[0].mxu0
        %2903 = vmatprep.mubr.bf16.mxu0 %v2714
        %2904 = vmatmul.mubr.bf16.gmra.mrb[0].mxu0 %v2712
        %v2905 = vpop.f32.mrb[0].mxu0
        %v2906 = vadd.f32 0.0, %v2905
        %v2907 = vpop.f32.mrb[0].mxu0
        %v2908 = vpop.f32.mrb[0].mxu0
        %v2909 = vadd.f32 0.0, %v2908
        %v2910 = vpop.f32.mrb[0].mxu0
        %2911 = vmatprep.mubr.bf16.mxu0 %v2718
        %2912 = vmatmul.mubr.bf16.gmra.mrb[0].mxu0 %v2716
        %v2913 = vpop.f32.mrb[0].mxu0
        %v2914 = vadd.f32 0.0, %v2913
        %v2915 = vpop.f32.mrb[0].mxu0
        %v2916 = vpop.f32.mrb[0].mxu0
        %v2917 = vadd.f32 0.0, %v2916
        %v2918 = vpop.f32.mrb[0].mxu0
        %2919 = vmatprep.mubr.bf16.mxu0 %v2722
        %2920 = vmatmul.mubr.bf16.gmra.mrb[0].mxu0 %v2720
        %v2921 = vpop.f32.mrb[0].mxu0
        %v2922 = vadd.f32 0.0, %v2921
        %v2923 = vpop.f32.mrb[0].mxu0
        %v2924 = vpop.f32.mrb[0].mxu0
        %v2925 = vadd.f32 0.0, %v2924
        %v2926 = vpop.f32.mrb[0].mxu0
        %2927 = vmatprep.mubr.bf16.mxu0 %v2726
        %2928 = vmatmul.mubr.bf16.gmra.mrb[0].mxu0 %v2724
        %v2929 = vpop.f32.mrb[0].mxu0
        %v2930 = vadd.f32 0.0, %v2929
        %v2931 = vpop.f32.mrb[0].mxu0
        %v2932 = vpop.f32.mrb[0].mxu0
        %v2933 = vadd.f32 0.0, %v2932
        %v2934 = vpop.f32.mrb[0].mxu0
        %2935 = vdwg.mxu0
        %v2936 = vadd.f32 %v2623, %v2874
        %v2937 = vadd.f32 %v2624, %v2877
        %v2938 = vadd.f32 %v2625, %v2882
        %v2939 = vadd.f32 %v2626, %v2885
        %v2940 = vadd.f32 %v2627, %v2890
        %v2941 = vadd.f32 %v2628, %v2893
        %v2942 = vadd.f32 %v2629, %v2898
        %v2943 = vadd.f32 %v2630, %v2901
        %v2944 = vadd.f32 %v2631, %v2906
        %v2945 = vadd.f32 %v2632, %v2909
        %v2946 = vadd.f32 %v2633, %v2914
        %v2947 = vadd.f32 %v2634, %v2917
        %v2948 = vadd.f32 %v2635, %v2922
        %v2949 = vadd.f32 %v2636, %v2925
        %v2950 = vadd.f32 %v2637, %v2930
        %v2951 = vadd.f32 %v2638, %v2933
        %v2952 = vld [vmem:[#allocation2] sm:$0x80]
        %v2953 = vld [vmem:[#allocation2 + $0x40] sm:$0xff]
        %v2955 = vshrl.u32 %v2952, 16
        %v2957 = vsel %vm782, %v2955, %v793
        %v2959 = vshll.u32 %v2953, 16
        %v2961 = vrot.slane %v2959, 1
        %v2962 = vsel %vm782, %v845, %v2961
        %v2963 = vshrl.u32 %v2953, 16
        %v2965 = vor.u32 %v2963, %v2961
        %s2966 = scalar_lea.vmem [#allocation5], 896
        %v2967 = vld [vmem:[%s2966] sm:$0xf]
        %v2968 = vld [vmem:[%s2966 + $0x4] sm:$0xf]
        %v2969 = vld [vmem:[%s2966 + $0x8] sm:$0xf]
        %v2970 = vld [vmem:[%s2966 + $0xc] sm:$0xf]
        %v2971 = vld [vmem:[%s2966 + $0x10] sm:$0xf]
        %v2972 = vld [vmem:[%s2966 + $0x14] sm:$0xf]
        %v2973 = vld [vmem:[%s2966 + $0x18] sm:$0xf]
        %v2974 = vld [vmem:[%s2966 + $0x1c] sm:$0xf]
        %v2975 = vld [vmem:[%s2966 + $0x20] sm:$0xf]
        %v2976 = vld [vmem:[%s2966 + $0x24] sm:$0xf]
        %v2977 = vld [vmem:[%s2966 + $0x28] sm:$0xf]
        %v2978 = vld [vmem:[%s2966 + $0x2c] sm:$0xf]
        %v2979 = vld [vmem:[%s2966 + $0x30] sm:$0xf]
        %v2980 = vld [vmem:[%s2966 + $0x34] sm:$0xf]
        %v2981 = vld [vmem:[%s2966 + $0x38] sm:$0xf]
        %v2982 = vld [vmem:[%s2966 + $0x3c] sm:$0xf]
        %v2983 = vld [vmem:[%s2966 + $0x40] sm:$0xf]
        %v2984 = vld [vmem:[%s2966 + $0x44] sm:$0xf]
        %v2985 = vld [vmem:[%s2966 + $0x48] sm:$0xf]
        %v2986 = vld [vmem:[%s2966 + $0x4c] sm:$0xf]
        %v2987 = vld [vmem:[%s2966 + $0x50] sm:$0xf]
        %v2988 = vld [vmem:[%s2966 + $0x54] sm:$0xf]
        %v2989 = vld [vmem:[%s2966 + $0x58] sm:$0xf]
        %v2990 = vld [vmem:[%s2966 + $0x5c] sm:$0xf]
        %v2991 = vld [vmem:[%s2966 + $0x60] sm:$0xf]
        %v2992 = vld [vmem:[%s2966 + $0x64] sm:$0xf]
        %v2993 = vld [vmem:[%s2966 + $0x68] sm:$0xf]
        %v2994 = vld [vmem:[%s2966 + $0x6c] sm:$0xf]
        %v2995 = vld [vmem:[%s2966 + $0x70] sm:$0xf]
        %v2996 = vld [vmem:[%s2966 + $0x74] sm:$0xf]
        %v2997 = vld [vmem:[%s2966 + $0x78] sm:$0xf]
        %v2998 = vld [vmem:[%s2966 + $0x7c] sm:$0xf]
        %vm3001 = vcmask 1040384
        %v3002 = vrot.slane %v2952, 7
        %v3003 = vrot.slane %v774, 7
        %v3004 = vsel %vm3001, %v3002, %v3003
        %v3005 = vrot.slane %v2957, 7
        %v3006 = vrot.slane %v802, 7
        %v3007 = vsel %vm3001, %v3005, %v3006
        %v3008 = vrot.slane %v775, 7
        %v3009 = vsel %vm3001, %v3003, %v3008
        %v3010 = vrot.slane %v810, 7
        %v3011 = vsel %vm3001, %v3006, %v3010
        %v3012 = vrot.slane %v776, 7
        %v3013 = vsel %vm3001, %v3008, %v3012
        %v3014 = vrot.slane %v818, 7
        %v3015 = vsel %vm3001, %v3010, %v3014
        %v3016 = vrot.slane %v777, 7
        %v3017 = vsel %vm3001, %v3012, %v3016
        %v3018 = vrot.slane %v826, 7
        %v3019 = vsel %vm3001, %v3014, %v3018
        %v3020 = vrot.slane %v778, 7
        %v3021 = vsel %vm3001, %v3016, %v3020
        %v3022 = vrot.slane %v834, 7
        %v3023 = vsel %vm3001, %v3018, %v3022
        %v3024 = vrot.slane %v779, 7
        %v3025 = vsel %vm3001, %v3020, %v3024
        %v3026 = vrot.slane %v842, 7
        %v3027 = vsel %vm3001, %v3022, %v3026
        %v3028 = vrot.slane %v780, 7
        %v3029 = vsel %vm3001, %v3024, %v3028
        %v3030 = vrot.slane %v2962, 7
        %v3031 = vsel %vm3001, %v3026, %v3030
        %v3032 = vrot.slane %v2640, 7
        %v3033 = vsel %vm3001, %v3028, %v3032
        %v3034 = vrot.slane %v2965, 7
        %v3035 = vsel %vm3001, %v3030, %v3034
        %v3084 = vunpack.c.l.b16 %v2967
        %v3085 = vunpack.c.l.b16 %v2968
        %v3086 = vunpack.c.l.b16 %v2969
        %v3087 = vunpack.c.l.b16 %v2970
        %v3088 = vunpack.c.l.b16 %v2971
        %v3089 = vunpack.c.l.b16 %v2972
        %v3090 = vunpack.c.l.b16 %v2973
        %v3091 = vunpack.c.l.b16 %v2974
        %v3092 = vunpack.c.l.b16 %v2975
        %v3093 = vunpack.c.l.b16 %v2976
        %v3094 = vunpack.c.l.b16 %v2977
        %v3095 = vunpack.c.l.b16 %v2978
        %v3096 = vunpack.c.l.b16 %v2979
        %v3097 = vunpack.c.l.b16 %v2980
        %v3098 = vunpack.c.l.b16 %v2981
        %v3099 = vunpack.c.l.b16 %v2982
        %v3100 = vunpack.c.l.b16 %v2983
        %v3101 = vunpack.c.l.b16 %v2984
        %v3102 = vunpack.c.l.b16 %v2985
        %v3103 = vunpack.c.l.b16 %v2986
        %v3104 = vunpack.c.l.b16 %v2987
        %v3105 = vunpack.c.l.b16 %v2988
        %v3106 = vunpack.c.l.b16 %v2989
        %v3107 = vunpack.c.l.b16 %v2990
        %v3108 = vunpack.c.l.b16 %v2991
        %v3109 = vunpack.c.l.b16 %v2992
        %v3110 = vunpack.c.l.b16 %v2993
        %v3111 = vunpack.c.l.b16 %v2994
        %v3112 = vunpack.c.l.b16 %v2995
        %v3113 = vunpack.c.l.b16 %v2996
        %v3114 = vunpack.c.l.b16 %v2997
        %v3115 = vunpack.c.l.b16 %v2998
        %v3116 = vpack.c.b16 %v3085, %v3084
        %v3117 = vpack.c.b16 %v3087, %v3086
        %v3118 = vpack.c.b16 %v3089, %v3088
        %v3119 = vpack.c.b16 %v3091, %v3090
        %v3120 = vpack.c.b16 %v3093, %v3092
        %v3121 = vpack.c.b16 %v3095, %v3094
        %v3122 = vpack.c.b16 %v3097, %v3096
        %v3123 = vpack.c.b16 %v3099, %v3098
        %v3124 = vpack.c.b16 %v3101, %v3100
        %v3125 = vpack.c.b16 %v3103, %v3102
        %v3126 = vpack.c.b16 %v3105, %v3104
        %v3127 = vpack.c.b16 %v3107, %v3106
        %v3128 = vpack.c.b16 %v3109, %v3108
        %v3129 = vpack.c.b16 %v3111, %v3110
        %v3130 = vpack.c.b16 %v3113, %v3112
        %v3131 = vpack.c.b16 %v3115, %v3114
        %3148 = vmatprep.subr.bf16.mxu0 0
        %3149 = vmatpush1.bf16.msra.mxu0 %v3116
        %3150 = vmatprep.subr.bf16.mxu0 0
        %3151 = vmatpush1.bf16.msra.mxu0 %v3117
        %3152 = vmatprep.subr.bf16.mxu0 0
        %3153 = vmatpush1.bf16.msra.mxu0 %v3118
        %3154 = vmatprep.subr.bf16.mxu0 0
        %3155 = vmatpush1.bf16.msra.mxu0 %v3119
        %3156 = vmatprep.subr.bf16.mxu0 0
        %3157 = vmatpush1.bf16.msra.mxu0 %v3120
        %3158 = vmatprep.subr.bf16.mxu0 0
        %3159 = vmatpush1.bf16.msra.mxu0 %v3121
        %3160 = vmatprep.subr.bf16.mxu0 0
        %3161 = vmatpush1.bf16.msra.mxu0 %v3122
        %3162 = vmatprep.subr.bf16.mxu0 0
        %3163 = vmatpush1.bf16.msra.mxu0 %v3123
        %3164 = vmatprep.subr.bf16.mxu0 0
        %3165 = vmatpush1.bf16.msra.mxu0 %v3124
        %3166 = vmatprep.subr.bf16.mxu0 0
        %3167 = vmatpush1.bf16.msra.mxu0 %v3125
        %3168 = vmatprep.subr.bf16.mxu0 0
        %3169 = vmatpush1.bf16.msra.mxu0 %v3126
        %3170 = vmatprep.subr.bf16.mxu0 0
        %3171 = vmatpush1.bf16.msra.mxu0 %v3127
        %3172 = vmatprep.subr.bf16.mxu0 0
        %3173 = vmatpush1.bf16.msra.mxu0 %v3128
        %3174 = vmatprep.subr.bf16.mxu0 0
        %3175 = vmatpush1.bf16.msra.mxu0 %v3129
        %3176 = vmatprep.subr.bf16.mxu0 0
        %3177 = vmatpush1.bf16.msra.mxu0 %v3130
        %3178 = vmatprep.subr.bf16.mxu0 0
        %3179 = vmatpush1.bf16.msra.mxu0 %v3131
        %3180 = vmatprep.mubr.bf16.mxu0 %v3007
        %3181 = vmatmul.mubr.bf16.gmra.mrb[0].mxu0 %v3004
        %v3182 = vpop.f32.mrb[0].mxu0
        %v3183 = vadd.f32 0.0, %v3182
        %v3184 = vpop.f32.mrb[0].mxu0
        %v3185 = vpop.f32.mrb[0].mxu0
        %v3186 = vadd.f32 0.0, %v3185
        %v3187 = vpop.f32.mrb[0].mxu0
        %3188 = vmatprep.mubr.bf16.mxu0 %v3011
        %3189 = vmatmul.mubr.bf16.gmra.mrb[0].mxu0 %v3009
        %v3190 = vpop.f32.mrb[0].mxu0
        %v3191 = vadd.f32 0.0, %v3190
        %v3192 = vpop.f32.mrb[0].mxu0
        %v3193 = vpop.f32.mrb[0].mxu0
        %v3194 = vadd.f32 0.0, %v3193
        %v3195 = vpop.f32.mrb[0].mxu0
        %3196 = vmatprep.mubr.bf16.mxu0 %v3015
        %3197 = vmatmul.mubr.bf16.gmra.mrb[0].mxu0 %v3013
        %v3198 = vpop.f32.mrb[0].mxu0
        %v3199 = vadd.f32 0.0, %v3198
        %v3200 = vpop.f32.mrb[0].mxu0
        %v3201 = vpop.f32.mrb[0].mxu0
        %v3202 = vadd.f32 0.0, %v3201
        %v3203 = vpop.f32.mrb[0].mxu0
        %3204 = vmatprep.mubr.bf16.mxu0 %v3019
        %3205 = vmatmul.mubr.bf16.gmra.mrb[0].mxu0 %v3017
        %v3206 = vpop.f32.mrb[0].mxu0
        %v3207 = vadd.f32 0.0, %v3206
        %v3208 = vpop.f32.mrb[0].mxu0
        %v3209 = vpop.f32.mrb[0].mxu0
        %v3210 = vadd.f32 0.0, %v3209
        %v3211 = vpop.f32.mrb[0].mxu0
        %3212 = vmatprep.mubr.bf16.mxu0 %v3023
        %3213 = vmatmul.mubr.bf16.gmra.mrb[0].mxu0 %v3021
        %v3214 = vpop.f32.mrb[0].mxu0
        %v3215 = vadd.f32 0.0, %v3214
        %v3216 = vpop.f32.mrb[0].mxu0
        %v3217 = vpop.f32.mrb[0].mxu0
        %v3218 = vadd.f32 0.0, %v3217
        %v3219 = vpop.f32.mrb[0].mxu0
        %3220 = vmatprep.mubr.bf16.mxu0 %v3027
        %3221 = vmatmul.mubr.bf16.gmra.mrb[0].mxu0 %v3025
        %v3222 = vpop.f32.mrb[0].mxu0
        %v3223 = vadd.f32 0.0, %v3222
        %v3224 = vpop.f32.mrb[0].mxu0
        %v3225 = vpop.f32.mrb[0].mxu0
        %v3226 = vadd.f32 0.0, %v3225
        %v3227 = vpop.f32.mrb[0].mxu0
        %3228 = vmatprep.mubr.bf16.mxu0 %v3031
        %3229 = vmatmul.mubr.bf16.gmra.mrb[0].mxu0 %v3029
        %v3230 = vpop.f32.mrb[0].mxu0
        %v3231 = vadd.f32 0.0, %v3230
        %v3232 = vpop.f32.mrb[0].mxu0
        %v3233 = vpop.f32.mrb[0].mxu0
        %v3234 = vadd.f32 0.0, %v3233
        %v3235 = vpop.f32.mrb[0].mxu0
        %3236 = vmatprep.mubr.bf16.mxu0 %v3035
        %3237 = vmatmul.mubr.bf16.gmra.mrb[0].mxu0 %v3033
        %v3238 = vpop.f32.mrb[0].mxu0
        %v3239 = vadd.f32 0.0, %v3238
        %v3240 = vpop.f32.mrb[0].mxu0
        %v3241 = vpop.f32.mrb[0].mxu0
        %v3242 = vadd.f32 0.0, %v3241
        %v3243 = vpop.f32.mrb[0].mxu0
        %3244 = vdwg.mxu0
        %v3245 = vadd.f32 %v2936, %v3183
        %v3246 = vadd.f32 %v2937, %v3186
        %v3247 = vadd.f32 %v2938, %v3191
        %v3248 = vadd.f32 %v2939, %v3194
        %v3249 = vadd.f32 %v2940, %v3199
        %v3250 = vadd.f32 %v2941, %v3202
        %v3251 = vadd.f32 %v2942, %v3207
        %v3252 = vadd.f32 %v2943, %v3210
        %v3253 = vadd.f32 %v2944, %v3215
        %v3254 = vadd.f32 %v2945, %v3218
        %v3255 = vadd.f32 %v2946, %v3223
        %v3256 = vadd.f32 %v2947, %v3226
        %v3257 = vadd.f32 %v2948, %v3231
        %v3258 = vadd.f32 %v2949, %v3234
        %v3259 = vadd.f32 %v2950, %v3239
        %v3260 = vadd.f32 %v2951, %v3242
        %v3261 = vld [vmem:[%s5] sm:$0x1]
        %v3263 = vlaneseq
        %v3264 = vshrl.u32 %v3263, 7
        %v3265 = vsub.s32 0, %v3264
        %v3266 = vrot.slane %v3261, %v3265
        %v3268 = vadd.f32 %v3245, %v3266
        %v3269 = vadd.f32 %v3246, %v3266
        %v3270 = vadd.f32 %v3247, %v3266
        %v3271 = vadd.f32 %v3248, %v3266
        %v3272 = vadd.f32 %v3249, %v3266
        %v3273 = vadd.f32 %v3250, %v3266
        %v3274 = vadd.f32 %v3251, %v3266
        %v3275 = vadd.f32 %v3252, %v3266
        %v3276 = vadd.f32 %v3253, %v3266
        %v3277 = vadd.f32 %v3254, %v3266
        %v3278 = vadd.f32 %v3255, %v3266
        %v3279 = vadd.f32 %v3256, %v3266
        %v3280 = vadd.f32 %v3257, %v3266
        %v3281 = vadd.f32 %v3258, %v3266
        %v3282 = vadd.f32 %v3259, %v3266
        %v3283 = vadd.f32 %v3260, %v3266
        %v3284 = vmax.f32 %v3268, 0.0
        %v3285 = vmax.f32 %v3269, 0.0
        %v3286 = vmax.f32 %v3270, 0.0
        %v3287 = vmax.f32 %v3271, 0.0
        %v3288 = vmax.f32 %v3272, 0.0
        %v3289 = vmax.f32 %v3273, 0.0
        %v3290 = vmax.f32 %v3274, 0.0
        %v3291 = vmax.f32 %v3275, 0.0
        %v3292 = vmax.f32 %v3276, 0.0
        %v3293 = vmax.f32 %v3277, 0.0
        %v3294 = vmax.f32 %v3278, 0.0
        %v3295 = vmax.f32 %v3279, 0.0
        %v3296 = vmax.f32 %v3280, 0.0
        %v3297 = vmax.f32 %v3281, 0.0
        %v3298 = vmax.f32 %v3282, 0.0
        %v3299 = vmax.f32 %v3283, 0.0
        %v3300 = vld [vmem:[%s1] sm:$0xff]
        %v3301 = vld [vmem:[%s1 + $0x8] sm:$0xff]
        %v3302 = vld [vmem:[%s1 + $0x10] sm:$0xff]
        %v3303 = vld [vmem:[%s1 + $0x18] sm:$0xff]
        %v3304 = vld [vmem:[%s1 + $0x20] sm:$0xff]
        %v3305 = vld [vmem:[%s1 + $0x28] sm:$0xff]
        %v3306 = vld [vmem:[%s1 + $0x30] sm:$0xff]
        %v3307 = vld [vmem:[%s1 + $0x38] sm:$0xff]
        %v3308 = vld [vmem:[%s1 + $0x40] sm:$0xff]
        %v3309 = vld [vmem:[%s1 + $0x48] sm:$0xff]
        %v3310 = vld [vmem:[%s1 + $0x50] sm:$0xff]
        %v3311 = vld [vmem:[%s1 + $0x58] sm:$0xff]
        %v3312 = vld [vmem:[%s1 + $0x60] sm:$0xff]
        %v3313 = vld [vmem:[%s1 + $0x68] sm:$0xff]
        %v3314 = vld [vmem:[%s1 + $0x70] sm:$0xff]
        %v3315 = vld [vmem:[%s1 + $0x78] sm:$0xff]
        %3317 = vset.pattern.permute.xlu0 0
        %3318 = vperm.xlu0 %3317, %v3300
        %v3319 = vpop.permute.xlu0 %3318
        %3322 = vset.pattern.permute.xlu0 0
        %3323 = vperm.xlu0 %3322, %v3301
        %v3324 = vpop.permute.xlu0 %3323
        %3327 = vset.pattern.permute.xlu0 0
        %3328 = vperm.xlu0 %3327, %v3302
        %v3329 = vpop.permute.xlu0 %3328
        %3332 = vset.pattern.permute.xlu0 0
        %3333 = vperm.xlu0 %3332, %v3303
        %v3334 = vpop.permute.xlu0 %3333
        %3337 = vset.pattern.permute.xlu0 0
        %3338 = vperm.xlu0 %3337, %v3304
        %v3339 = vpop.permute.xlu0 %3338
        %3342 = vset.pattern.permute.xlu0 0
        %3343 = vperm.xlu0 %3342, %v3305
        %v3344 = vpop.permute.xlu0 %3343
        %3347 = vset.pattern.permute.xlu0 0
        %3348 = vperm.xlu0 %3347, %v3306
        %v3349 = vpop.permute.xlu0 %3348
        %3352 = vset.pattern.permute.xlu0 0
        %3353 = vperm.xlu0 %3352, %v3307
        %v3354 = vpop.permute.xlu0 %3353
        %3357 = vset.pattern.permute.xlu0 0
        %3358 = vperm.xlu0 %3357, %v3308
        %v3359 = vpop.permute.xlu0 %3358
        %3362 = vset.pattern.permute.xlu0 0
        %3363 = vperm.xlu0 %3362, %v3309
        %v3364 = vpop.permute.xlu0 %3363
        %3367 = vset.pattern.permute.xlu0 0
        %3368 = vperm.xlu0 %3367, %v3310
        %v3369 = vpop.permute.xlu0 %3368
        %3372 = vset.pattern.permute.xlu0 0
        %3373 = vperm.xlu0 %3372, %v3311
        %v3374 = vpop.permute.xlu0 %3373
        %3377 = vset.pattern.permute.xlu0 0
        %3378 = vperm.xlu0 %3377, %v3312
        %v3379 = vpop.permute.xlu0 %3378
        %3382 = vset.pattern.permute.xlu0 0
        %3383 = vperm.xlu0 %3382, %v3313
        %v3384 = vpop.permute.xlu0 %3383
        %3387 = vset.pattern.permute.xlu0 0
        %3388 = vperm.xlu0 %3387, %v3314
        %v3389 = vpop.permute.xlu0 %3388
        %3392 = vset.pattern.permute.xlu0 0
        %3393 = vperm.xlu0 %3392, %v3315
        %v3394 = vpop.permute.xlu0 %3393
        %v3396 = vmul.f32 %v3284, %v3319
        %v3397 = vmul.f32 %v3285, %v3324
        %v3398 = vmul.f32 %v3286, %v3329
        %v3399 = vmul.f32 %v3287, %v3334
        %v3400 = vmul.f32 %v3288, %v3339
        %v3401 = vmul.f32 %v3289, %v3344
        %v3402 = vmul.f32 %v3290, %v3349
        %v3403 = vmul.f32 %v3291, %v3354
        %v3404 = vmul.f32 %v3292, %v3359
        %v3405 = vmul.f32 %v3293, %v3364
        %v3406 = vmul.f32 %v3294, %v3369
        %v3407 = vmul.f32 %v3295, %v3374
        %v3408 = vmul.f32 %v3296, %v3379
        %v3409 = vmul.f32 %v3297, %v3384
        %v3410 = vmul.f32 %v3298, %v3389
        %v3411 = vmul.f32 %v3299, %v3394
        %v3412 = vpack.c.bf16 %v3397, %v3396
        %v3413 = vpack.c.bf16 %v3399, %v3398
        %v3414 = vpack.c.bf16 %v3401, %v3400
        %v3415 = vpack.c.bf16 %v3403, %v3402
        %v3416 = vpack.c.bf16 %v3405, %v3404
        %v3417 = vpack.c.bf16 %v3407, %v3406
        %v3418 = vpack.c.bf16 %v3409, %v3408
        %v3419 = vpack.c.bf16 %v3411, %v3410
        %v3428 = vrot.slane %v3412, 4
        %v3429 = vrot.slane %v3413, 4
        %v3430 = vsel %vm731, %v3428, %v3429
        %v3431 = vrot.slane %v3414, 4
        %v3432 = vsel %vm731, %v3429, %v3431
        %v3433 = vrot.slane %v3415, 4
        %v3434 = vsel %vm731, %v3431, %v3433
        %v3435 = vrot.slane %v3416, 4
        %v3436 = vsel %vm731, %v3433, %v3435
        %v3437 = vrot.slane %v3417, 4
        %v3438 = vsel %vm731, %v3435, %v3437
        %v3439 = vrot.slane %v3418, 4
        %v3440 = vsel %vm731, %v3437, %v3439
        %v3441 = vrot.slane %v3419, 4
        %v3442 = vsel %vm731, %v3439, %v3441
        %3452 = vst [vmem:[#allocation3] sm:$0xf0] %v3428
        %3453 = vst [vmem:[#allocation3 + $0x8] sm:$0xff] %v3430
        %3454 = vst [vmem:[#allocation3 + $0x10] sm:$0xff] %v3432
        %3455 = vst [vmem:[#allocation3 + $0x18] sm:$0xff] %v3434
        %3456 = vst [vmem:[#allocation3 + $0x20] sm:$0xff] %v3436
        %3457 = vst [vmem:[#allocation3 + $0x28] sm:$0xff] %v3438
        %3458 = vst [vmem:[#allocation3 + $0x30] sm:$0xff] %v3440
        %3459 = vst [vmem:[#allocation3 + $0x38] sm:$0xff] %v3442
        %3460 = vst [vmem:[#allocation3 + $0x40] sm:$0xf] %v3441
        %v3461 = vld [vmem:[#allocation3] sm:$0xff]
        %v3462 = vld [vmem:[#allocation3 + $0x8] sm:$0xff]
        %v3463 = vld [vmem:[#allocation3 + $0x10] sm:$0xff]
        %v3464 = vld [vmem:[#allocation3 + $0x18] sm:$0xff]
        %v3465 = vld [vmem:[#allocation3 + $0x20] sm:$0xff]
        %v3466 = vld [vmem:[#allocation3 + $0x28] sm:$0xff]
        %v3467 = vld [vmem:[#allocation3 + $0x30] sm:$0xff]
        %v3468 = vld [vmem:[#allocation3 + $0x38] sm:$0xff]
        %v3469 = vld [vmem:[#allocation3] sm:$0xff]
        %v3470 = vld [vmem:[#allocation3 + $0x8] sm:$0xff]
        %v3471 = vld [vmem:[#allocation3 + $0x10] sm:$0xff]
        %v3472 = vld [vmem:[#allocation3 + $0x18] sm:$0xff]
        %v3473 = vld [vmem:[#allocation3 + $0x20] sm:$0xff]
        %v3474 = vld [vmem:[#allocation3 + $0x28] sm:$0xff]
        %v3475 = vld [vmem:[#allocation3 + $0x30] sm:$0xff]
        %v3476 = vld [vmem:[#allocation3 + $0x38] sm:$0xff]
        %v3477 = vld [vmem:[#allocation3 + $0x40] sm:$0x1]
        %v3479 = vshrl.u32 %v3469, 16
        %v3481 = vshll.u32 %v3469, 16
        %v3483 = vrot.slane %v3481, 1
        %v3484 = vor.u32 %v3479, %v3483
        %v3486 = vshll.u32 %v3470, 16
        %v3488 = vrot.slane %v3486, 1
        %v3489 = vsel %vm782, %v3484, %v3488
        %v3490 = vshrl.u32 %v3470, 16
        %v3492 = vor.u32 %v3490, %v3488
        %v3494 = vshll.u32 %v3471, 16
        %v3496 = vrot.slane %v3494, 1
        %v3497 = vsel %vm782, %v3492, %v3496
        %v3498 = vshrl.u32 %v3471, 16
        %v3500 = vor.u32 %v3498, %v3496
        %v3502 = vshll.u32 %v3472, 16
        %v3504 = vrot.slane %v3502, 1
        %v3505 = vsel %vm782, %v3500, %v3504
        %v3506 = vshrl.u32 %v3472, 16
        %v3508 = vor.u32 %v3506, %v3504
        %v3510 = vshll.u32 %v3473, 16
        %v3512 = vrot.slane %v3510, 1
        %v3513 = vsel %vm782, %v3508, %v3512
        %v3514 = vshrl.u32 %v3473, 16
        %v3516 = vor.u32 %v3514, %v3512
        %v3518 = vshll.u32 %v3474, 16
        %v3520 = vrot.slane %v3518, 1
        %v3521 = vsel %vm782, %v3516, %v3520
        %v3522 = vshrl.u32 %v3474, 16
        %v3524 = vor.u32 %v3522, %v3520
        %v3526 = vshll.u32 %v3475, 16
        %v3528 = vrot.slane %v3526, 1
        %v3529 = vsel %vm782, %v3524, %v3528
        %v3530 = vshrl.u32 %v3475, 16
        %v3532 = vor.u32 %v3530, %v3528
        %v3534 = vshll.u32 %v3476, 16
        %v3536 = vrot.slane %v3534, 1
        %v3537 = vsel %vm782, %v3532, %v3536
        %v3538 = vshrl.u32 %v3476, 16
        %v3540 = vor.u32 %v3538, %v3536
        %v3542 = vshll.u32 %v3477, 16
        %v3544 = vrot.slane %v3542, 1
        %v3545 = vsel %vm782, %v3540, %v3544
        %v3554 = vld [vmem:[#allocation8] sm:$0xf]
        %v3555 = vld [vmem:[#allocation8 + $0x4] sm:$0xf]
        %v3556 = vld [vmem:[#allocation8 + $0x8] sm:$0xf]
        %v3557 = vld [vmem:[#allocation8 + $0xc] sm:$0xf]
        %v3558 = vld [vmem:[#allocation8 + $0x10] sm:$0xf]
        %v3559 = vld [vmem:[#allocation8 + $0x14] sm:$0xf]
        %v3560 = vld [vmem:[#allocation8 + $0x18] sm:$0xf]
        %v3561 = vld [vmem:[#allocation8 + $0x1c] sm:$0xf]
        %v3562 = vld [vmem:[#allocation8 + $0x20] sm:$0xf]
        %v3563 = vld [vmem:[#allocation8 + $0x24] sm:$0xf]
        %v3564 = vld [vmem:[#allocation8 + $0x28] sm:$0xf]
        %v3565 = vld [vmem:[#allocation8 + $0x2c] sm:$0xf]
        %v3566 = vld [vmem:[#allocation8 + $0x30] sm:$0xf]
        %v3567 = vld [vmem:[#allocation8 + $0x34] sm:$0xf]
        %v3568 = vld [vmem:[#allocation8 + $0x38] sm:$0xf]
        %v3569 = vld [vmem:[#allocation8 + $0x3c] sm:$0xf]
        %v3570 = vld [vmem:[#allocation8 + $0x40] sm:$0xf]
        %v3571 = vld [vmem:[#allocation8 + $0x44] sm:$0xf]
        %v3572 = vld [vmem:[#allocation8 + $0x48] sm:$0xf]
        %v3573 = vld [vmem:[#allocation8 + $0x4c] sm:$0xf]
        %v3574 = vld [vmem:[#allocation8 + $0x50] sm:$0xf]
        %v3575 = vld [vmem:[#allocation8 + $0x54] sm:$0xf]
        %v3576 = vld [vmem:[#allocation8 + $0x58] sm:$0xf]
        %v3577 = vld [vmem:[#allocation8 + $0x5c] sm:$0xf]
        %v3578 = vld [vmem:[#allocation8 + $0x60] sm:$0xf]
        %v3579 = vld [vmem:[#allocation8 + $0x64] sm:$0xf]
        %v3580 = vld [vmem:[#allocation8 + $0x68] sm:$0xf]
        %v3581 = vld [vmem:[#allocation8 + $0x6c] sm:$0xf]
        %v3582 = vld [vmem:[#allocation8 + $0x70] sm:$0xf]
        %v3583 = vld [vmem:[#allocation8 + $0x74] sm:$0xf]
        %v3584 = vld [vmem:[#allocation8 + $0x78] sm:$0xf]
        %v3585 = vld [vmem:[#allocation8 + $0x7c] sm:$0xf]
        %v3586 = vld [vmem:[#allocation3] sm:$0xfe]
        %v3587 = vld [vmem:[#allocation3 + $0x40] sm:$0x3]
        %v3589 = vshrl.u32 %v3586, 16
        %v3591 = vshll.u32 %v3586, 16
        %v3593 = vrot.slane %v3591, 1
        %v3594 = vor.u32 %v3589, %v3593
        %v3595 = vsel %vm782, %v3594, %v3488
        %v3597 = vshll.u32 %v3587, 16
        %v3599 = vrot.slane %v3597, 1
        %v3600 = vsel %vm782, %v3540, %v3599
        %v3601 = vshrl.u32 %v3587, 16
        %v3603 = vor.u32 %v3601, %v3599
        %s3604 = scalar_lea.vmem [#allocation8], 128
        %v3605 = vld [vmem:[%s3604] sm:$0xf]
        %v3606 = vld [vmem:[%s3604 + $0x4] sm:$0xf]
        %v3607 = vld [vmem:[%s3604 + $0x8] sm:$0xf]
        %v3608 = vld [vmem:[%s3604 + $0xc] sm:$0xf]
        %v3609 = vld [vmem:[%s3604 + $0x10] sm:$0xf]
        %v3610 = vld [vmem:[%s3604 + $0x14] sm:$0xf]
        %v3611 = vld [vmem:[%s3604 + $0x18] sm:$0xf]
        %v3612 = vld [vmem:[%s3604 + $0x1c] sm:$0xf]
        %v3613 = vld [vmem:[%s3604 + $0x20] sm:$0xf]
        %v3614 = vld [vmem:[%s3604 + $0x24] sm:$0xf]
        %v3615 = vld [vmem:[%s3604 + $0x28] sm:$0xf]
        %v3616 = vld [vmem:[%s3604 + $0x2c] sm:$0xf]
        %v3617 = vld [vmem:[%s3604 + $0x30] sm:$0xf]
        %v3618 = vld [vmem:[%s3604 + $0x34] sm:$0xf]
        %v3619 = vld [vmem:[%s3604 + $0x38] sm:$0xf]
        %v3620 = vld [vmem:[%s3604 + $0x3c] sm:$0xf]
        %v3621 = vld [vmem:[%s3604 + $0x40] sm:$0xf]
        %v3622 = vld [vmem:[%s3604 + $0x44] sm:$0xf]
        %v3623 = vld [vmem:[%s3604 + $0x48] sm:$0xf]
        %v3624 = vld [vmem:[%s3604 + $0x4c] sm:$0xf]
        %v3625 = vld [vmem:[%s3604 + $0x50] sm:$0xf]
        %v3626 = vld [vmem:[%s3604 + $0x54] sm:$0xf]
        %v3627 = vld [vmem:[%s3604 + $0x58] sm:$0xf]
        %v3628 = vld [vmem:[%s3604 + $0x5c] sm:$0xf]
        %v3629 = vld [vmem:[%s3604 + $0x60] sm:$0xf]
        %v3630 = vld [vmem:[%s3604 + $0x64] sm:$0xf]
        %v3631 = vld [vmem:[%s3604 + $0x68] sm:$0xf]
        %v3632 = vld [vmem:[%s3604 + $0x6c] sm:$0xf]
        %v3633 = vld [vmem:[%s3604 + $0x70] sm:$0xf]
        %v3634 = vld [vmem:[%s3604 + $0x74] sm:$0xf]
        %v3635 = vld [vmem:[%s3604 + $0x78] sm:$0xf]
        %v3636 = vld [vmem:[%s3604 + $0x7c] sm:$0xf]
        %v3646 = vrot.slane %v3586, 1
        %v3647 = vrot.slane %v3470, 1
        %v3648 = vsel %vm951, %v3646, %v3647
        %v3649 = vrot.slane %v3595, 1
        %v3650 = vrot.slane %v3497, 1
        %v3651 = vsel %vm951, %v3649, %v3650
        %v3652 = vrot.slane %v3471, 1
        %v3653 = vsel %vm951, %v3647, %v3652
        %v3654 = vrot.slane %v3505, 1
        %v3655 = vsel %vm951, %v3650, %v3654
        %v3656 = vrot.slane %v3472, 1
        %v3657 = vsel %vm951, %v3652, %v3656
        %v3658 = vrot.slane %v3513, 1
        %v3659 = vsel %vm951, %v3654, %v3658
        %v3660 = vrot.slane %v3473, 1
        %v3661 = vsel %vm951, %v3656, %v3660
        %v3662 = vrot.slane %v3521, 1
        %v3663 = vsel %vm951, %v3658, %v3662
        %v3664 = vrot.slane %v3474, 1
        %v3665 = vsel %vm951, %v3660, %v3664
        %v3666 = vrot.slane %v3529, 1
        %v3667 = vsel %vm951, %v3662, %v3666
        %v3668 = vrot.slane %v3475, 1
        %v3669 = vsel %vm951, %v3664, %v3668
        %v3670 = vrot.slane %v3537, 1
        %v3671 = vsel %vm951, %v3666, %v3670
        %v3672 = vrot.slane %v3476, 1
        %v3673 = vsel %vm951, %v3668, %v3672
        %v3674 = vrot.slane %v3600, 1
        %v3675 = vsel %vm951, %v3670, %v3674
        %v3676 = vrot.slane %v3477, 1
        %v3677 = vsel %vm951, %v3672, %v3676
        %v3678 = vrot.slane %v3603, 1
        %v3679 = vsel %vm951, %v3674, %v3678
        %v3728 = vunpack.c.l.b16 %v3605
        %v3729 = vunpack.c.l.b16 %v3606
        %v3730 = vunpack.c.l.b16 %v3607
        %v3731 = vunpack.c.l.b16 %v3608
        %v3732 = vunpack.c.l.b16 %v3609
        %v3733 = vunpack.c.l.b16 %v3610
        %v3734 = vunpack.c.l.b16 %v3611
        %v3735 = vunpack.c.l.b16 %v3612
        %v3736 = vunpack.c.l.b16 %v3613
        %v3737 = vunpack.c.l.b16 %v3614
        %v3738 = vunpack.c.l.b16 %v3615
        %v3739 = vunpack.c.l.b16 %v3616
        %v3740 = vunpack.c.l.b16 %v3617
        %v3741 = vunpack.c.l.b16 %v3618
        %v3742 = vunpack.c.l.b16 %v3619
        %v3743 = vunpack.c.l.b16 %v3620
        %v3744 = vunpack.c.l.b16 %v3621
        %v3745 = vunpack.c.l.b16 %v3622
        %v3746 = vunpack.c.l.b16 %v3623
        %v3747 = vunpack.c.l.b16 %v3624
        %v3748 = vunpack.c.l.b16 %v3625
        %v3749 = vunpack.c.l.b16 %v3626
        %v3750 = vunpack.c.l.b16 %v3627
        %v3751 = vunpack.c.l.b16 %v3628
        %v3752 = vunpack.c.l.b16 %v3629
        %v3753 = vunpack.c.l.b16 %v3630
        %v3754 = vunpack.c.l.b16 %v3631
        %v3755 = vunpack.c.l.b16 %v3632
        %v3756 = vunpack.c.l.b16 %v3633
        %v3757 = vunpack.c.l.b16 %v3634
        %v3758 = vunpack.c.l.b16 %v3635
        %v3759 = vunpack.c.l.b16 %v3636
        %v3760 = vpack.c.b16 %v3729, %v3728
        %v3761 = vpack.c.b16 %v3731, %v3730
        %v3762 = vpack.c.b16 %v3733, %v3732
        %v3763 = vpack.c.b16 %v3735, %v3734
        %v3764 = vpack.c.b16 %v3737, %v3736
        %v3765 = vpack.c.b16 %v3739, %v3738
        %v3766 = vpack.c.b16 %v3741, %v3740
        %v3767 = vpack.c.b16 %v3743, %v3742
        %v3768 = vpack.c.b16 %v3745, %v3744
        %v3769 = vpack.c.b16 %v3747, %v3746
        %v3770 = vpack.c.b16 %v3749, %v3748
        %v3771 = vpack.c.b16 %v3751, %v3750
        %v3772 = vpack.c.b16 %v3753, %v3752
        %v3773 = vpack.c.b16 %v3755, %v3754
        %v3774 = vpack.c.b16 %v3757, %v3756
        %v3775 = vpack.c.b16 %v3759, %v3758
        %3792 = vmatprep.subr.bf16.mxu0 0
        %3793 = vmatpush1.bf16.msra.mxu0 %v3760
        %3794 = vmatprep.subr.bf16.mxu0 0
        %3795 = vmatpush1.bf16.msra.mxu0 %v3761
        %3796 = vmatprep.subr.bf16.mxu0 0
        %3797 = vmatpush1.bf16.msra.mxu0 %v3762
        %3798 = vmatprep.subr.bf16.mxu0 0
        %3799 = vmatpush1.bf16.msra.mxu0 %v3763
        %3800 = vmatprep.subr.bf16.mxu0 0
        %3801 = vmatpush1.bf16.msra.mxu0 %v3764
        %3802 = vmatprep.subr.bf16.mxu0 0
        %3803 = vmatpush1.bf16.msra.mxu0 %v3765
        %3804 = vmatprep.subr.bf16.mxu0 0
        %3805 = vmatpush1.bf16.msra.mxu0 %v3766
        %3806 = vmatprep.subr.bf16.mxu0 0
        %3807 = vmatpush1.bf16.msra.mxu0 %v3767
        %3808 = vmatprep.subr.bf16.mxu0 0
        %3809 = vmatpush1.bf16.msra.mxu0 %v3768
        %3810 = vmatprep.subr.bf16.mxu0 0
        %3811 = vmatpush1.bf16.msra.mxu0 %v3769
        %3812 = vmatprep.subr.bf16.mxu0 0
        %3813 = vmatpush1.bf16.msra.mxu0 %v3770
        %3814 = vmatprep.subr.bf16.mxu0 0
        %3815 = vmatpush1.bf16.msra.mxu0 %v3771
        %3816 = vmatprep.subr.bf16.mxu0 0
        %3817 = vmatpush1.bf16.msra.mxu0 %v3772
        %3818 = vmatprep.subr.bf16.mxu0 0
        %3819 = vmatpush1.bf16.msra.mxu0 %v3773
        %3820 = vmatprep.subr.bf16.mxu0 0
        %3821 = vmatpush1.bf16.msra.mxu0 %v3774
        %3822 = vmatprep.subr.bf16.mxu0 0
        %3823 = vmatpush1.bf16.msra.mxu0 %v3775
        %3824 = vmatprep.mubr.bf16.mxu0 %v3651
        %3825 = vmatmul.mubr.bf16.gmra.mrb[0].mxu0 %v3648
        %v3826 = vpop.f32.mrb[0].mxu0
        %v3827 = vadd.f32 0.0, %v3826
        %v3828 = vpop.f32.mrb[0].mxu0
        %v3829 = vpop.f32.mrb[0].mxu0
        %v3830 = vadd.f32 0.0, %v3829
        %v3831 = vpop.f32.mrb[0].mxu0
        %3832 = vmatprep.mubr.bf16.mxu0 %v3655
        %3833 = vmatmul.mubr.bf16.gmra.mrb[0].mxu0 %v3653
        %v3834 = vpop.f32.mrb[0].mxu0
        %v3835 = vadd.f32 0.0, %v3834
        %v3836 = vpop.f32.mrb[0].mxu0
        %v3837 = vpop.f32.mrb[0].mxu0
        %v3838 = vadd.f32 0.0, %v3837
        %v3839 = vpop.f32.mrb[0].mxu0
        %3840 = vmatprep.mubr.bf16.mxu0 %v3659
        %3841 = vmatmul.mubr.bf16.gmra.mrb[0].mxu0 %v3657
        %v3842 = vpop.f32.mrb[0].mxu0
        %v3843 = vadd.f32 0.0, %v3842
        %v3844 = vpop.f32.mrb[0].mxu0
        %v3845 = vpop.f32.mrb[0].mxu0
        %v3846 = vadd.f32 0.0, %v3845
        %v3847 = vpop.f32.mrb[0].mxu0
        %3848 = vmatprep.mubr.bf16.mxu0 %v3663
        %3849 = vmatmul.mubr.bf16.gmra.mrb[0].mxu0 %v3661
        %v3850 = vpop.f32.mrb[0].mxu0
        %v3851 = vadd.f32 0.0, %v3850
        %v3852 = vpop.f32.mrb[0].mxu0
        %v3853 = vpop.f32.mrb[0].mxu0
        %v3854 = vadd.f32 0.0, %v3853
        %v3855 = vpop.f32.mrb[0].mxu0
        %3856 = vmatprep.mubr.bf16.mxu0 %v3667
        %3857 = vmatmul.mubr.bf16.gmra.mrb[0].mxu0 %v3665
        %v3858 = vpop.f32.mrb[0].mxu0
        %v3859 = vadd.f32 0.0, %v3858
        %v3860 = vpop.f32.mrb[0].mxu0
        %v3861 = vpop.f32.mrb[0].mxu0
        %v3862 = vadd.f32 0.0, %v3861
        %v3863 = vpop.f32.mrb[0].mxu0
        %3864 = vmatprep.mubr.bf16.mxu0 %v3671
        %3865 = vmatmul.mubr.bf16.gmra.mrb[0].mxu0 %v3669
        %v3866 = vpop.f32.mrb[0].mxu0
        %v3867 = vadd.f32 0.0, %v3866
        %v3868 = vpop.f32.mrb[0].mxu0
        %v3869 = vpop.f32.mrb[0].mxu0
        %v3870 = vadd.f32 0.0, %v3869
        %v3871 = vpop.f32.mrb[0].mxu0
        %3872 = vmatprep.mubr.bf16.mxu0 %v3675
        %3873 = vmatmul.mubr.bf16.gmra.mrb[0].mxu0 %v3673
        %v3874 = vpop.f32.mrb[0].mxu0
        %v3875 = vadd.f32 0.0, %v3874
        %v3876 = vpop.f32.mrb[0].mxu0
        %v3877 = vpop.f32.mrb[0].mxu0
        %v3878 = vadd.f32 0.0, %v3877
        %v3879 = vpop.f32.mrb[0].mxu0
        %3880 = vmatprep.mubr.bf16.mxu0 %v3679
        %3881 = vmatmul.mubr.bf16.gmra.mrb[0].mxu0 %v3677
        %v3882 = vpop.f32.mrb[0].mxu0
        %v3883 = vadd.f32 0.0, %v3882
        %v3884 = vpop.f32.mrb[0].mxu0
        %v3885 = vpop.f32.mrb[0].mxu0
        %v3886 = vadd.f32 0.0, %v3885
        %v3887 = vpop.f32.mrb[0].mxu0
        %3888 = vdwg.mxu0
        %v3921 = vunpack.c.l.b16 %v3554
        %v3922 = vunpack.c.l.b16 %v3555
        %v3923 = vunpack.c.l.b16 %v3556
        %v3924 = vunpack.c.l.b16 %v3557
        %v3925 = vunpack.c.l.b16 %v3558
        %v3926 = vunpack.c.l.b16 %v3559
        %v3927 = vunpack.c.l.b16 %v3560
        %v3928 = vunpack.c.l.b16 %v3561
        %v3929 = vunpack.c.l.b16 %v3562
        %v3930 = vunpack.c.l.b16 %v3563
        %v3931 = vunpack.c.l.b16 %v3564
        %v3932 = vunpack.c.l.b16 %v3565
        %v3933 = vunpack.c.l.b16 %v3566
        %v3934 = vunpack.c.l.b16 %v3567
        %v3935 = vunpack.c.l.b16 %v3568
        %v3936 = vunpack.c.l.b16 %v3569
        %v3937 = vunpack.c.l.b16 %v3570
        %v3938 = vunpack.c.l.b16 %v3571
        %v3939 = vunpack.c.l.b16 %v3572
        %v3940 = vunpack.c.l.b16 %v3573
        %v3941 = vunpack.c.l.b16 %v3574
        %v3942 = vunpack.c.l.b16 %v3575
        %v3943 = vunpack.c.l.b16 %v3576
        %v3944 = vunpack.c.l.b16 %v3577
        %v3945 = vunpack.c.l.b16 %v3578
        %v3946 = vunpack.c.l.b16 %v3579
        %v3947 = vunpack.c.l.b16 %v3580
        %v3948 = vunpack.c.l.b16 %v3581
        %v3949 = vunpack.c.l.b16 %v3582
        %v3950 = vunpack.c.l.b16 %v3583
        %v3951 = vunpack.c.l.b16 %v3584
        %v3952 = vunpack.c.l.b16 %v3585
        %v3953 = vpack.c.b16 %v3922, %v3921
        %v3954 = vpack.c.b16 %v3924, %v3923
        %v3955 = vpack.c.b16 %v3926, %v3925
        %v3956 = vpack.c.b16 %v3928, %v3927
        %v3957 = vpack.c.b16 %v3930, %v3929
        %v3958 = vpack.c.b16 %v3932, %v3931
        %v3959 = vpack.c.b16 %v3934, %v3933
        %v3960 = vpack.c.b16 %v3936, %v3935
        %v3961 = vpack.c.b16 %v3938, %v3937
        %v3962 = vpack.c.b16 %v3940, %v3939
        %v3963 = vpack.c.b16 %v3942, %v3941
        %v3964 = vpack.c.b16 %v3944, %v3943
        %v3965 = vpack.c.b16 %v3946, %v3945
        %v3966 = vpack.c.b16 %v3948, %v3947
        %v3967 = vpack.c.b16 %v3950, %v3949
        %v3968 = vpack.c.b16 %v3952, %v3951
        %3985 = vmatprep.subr.bf16.mxu0 0
        %3986 = vmatpush1.bf16.msra.mxu0 %v3953
        %3987 = vmatprep.subr.bf16.mxu0 0
        %3988 = vmatpush1.bf16.msra.mxu0 %v3954
        %3989 = vmatprep.subr.bf16.mxu0 0
        %3990 = vmatpush1.bf16.msra.mxu0 %v3955
        %3991 = vmatprep.subr.bf16.mxu0 0
        %3992 = vmatpush1.bf16.msra.mxu0 %v3956
        %3993 = vmatprep.subr.bf16.mxu0 0
        %3994 = vmatpush1.bf16.msra.mxu0 %v3957
        %3995 = vmatprep.subr.bf16.mxu0 0
        %3996 = vmatpush1.bf16.msra.mxu0 %v3958
        %3997 = vmatprep.subr.bf16.mxu0 0
        %3998 = vmatpush1.bf16.msra.mxu0 %v3959
        %3999 = vmatprep.subr.bf16.mxu0 0
        %4000 = vmatpush1.bf16.msra.mxu0 %v3960
        %4001 = vmatprep.subr.bf16.mxu0 0
        %4002 = vmatpush1.bf16.msra.mxu0 %v3961
        %4003 = vmatprep.subr.bf16.mxu0 0
        %4004 = vmatpush1.bf16.msra.mxu0 %v3962
        %4005 = vmatprep.subr.bf16.mxu0 0
        %4006 = vmatpush1.bf16.msra.mxu0 %v3963
        %4007 = vmatprep.subr.bf16.mxu0 0
        %4008 = vmatpush1.bf16.msra.mxu0 %v3964
        %4009 = vmatprep.subr.bf16.mxu0 0
        %4010 = vmatpush1.bf16.msra.mxu0 %v3965
        %4011 = vmatprep.subr.bf16.mxu0 0
        %4012 = vmatpush1.bf16.msra.mxu0 %v3966
        %4013 = vmatprep.subr.bf16.mxu0 0
        %4014 = vmatpush1.bf16.msra.mxu0 %v3967
        %4015 = vmatprep.subr.bf16.mxu0 0
        %4016 = vmatpush1.bf16.msra.mxu0 %v3968
        %4017 = vmatprep.mubr.bf16.mxu0 %v3489
        %4018 = vmatmul.mubr.bf16.gmra.mrb[0].mxu0 %v3461
        %v4019 = vpop.f32.mrb[0].mxu0
        %v4020 = vadd.f32 %v3827, %v4019
        %v4021 = vpop.f32.mrb[0].mxu0
        %v4022 = vpop.f32.mrb[0].mxu0
        %v4023 = vadd.f32 %v3830, %v4022
        %v4024 = vpop.f32.mrb[0].mxu0
        %4025 = vmatprep.mubr.bf16.mxu0 %v3497
        %4026 = vmatmul.mubr.bf16.gmra.mrb[0].mxu0 %v3462
        %v4027 = vpop.f32.mrb[0].mxu0
        %v4028 = vadd.f32 %v3835, %v4027
        %v4029 = vpop.f32.mrb[0].mxu0
        %v4030 = vpop.f32.mrb[0].mxu0
        %v4031 = vadd.f32 %v3838, %v4030
        %v4032 = vpop.f32.mrb[0].mxu0
        %4033 = vmatprep.mubr.bf16.mxu0 %v3505
        %4034 = vmatmul.mubr.bf16.gmra.mrb[0].mxu0 %v3463
        %v4035 = vpop.f32.mrb[0].mxu0
        %v4036 = vadd.f32 %v3843, %v4035
        %v4037 = vpop.f32.mrb[0].mxu0
        %v4038 = vpop.f32.mrb[0].mxu0
        %v4039 = vadd.f32 %v3846, %v4038
        %v4040 = vpop.f32.mrb[0].mxu0
        %4041 = vmatprep.mubr.bf16.mxu0 %v3513
        %4042 = vmatmul.mubr.bf16.gmra.mrb[0].mxu0 %v3464
        %v4043 = vpop.f32.mrb[0].mxu0
        %v4044 = vadd.f32 %v3851, %v4043
        %v4045 = vpop.f32.mrb[0].mxu0
        %v4046 = vpop.f32.mrb[0].mxu0
        %v4047 = vadd.f32 %v3854, %v4046
        %v4048 = vpop.f32.mrb[0].mxu0
        %4049 = vmatprep.mubr.bf16.mxu0 %v3521
        %4050 = vmatmul.mubr.bf16.gmra.mrb[0].mxu0 %v3465
        %v4051 = vpop.f32.mrb[0].mxu0
        %v4052 = vadd.f32 %v3859, %v4051
        %v4053 = vpop.f32.mrb[0].mxu0
        %v4054 = vpop.f32.mrb[0].mxu0
        %v4055 = vadd.f32 %v3862, %v4054
        %v4056 = vpop.f32.mrb[0].mxu0
        %4057 = vmatprep.mubr.bf16.mxu0 %v3529
        %4058 = vmatmul.mubr.bf16.gmra.mrb[0].mxu0 %v3466
        %v4059 = vpop.f32.mrb[0].mxu0
        %v4060 = vadd.f32 %v3867, %v4059
        %v4061 = vpop.f32.mrb[0].mxu0
        %v4062 = vpop.f32.mrb[0].mxu0
        %v4063 = vadd.f32 %v3870, %v4062
        %v4064 = vpop.f32.mrb[0].mxu0
        %4065 = vmatprep.mubr.bf16.mxu0 %v3537
        %4066 = vmatmul.mubr.bf16.gmra.mrb[0].mxu0 %v3467
        %v4067 = vpop.f32.mrb[0].mxu0
        %v4068 = vadd.f32 %v3875, %v4067
        %v4069 = vpop.f32.mrb[0].mxu0
        %v4070 = vpop.f32.mrb[0].mxu0
        %v4071 = vadd.f32 %v3878, %v4070
        %v4072 = vpop.f32.mrb[0].mxu0
        %4073 = vmatprep.mubr.bf16.mxu0 %v3545
        %4074 = vmatmul.mubr.bf16.gmra.mrb[0].mxu0 %v3468
        %v4075 = vpop.f32.mrb[0].mxu0
        %v4076 = vadd.f32 %v3883, %v4075
        %v4077 = vpop.f32.mrb[0].mxu0
        %v4078 = vpop.f32.mrb[0].mxu0
        %v4079 = vadd.f32 %v3886, %v4078
        %v4080 = vpop.f32.mrb[0].mxu0
        %4081 = vdwg.mxu0
        %v4082 = vld [vmem:[#allocation3] sm:$0xfc]
        %v4083 = vld [vmem:[#allocation3 + $0x40] sm:$0x7]
        %v4085 = vshrl.u32 %v4082, 16
        %v4087 = vshll.u32 %v4082, 16
        %v4089 = vrot.slane %v4087, 1
        %v4090 = vor.u32 %v4085, %v4089
        %v4091 = vsel %vm782, %v4090, %v3488
        %v4093 = vshll.u32 %v4083, 16
        %v4095 = vrot.slane %v4093, 1
        %v4096 = vsel %vm782, %v3540, %v4095
        %v4097 = vshrl.u32 %v4083, 16
        %v4099 = vor.u32 %v4097, %v4095
        %s4100 = scalar_lea.vmem [#allocation8], 256
        %v4101 = vld [vmem:[%s4100] sm:$0xf]
        %v4102 = vld [vmem:[%s4100 + $0x4] sm:$0xf]
        %v4103 = vld [vmem:[%s4100 + $0x8] sm:$0xf]
        %v4104 = vld [vmem:[%s4100 + $0xc] sm:$0xf]
        %v4105 = vld [vmem:[%s4100 + $0x10] sm:$0xf]
        %v4106 = vld [vmem:[%s4100 + $0x14] sm:$0xf]
        %v4107 = vld [vmem:[%s4100 + $0x18] sm:$0xf]
        %v4108 = vld [vmem:[%s4100 + $0x1c] sm:$0xf]
        %v4109 = vld [vmem:[%s4100 + $0x20] sm:$0xf]
        %v4110 = vld [vmem:[%s4100 + $0x24] sm:$0xf]
        %v4111 = vld [vmem:[%s4100 + $0x28] sm:$0xf]
        %v4112 = vld [vmem:[%s4100 + $0x2c] sm:$0xf]
        %v4113 = vld [vmem:[%s4100 + $0x30] sm:$0xf]
        %v4114 = vld [vmem:[%s4100 + $0x34] sm:$0xf]
        %v4115 = vld [vmem:[%s4100 + $0x38] sm:$0xf]
        %v4116 = vld [vmem:[%s4100 + $0x3c] sm:$0xf]
        %v4117 = vld [vmem:[%s4100 + $0x40] sm:$0xf]
        %v4118 = vld [vmem:[%s4100 + $0x44] sm:$0xf]
        %v4119 = vld [vmem:[%s4100 + $0x48] sm:$0xf]
        %v4120 = vld [vmem:[%s4100 + $0x4c] sm:$0xf]
        %v4121 = vld [vmem:[%s4100 + $0x50] sm:$0xf]
        %v4122 = vld [vmem:[%s4100 + $0x54] sm:$0xf]
        %v4123 = vld [vmem:[%s4100 + $0x58] sm:$0xf]
        %v4124 = vld [vmem:[%s4100 + $0x5c] sm:$0xf]
        %v4125 = vld [vmem:[%s4100 + $0x60] sm:$0xf]
        %v4126 = vld [vmem:[%s4100 + $0x64] sm:$0xf]
        %v4127 = vld [vmem:[%s4100 + $0x68] sm:$0xf]
        %v4128 = vld [vmem:[%s4100 + $0x6c] sm:$0xf]
        %v4129 = vld [vmem:[%s4100 + $0x70] sm:$0xf]
        %v4130 = vld [vmem:[%s4100 + $0x74] sm:$0xf]
        %v4131 = vld [vmem:[%s4100 + $0x78] sm:$0xf]
        %v4132 = vld [vmem:[%s4100 + $0x7c] sm:$0xf]
        %v4135 = vrot.slane %v4082, 2
        %v4136 = vrot.slane %v3470, 2
        %v4137 = vsel %vm1441, %v4135, %v4136
        %v4138 = vrot.slane %v4091, 2
        %v4139 = vrot.slane %v3497, 2
        %v4140 = vsel %vm1441, %v4138, %v4139
        %v4141 = vrot.slane %v3471, 2
        %v4142 = vsel %vm1441, %v4136, %v4141
        %v4143 = vrot.slane %v3505, 2
        %v4144 = vsel %vm1441, %v4139, %v4143
        %v4145 = vrot.slane %v3472, 2
        %v4146 = vsel %vm1441, %v4141, %v4145
        %v4147 = vrot.slane %v3513, 2
        %v4148 = vsel %vm1441, %v4143, %v4147
        %v4149 = vrot.slane %v3473, 2
        %v4150 = vsel %vm1441, %v4145, %v4149
        %v4151 = vrot.slane %v3521, 2
        %v4152 = vsel %vm1441, %v4147, %v4151
        %v4153 = vrot.slane %v3474, 2
        %v4154 = vsel %vm1441, %v4149, %v4153
        %v4155 = vrot.slane %v3529, 2
        %v4156 = vsel %vm1441, %v4151, %v4155
        %v4157 = vrot.slane %v3475, 2
        %v4158 = vsel %vm1441, %v4153, %v4157
        %v4159 = vrot.slane %v3537, 2
        %v4160 = vsel %vm1441, %v4155, %v4159
        %v4161 = vrot.slane %v3476, 2
        %v4162 = vsel %vm1441, %v4157, %v4161
        %v4163 = vrot.slane %v4096, 2
        %v4164 = vsel %vm1441, %v4159, %v4163
        %v4165 = vrot.slane %v3587, 2
        %v4166 = vsel %vm1441, %v4161, %v4165
        %v4167 = vrot.slane %v4099, 2
        %v4168 = vsel %vm1441, %v4163, %v4167
        %v4217 = vunpack.c.l.b16 %v4101
        %v4218 = vunpack.c.l.b16 %v4102
        %v4219 = vunpack.c.l.b16 %v4103
        %v4220 = vunpack.c.l.b16 %v4104
        %v4221 = vunpack.c.l.b16 %v4105
        %v4222 = vunpack.c.l.b16 %v4106
        %v4223 = vunpack.c.l.b16 %v4107
        %v4224 = vunpack.c.l.b16 %v4108
        %v4225 = vunpack.c.l.b16 %v4109
        %v4226 = vunpack.c.l.b16 %v4110
        %v4227 = vunpack.c.l.b16 %v4111
        %v4228 = vunpack.c.l.b16 %v4112
        %v4229 = vunpack.c.l.b16 %v4113
        %v4230 = vunpack.c.l.b16 %v4114
        %v4231 = vunpack.c.l.b16 %v4115
        %v4232 = vunpack.c.l.b16 %v4116
        %v4233 = vunpack.c.l.b16 %v4117
        %v4234 = vunpack.c.l.b16 %v4118
        %v4235 = vunpack.c.l.b16 %v4119
        %v4236 = vunpack.c.l.b16 %v4120
        %v4237 = vunpack.c.l.b16 %v4121
        %v4238 = vunpack.c.l.b16 %v4122
        %v4239 = vunpack.c.l.b16 %v4123
        %v4240 = vunpack.c.l.b16 %v4124
        %v4241 = vunpack.c.l.b16 %v4125
        %v4242 = vunpack.c.l.b16 %v4126
        %v4243 = vunpack.c.l.b16 %v4127
        %v4244 = vunpack.c.l.b16 %v4128
        %v4245 = vunpack.c.l.b16 %v4129
        %v4246 = vunpack.c.l.b16 %v4130
        %v4247 = vunpack.c.l.b16 %v4131
        %v4248 = vunpack.c.l.b16 %v4132
        %v4249 = vpack.c.b16 %v4218, %v4217
        %v4250 = vpack.c.b16 %v4220, %v4219
        %v4251 = vpack.c.b16 %v4222, %v4221
        %v4252 = vpack.c.b16 %v4224, %v4223
        %v4253 = vpack.c.b16 %v4226, %v4225
        %v4254 = vpack.c.b16 %v4228, %v4227
        %v4255 = vpack.c.b16 %v4230, %v4229
        %v4256 = vpack.c.b16 %v4232, %v4231
        %v4257 = vpack.c.b16 %v4234, %v4233
        %v4258 = vpack.c.b16 %v4236, %v4235
        %v4259 = vpack.c.b16 %v4238, %v4237
        %v4260 = vpack.c.b16 %v4240, %v4239
        %v4261 = vpack.c.b16 %v4242, %v4241
        %v4262 = vpack.c.b16 %v4244, %v4243
        %v4263 = vpack.c.b16 %v4246, %v4245
        %v4264 = vpack.c.b16 %v4248, %v4247
        %4281 = vmatprep.subr.bf16.mxu0 0
        %4282 = vmatpush1.bf16.msra.mxu0 %v4249
        %4283 = vmatprep.subr.bf16.mxu0 0
        %4284 = vmatpush1.bf16.msra.mxu0 %v4250
        %4285 = vmatprep.subr.bf16.mxu0 0
        %4286 = vmatpush1.bf16.msra.mxu0 %v4251
        %4287 = vmatprep.subr.bf16.mxu0 0
        %4288 = vmatpush1.bf16.msra.mxu0 %v4252
        %4289 = vmatprep.subr.bf16.mxu0 0
        %4290 = vmatpush1.bf16.msra.mxu0 %v4253
        %4291 = vmatprep.subr.bf16.mxu0 0
        %4292 = vmatpush1.bf16.msra.mxu0 %v4254
        %4293 = vmatprep.subr.bf16.mxu0 0
        %4294 = vmatpush1.bf16.msra.mxu0 %v4255
        %4295 = vmatprep.subr.bf16.mxu0 0
        %4296 = vmatpush1.bf16.msra.mxu0 %v4256
        %4297 = vmatprep.subr.bf16.mxu0 0
        %4298 = vmatpush1.bf16.msra.mxu0 %v4257
        %4299 = vmatprep.subr.bf16.mxu0 0
        %4300 = vmatpush1.bf16.msra.mxu0 %v4258
        %4301 = vmatprep.subr.bf16.mxu0 0
        %4302 = vmatpush1.bf16.msra.mxu0 %v4259
        %4303 = vmatprep.subr.bf16.mxu0 0
        %4304 = vmatpush1.bf16.msra.mxu0 %v4260
        %4305 = vmatprep.subr.bf16.mxu0 0
        %4306 = vmatpush1.bf16.msra.mxu0 %v4261
        %4307 = vmatprep.subr.bf16.mxu0 0
        %4308 = vmatpush1.bf16.msra.mxu0 %v4262
        %4309 = vmatprep.subr.bf16.mxu0 0
        %4310 = vmatpush1.bf16.msra.mxu0 %v4263
        %4311 = vmatprep.subr.bf16.mxu0 0
        %4312 = vmatpush1.bf16.msra.mxu0 %v4264
        %4313 = vmatprep.mubr.bf16.mxu0 %v4140
        %4314 = vmatmul.mubr.bf16.gmra.mrb[0].mxu0 %v4137
        %v4315 = vpop.f32.mrb[0].mxu0
        %v4316 = vadd.f32 0.0, %v4315
        %v4317 = vpop.f32.mrb[0].mxu0
        %v4318 = vpop.f32.mrb[0].mxu0
        %v4319 = vadd.f32 0.0, %v4318
        %v4320 = vpop.f32.mrb[0].mxu0
        %4321 = vmatprep.mubr.bf16.mxu0 %v4144
        %4322 = vmatmul.mubr.bf16.gmra.mrb[0].mxu0 %v4142
        %v4323 = vpop.f32.mrb[0].mxu0
        %v4324 = vadd.f32 0.0, %v4323
        %v4325 = vpop.f32.mrb[0].mxu0
        %v4326 = vpop.f32.mrb[0].mxu0
        %v4327 = vadd.f32 0.0, %v4326
        %v4328 = vpop.f32.mrb[0].mxu0
        %4329 = vmatprep.mubr.bf16.mxu0 %v4148
        %4330 = vmatmul.mubr.bf16.gmra.mrb[0].mxu0 %v4146
        %v4331 = vpop.f32.mrb[0].mxu0
        %v4332 = vadd.f32 0.0, %v4331
        %v4333 = vpop.f32.mrb[0].mxu0
        %v4334 = vpop.f32.mrb[0].mxu0
        %v4335 = vadd.f32 0.0, %v4334
        %v4336 = vpop.f32.mrb[0].mxu0
        %4337 = vmatprep.mubr.bf16.mxu0 %v4152
        %4338 = vmatmul.mubr.bf16.gmra.mrb[0].mxu0 %v4150
        %v4339 = vpop.f32.mrb[0].mxu0
        %v4340 = vadd.f32 0.0, %v4339
        %v4341 = vpop.f32.mrb[0].mxu0
        %v4342 = vpop.f32.mrb[0].mxu0
        %v4343 = vadd.f32 0.0, %v4342
        %v4344 = vpop.f32.mrb[0].mxu0
        %4345 = vmatprep.mubr.bf16.mxu0 %v4156
        %4346 = vmatmul.mubr.bf16.gmra.mrb[0].mxu0 %v4154
        %v4347 = vpop.f32.mrb[0].mxu0
        %v4348 = vadd.f32 0.0, %v4347
        %v4349 = vpop.f32.mrb[0].mxu0
        %v4350 = vpop.f32.mrb[0].mxu0
        %v4351 = vadd.f32 0.0, %v4350
        %v4352 = vpop.f32.mrb[0].mxu0
        %4353 = vmatprep.mubr.bf16.mxu0 %v4160
        %4354 = vmatmul.mubr.bf16.gmra.mrb[0].mxu0 %v4158
        %v4355 = vpop.f32.mrb[0].mxu0
        %v4356 = vadd.f32 0.0, %v4355
        %v4357 = vpop.f32.mrb[0].mxu0
        %v4358 = vpop.f32.mrb[0].mxu0
        %v4359 = vadd.f32 0.0, %v4358
        %v4360 = vpop.f32.mrb[0].mxu0
        %4361 = vmatprep.mubr.bf16.mxu0 %v4164
        %4362 = vmatmul.mubr.bf16.gmra.mrb[0].mxu0 %v4162
        %v4363 = vpop.f32.mrb[0].mxu0
        %v4364 = vadd.f32 0.0, %v4363
        %v4365 = vpop.f32.mrb[0].mxu0
        %v4366 = vpop.f32.mrb[0].mxu0
        %v4367 = vadd.f32 0.0, %v4366
        %v4368 = vpop.f32.mrb[0].mxu0
        %4369 = vmatprep.mubr.bf16.mxu0 %v4168
        %4370 = vmatmul.mubr.bf16.gmra.mrb[0].mxu0 %v4166
        %v4371 = vpop.f32.mrb[0].mxu0
        %v4372 = vadd.f32 0.0, %v4371
        %v4373 = vpop.f32.mrb[0].mxu0
        %v4374 = vpop.f32.mrb[0].mxu0
        %v4375 = vadd.f32 0.0, %v4374
        %v4376 = vpop.f32.mrb[0].mxu0
        %4377 = vdwg.mxu0
        %v4378 = vadd.f32 %v4020, %v4316
        %v4379 = vadd.f32 %v4023, %v4319
        %v4380 = vadd.f32 %v4028, %v4324
        %v4381 = vadd.f32 %v4031, %v4327
        %v4382 = vadd.f32 %v4036, %v4332
        %v4383 = vadd.f32 %v4039, %v4335
        %v4384 = vadd.f32 %v4044, %v4340
        %v4385 = vadd.f32 %v4047, %v4343
        %v4386 = vadd.f32 %v4052, %v4348
        %v4387 = vadd.f32 %v4055, %v4351
        %v4388 = vadd.f32 %v4060, %v4356
        %v4389 = vadd.f32 %v4063, %v4359
        %v4390 = vadd.f32 %v4068, %v4364
        %v4391 = vadd.f32 %v4071, %v4367
        %v4392 = vadd.f32 %v4076, %v4372
        %v4393 = vadd.f32 %v4079, %v4375
        %v4394 = vld [vmem:[#allocation3] sm:$0xf8]
        %v4395 = vld [vmem:[#allocation3 + $0x40] sm:$0xf]
        %v4397 = vshrl.u32 %v4394, 16
        %v4399 = vshll.u32 %v4394, 16
        %v4401 = vrot.slane %v4399, 1
        %v4402 = vor.u32 %v4397, %v4401
        %v4403 = vsel %vm782, %v4402, %v3488
        %v4405 = vshll.u32 %v4395, 16
        %v4407 = vrot.slane %v4405, 1
        %v4408 = vsel %vm782, %v3540, %v4407
        %v4409 = vshrl.u32 %v4395, 16
        %v4411 = vor.u32 %v4409, %v4407
        %s4412 = scalar_lea.vmem [#allocation8], 384
        %v4413 = vld [vmem:[%s4412] sm:$0xf]
        %v4414 = vld [vmem:[%s4412 + $0x4] sm:$0xf]
        %v4415 = vld [vmem:[%s4412 + $0x8] sm:$0xf]
        %v4416 = vld [vmem:[%s4412 + $0xc] sm:$0xf]
        %v4417 = vld [vmem:[%s4412 + $0x10] sm:$0xf]
        %v4418 = vld [vmem:[%s4412 + $0x14] sm:$0xf]
        %v4419 = vld [vmem:[%s4412 + $0x18] sm:$0xf]
        %v4420 = vld [vmem:[%s4412 + $0x1c] sm:$0xf]
        %v4421 = vld [vmem:[%s4412 + $0x20] sm:$0xf]
        %v4422 = vld [vmem:[%s4412 + $0x24] sm:$0xf]
        %v4423 = vld [vmem:[%s4412 + $0x28] sm:$0xf]
        %v4424 = vld [vmem:[%s4412 + $0x2c] sm:$0xf]
        %v4425 = vld [vmem:[%s4412 + $0x30] sm:$0xf]
        %v4426 = vld [vmem:[%s4412 + $0x34] sm:$0xf]
        %v4427 = vld [vmem:[%s4412 + $0x38] sm:$0xf]
        %v4428 = vld [vmem:[%s4412 + $0x3c] sm:$0xf]
        %v4429 = vld [vmem:[%s4412 + $0x40] sm:$0xf]
        %v4430 = vld [vmem:[%s4412 + $0x44] sm:$0xf]
        %v4431 = vld [vmem:[%s4412 + $0x48] sm:$0xf]
        %v4432 = vld [vmem:[%s4412 + $0x4c] sm:$0xf]
        %v4433 = vld [vmem:[%s4412 + $0x50] sm:$0xf]
        %v4434 = vld [vmem:[%s4412 + $0x54] sm:$0xf]
        %v4435 = vld [vmem:[%s4412 + $0x58] sm:$0xf]
        %v4436 = vld [vmem:[%s4412 + $0x5c] sm:$0xf]
        %v4437 = vld [vmem:[%s4412 + $0x60] sm:$0xf]
        %v4438 = vld [vmem:[%s4412 + $0x64] sm:$0xf]
        %v4439 = vld [vmem:[%s4412 + $0x68] sm:$0xf]
        %v4440 = vld [vmem:[%s4412 + $0x6c] sm:$0xf]
        %v4441 = vld [vmem:[%s4412 + $0x70] sm:$0xf]
        %v4442 = vld [vmem:[%s4412 + $0x74] sm:$0xf]
        %v4443 = vld [vmem:[%s4412 + $0x78] sm:$0xf]
        %v4444 = vld [vmem:[%s4412 + $0x7c] sm:$0xf]
        %v4447 = vrot.slane %v4394, 3
        %v4448 = vrot.slane %v3470, 3
        %v4449 = vsel %vm1754, %v4447, %v4448
        %v4450 = vrot.slane %v4403, 3
        %v4451 = vrot.slane %v3497, 3
        %v4452 = vsel %vm1754, %v4450, %v4451
        %v4453 = vrot.slane %v3471, 3
        %v4454 = vsel %vm1754, %v4448, %v4453
        %v4455 = vrot.slane %v3505, 3
        %v4456 = vsel %vm1754, %v4451, %v4455
        %v4457 = vrot.slane %v3472, 3
        %v4458 = vsel %vm1754, %v4453, %v4457
        %v4459 = vrot.slane %v3513, 3
        %v4460 = vsel %vm1754, %v4455, %v4459
        %v4461 = vrot.slane %v3473, 3
        %v4462 = vsel %vm1754, %v4457, %v4461
        %v4463 = vrot.slane %v3521, 3
        %v4464 = vsel %vm1754, %v4459, %v4463
        %v4465 = vrot.slane %v3474, 3
        %v4466 = vsel %vm1754, %v4461, %v4465
        %v4467 = vrot.slane %v3529, 3
        %v4468 = vsel %vm1754, %v4463, %v4467
        %v4469 = vrot.slane %v3475, 3
        %v4470 = vsel %vm1754, %v4465, %v4469
        %v4471 = vrot.slane %v3537, 3
        %v4472 = vsel %vm1754, %v4467, %v4471
        %v4473 = vrot.slane %v3476, 3
        %v4474 = vsel %vm1754, %v4469, %v4473
        %v4475 = vrot.slane %v4408, 3
        %v4476 = vsel %vm1754, %v4471, %v4475
        %v4477 = vrot.slane %v4083, 3
        %v4478 = vsel %vm1754, %v4473, %v4477
        %v4479 = vrot.slane %v4411, 3
        %v4480 = vsel %vm1754, %v4475, %v4479
        %v4529 = vunpack.c.l.b16 %v4413
        %v4530 = vunpack.c.l.b16 %v4414
        %v4531 = vunpack.c.l.b16 %v4415
        %v4532 = vunpack.c.l.b16 %v4416
        %v4533 = vunpack.c.l.b16 %v4417
        %v4534 = vunpack.c.l.b16 %v4418
        %v4535 = vunpack.c.l.b16 %v4419
        %v4536 = vunpack.c.l.b16 %v4420
        %v4537 = vunpack.c.l.b16 %v4421
        %v4538 = vunpack.c.l.b16 %v4422
        %v4539 = vunpack.c.l.b16 %v4423
        %v4540 = vunpack.c.l.b16 %v4424
        %v4541 = vunpack.c.l.b16 %v4425
        %v4542 = vunpack.c.l.b16 %v4426
        %v4543 = vunpack.c.l.b16 %v4427
        %v4544 = vunpack.c.l.b16 %v4428
        %v4545 = vunpack.c.l.b16 %v4429
        %v4546 = vunpack.c.l.b16 %v4430
        %v4547 = vunpack.c.l.b16 %v4431
        %v4548 = vunpack.c.l.b16 %v4432
        %v4549 = vunpack.c.l.b16 %v4433
        %v4550 = vunpack.c.l.b16 %v4434
        %v4551 = vunpack.c.l.b16 %v4435
        %v4552 = vunpack.c.l.b16 %v4436
        %v4553 = vunpack.c.l.b16 %v4437
        %v4554 = vunpack.c.l.b16 %v4438
        %v4555 = vunpack.c.l.b16 %v4439
        %v4556 = vunpack.c.l.b16 %v4440
        %v4557 = vunpack.c.l.b16 %v4441
        %v4558 = vunpack.c.l.b16 %v4442
        %v4559 = vunpack.c.l.b16 %v4443
        %v4560 = vunpack.c.l.b16 %v4444
        %v4561 = vpack.c.b16 %v4530, %v4529
        %v4562 = vpack.c.b16 %v4532, %v4531
        %v4563 = vpack.c.b16 %v4534, %v4533
        %v4564 = vpack.c.b16 %v4536, %v4535
        %v4565 = vpack.c.b16 %v4538, %v4537
        %v4566 = vpack.c.b16 %v4540, %v4539
        %v4567 = vpack.c.b16 %v4542, %v4541
        %v4568 = vpack.c.b16 %v4544, %v4543
        %v4569 = vpack.c.b16 %v4546, %v4545
        %v4570 = vpack.c.b16 %v4548, %v4547
        %v4571 = vpack.c.b16 %v4550, %v4549
        %v4572 = vpack.c.b16 %v4552, %v4551
        %v4573 = vpack.c.b16 %v4554, %v4553
        %v4574 = vpack.c.b16 %v4556, %v4555
        %v4575 = vpack.c.b16 %v4558, %v4557
        %v4576 = vpack.c.b16 %v4560, %v4559
        %4593 = vmatprep.subr.bf16.mxu0 0
        %4594 = vmatpush1.bf16.msra.mxu0 %v4561
        %4595 = vmatprep.subr.bf16.mxu0 0
        %4596 = vmatpush1.bf16.msra.mxu0 %v4562
        %4597 = vmatprep.subr.bf16.mxu0 0
        %4598 = vmatpush1.bf16.msra.mxu0 %v4563
        %4599 = vmatprep.subr.bf16.mxu0 0
        %4600 = vmatpush1.bf16.msra.mxu0 %v4564
        %4601 = vmatprep.subr.bf16.mxu0 0
        %4602 = vmatpush1.bf16.msra.mxu0 %v4565
        %4603 = vmatprep.subr.bf16.mxu0 0
        %4604 = vmatpush1.bf16.msra.mxu0 %v4566
        %4605 = vmatprep.subr.bf16.mxu0 0
        %4606 = vmatpush1.bf16.msra.mxu0 %v4567
        %4607 = vmatprep.subr.bf16.mxu0 0
        %4608 = vmatpush1.bf16.msra.mxu0 %v4568
        %4609 = vmatprep.subr.bf16.mxu0 0
        %4610 = vmatpush1.bf16.msra.mxu0 %v4569
        %4611 = vmatprep.subr.bf16.mxu0 0
        %4612 = vmatpush1.bf16.msra.mxu0 %v4570
        %4613 = vmatprep.subr.bf16.mxu0 0
        %4614 = vmatpush1.bf16.msra.mxu0 %v4571
        %4615 = vmatprep.subr.bf16.mxu0 0
        %4616 = vmatpush1.bf16.msra.mxu0 %v4572
        %4617 = vmatprep.subr.bf16.mxu0 0
        %4618 = vmatpush1.bf16.msra.mxu0 %v4573
        %4619 = vmatprep.subr.bf16.mxu0 0
        %4620 = vmatpush1.bf16.msra.mxu0 %v4574
        %4621 = vmatprep.subr.bf16.mxu0 0
        %4622 = vmatpush1.bf16.msra.mxu0 %v4575
        %4623 = vmatprep.subr.bf16.mxu0 0
        %4624 = vmatpush1.bf16.msra.mxu0 %v4576
        %4625 = vmatprep.mubr.bf16.mxu0 %v4452
        %4626 = vmatmul.mubr.bf16.gmra.mrb[0].mxu0 %v4449
        %v4627 = vpop.f32.mrb[0].mxu0
        %v4628 = vadd.f32 0.0, %v4627
        %v4629 = vpop.f32.mrb[0].mxu0
        %v4630 = vpop.f32.mrb[0].mxu0
        %v4631 = vadd.f32 0.0, %v4630
        %v4632 = vpop.f32.mrb[0].mxu0
        %4633 = vmatprep.mubr.bf16.mxu0 %v4456
        %4634 = vmatmul.mubr.bf16.gmra.mrb[0].mxu0 %v4454
        %v4635 = vpop.f32.mrb[0].mxu0
        %v4636 = vadd.f32 0.0, %v4635
        %v4637 = vpop.f32.mrb[0].mxu0
        %v4638 = vpop.f32.mrb[0].mxu0
        %v4639 = vadd.f32 0.0, %v4638
        %v4640 = vpop.f32.mrb[0].mxu0
        %4641 = vmatprep.mubr.bf16.mxu0 %v4460
        %4642 = vmatmul.mubr.bf16.gmra.mrb[0].mxu0 %v4458
        %v4643 = vpop.f32.mrb[0].mxu0
        %v4644 = vadd.f32 0.0, %v4643
        %v4645 = vpop.f32.mrb[0].mxu0
        %v4646 = vpop.f32.mrb[0].mxu0
        %v4647 = vadd.f32 0.0, %v4646
        %v4648 = vpop.f32.mrb[0].mxu0
        %4649 = vmatprep.mubr.bf16.mxu0 %v4464
        %4650 = vmatmul.mubr.bf16.gmra.mrb[0].mxu0 %v4462
        %v4651 = vpop.f32.mrb[0].mxu0
        %v4652 = vadd.f32 0.0, %v4651
        %v4653 = vpop.f32.mrb[0].mxu0
        %v4654 = vpop.f32.mrb[0].mxu0
        %v4655 = vadd.f32 0.0, %v4654
        %v4656 = vpop.f32.mrb[0].mxu0
        %4657 = vmatprep.mubr.bf16.mxu0 %v4468
        %4658 = vmatmul.mubr.bf16.gmra.mrb[0].mxu0 %v4466
        %v4659 = vpop.f32.mrb[0].mxu0
        %v4660 = vadd.f32 0.0, %v4659
        %v4661 = vpop.f32.mrb[0].mxu0
        %v4662 = vpop.f32.mrb[0].mxu0
        %v4663 = vadd.f32 0.0, %v4662
        %v4664 = vpop.f32.mrb[0].mxu0
        %4665 = vmatprep.mubr.bf16.mxu0 %v4472
        %4666 = vmatmul.mubr.bf16.gmra.mrb[0].mxu0 %v4470
        %v4667 = vpop.f32.mrb[0].mxu0
        %v4668 = vadd.f32 0.0, %v4667
        %v4669 = vpop.f32.mrb[0].mxu0
        %v4670 = vpop.f32.mrb[0].mxu0
        %v4671 = vadd.f32 0.0, %v4670
        %v4672 = vpop.f32.mrb[0].mxu0
        %4673 = vmatprep.mubr.bf16.mxu0 %v4476
        %4674 = vmatmul.mubr.bf16.gmra.mrb[0].mxu0 %v4474
        %v4675 = vpop.f32.mrb[0].mxu0
        %v4676 = vadd.f32 0.0, %v4675
        %v4677 = vpop.f32.mrb[0].mxu0
        %v4678 = vpop.f32.mrb[0].mxu0
        %v4679 = vadd.f32 0.0, %v4678
        %v4680 = vpop.f32.mrb[0].mxu0
        %4681 = vmatprep.mubr.bf16.mxu0 %v4480
        %4682 = vmatmul.mubr.bf16.gmra.mrb[0].mxu0 %v4478
        %v4683 = vpop.f32.mrb[0].mxu0
        %v4684 = vadd.f32 0.0, %v4683
        %v4685 = vpop.f32.mrb[0].mxu0
        %v4686 = vpop.f32.mrb[0].mxu0
        %v4687 = vadd.f32 0.0, %v4686
        %v4688 = vpop.f32.mrb[0].mxu0
        %4689 = vdwg.mxu0
        %v4690 = vadd.f32 %v4378, %v4628
        %v4691 = vadd.f32 %v4379, %v4631
        %v4692 = vadd.f32 %v4380, %v4636
        %v4693 = vadd.f32 %v4381, %v4639
        %v4694 = vadd.f32 %v4382, %v4644
        %v4695 = vadd.f32 %v4383, %v4647
        %v4696 = vadd.f32 %v4384, %v4652
        %v4697 = vadd.f32 %v4385, %v4655
        %v4698 = vadd.f32 %v4386, %v4660
        %v4699 = vadd.f32 %v4387, %v4663
        %v4700 = vadd.f32 %v4388, %v4668
        %v4701 = vadd.f32 %v4389, %v4671
        %v4702 = vadd.f32 %v4390, %v4676
        %v4703 = vadd.f32 %v4391, %v4679
        %v4704 = vadd.f32 %v4392, %v4684
        %v4705 = vadd.f32 %v4393, %v4687
        %v4706 = vld [vmem:[#allocation3] sm:$0xf0]
        %v4707 = vld [vmem:[#allocation3 + $0x40] sm:$0x1f]
        %v4709 = vshrl.u32 %v4706, 16
        %v4711 = vshll.u32 %v4706, 16
        %v4713 = vrot.slane %v4711, 1
        %v4714 = vor.u32 %v4709, %v4713
        %v4715 = vsel %vm782, %v4714, %v3488
        %v4717 = vshll.u32 %v4707, 16
        %v4719 = vrot.slane %v4717, 1
        %v4720 = vsel %vm782, %v3540, %v4719
        %v4721 = vshrl.u32 %v4707, 16
        %v4723 = vor.u32 %v4721, %v4719
        %s4724 = scalar_lea.vmem [#allocation8], 512
        %v4725 = vld [vmem:[%s4724] sm:$0xf]
        %v4726 = vld [vmem:[%s4724 + $0x4] sm:$0xf]
        %v4727 = vld [vmem:[%s4724 + $0x8] sm:$0xf]
        %v4728 = vld [vmem:[%s4724 + $0xc] sm:$0xf]
        %v4729 = vld [vmem:[%s4724 + $0x10] sm:$0xf]
        %v4730 = vld [vmem:[%s4724 + $0x14] sm:$0xf]
        %v4731 = vld [vmem:[%s4724 + $0x18] sm:$0xf]
        %v4732 = vld [vmem:[%s4724 + $0x1c] sm:$0xf]
        %v4733 = vld [vmem:[%s4724 + $0x20] sm:$0xf]
        %v4734 = vld [vmem:[%s4724 + $0x24] sm:$0xf]
        %v4735 = vld [vmem:[%s4724 + $0x28] sm:$0xf]
        %v4736 = vld [vmem:[%s4724 + $0x2c] sm:$0xf]
        %v4737 = vld [vmem:[%s4724 + $0x30] sm:$0xf]
        %v4738 = vld [vmem:[%s4724 + $0x34] sm:$0xf]
        %v4739 = vld [vmem:[%s4724 + $0x38] sm:$0xf]
        %v4740 = vld [vmem:[%s4724 + $0x3c] sm:$0xf]
        %v4741 = vld [vmem:[%s4724 + $0x40] sm:$0xf]
        %v4742 = vld [vmem:[%s4724 + $0x44] sm:$0xf]
        %v4743 = vld [vmem:[%s4724 + $0x48] sm:$0xf]
        %v4744 = vld [vmem:[%s4724 + $0x4c] sm:$0xf]
        %v4745 = vld [vmem:[%s4724 + $0x50] sm:$0xf]
        %v4746 = vld [vmem:[%s4724 + $0x54] sm:$0xf]
        %v4747 = vld [vmem:[%s4724 + $0x58] sm:$0xf]
        %v4748 = vld [vmem:[%s4724 + $0x5c] sm:$0xf]
        %v4749 = vld [vmem:[%s4724 + $0x60] sm:$0xf]
        %v4750 = vld [vmem:[%s4724 + $0x64] sm:$0xf]
        %v4751 = vld [vmem:[%s4724 + $0x68] sm:$0xf]
        %v4752 = vld [vmem:[%s4724 + $0x6c] sm:$0xf]
        %v4753 = vld [vmem:[%s4724 + $0x70] sm:$0xf]
        %v4754 = vld [vmem:[%s4724 + $0x74] sm:$0xf]
        %v4755 = vld [vmem:[%s4724 + $0x78] sm:$0xf]
        %v4756 = vld [vmem:[%s4724 + $0x7c] sm:$0xf]
        %v4759 = vrot.slane %v4706, 4
        %v4760 = vrot.slane %v3470, 4
        %v4761 = vsel %vm731, %v4759, %v4760
        %v4762 = vrot.slane %v4715, 4
        %v4763 = vrot.slane %v3497, 4
        %v4764 = vsel %vm731, %v4762, %v4763
        %v4765 = vrot.slane %v3471, 4
        %v4766 = vsel %vm731, %v4760, %v4765
        %v4767 = vrot.slane %v3505, 4
        %v4768 = vsel %vm731, %v4763, %v4767
        %v4769 = vrot.slane %v3472, 4
        %v4770 = vsel %vm731, %v4765, %v4769
        %v4771 = vrot.slane %v3513, 4
        %v4772 = vsel %vm731, %v4767, %v4771
        %v4773 = vrot.slane %v3473, 4
        %v4774 = vsel %vm731, %v4769, %v4773
        %v4775 = vrot.slane %v3521, 4
        %v4776 = vsel %vm731, %v4771, %v4775
        %v4777 = vrot.slane %v3474, 4
        %v4778 = vsel %vm731, %v4773, %v4777
        %v4779 = vrot.slane %v3529, 4
        %v4780 = vsel %vm731, %v4775, %v4779
        %v4781 = vrot.slane %v3475, 4
        %v4782 = vsel %vm731, %v4777, %v4781
        %v4783 = vrot.slane %v3537, 4
        %v4784 = vsel %vm731, %v4779, %v4783
        %v4785 = vrot.slane %v3476, 4
        %v4786 = vsel %vm731, %v4781, %v4785
        %v4787 = vrot.slane %v4720, 4
        %v4788 = vsel %vm731, %v4783, %v4787
        %v4789 = vrot.slane %v4395, 4
        %v4790 = vsel %vm731, %v4785, %v4789
        %v4791 = vrot.slane %v4723, 4
        %v4792 = vsel %vm731, %v4787, %v4791
        %v4841 = vunpack.c.l.b16 %v4725
        %v4842 = vunpack.c.l.b16 %v4726
        %v4843 = vunpack.c.l.b16 %v4727
        %v4844 = vunpack.c.l.b16 %v4728
        %v4845 = vunpack.c.l.b16 %v4729
        %v4846 = vunpack.c.l.b16 %v4730
        %v4847 = vunpack.c.l.b16 %v4731
        %v4848 = vunpack.c.l.b16 %v4732
        %v4849 = vunpack.c.l.b16 %v4733
        %v4850 = vunpack.c.l.b16 %v4734
        %v4851 = vunpack.c.l.b16 %v4735
        %v4852 = vunpack.c.l.b16 %v4736
        %v4853 = vunpack.c.l.b16 %v4737
        %v4854 = vunpack.c.l.b16 %v4738
        %v4855 = vunpack.c.l.b16 %v4739
        %v4856 = vunpack.c.l.b16 %v4740
        %v4857 = vunpack.c.l.b16 %v4741
        %v4858 = vunpack.c.l.b16 %v4742
        %v4859 = vunpack.c.l.b16 %v4743
        %v4860 = vunpack.c.l.b16 %v4744
        %v4861 = vunpack.c.l.b16 %v4745
        %v4862 = vunpack.c.l.b16 %v4746
        %v4863 = vunpack.c.l.b16 %v4747
        %v4864 = vunpack.c.l.b16 %v4748
        %v4865 = vunpack.c.l.b16 %v4749
        %v4866 = vunpack.c.l.b16 %v4750
        %v4867 = vunpack.c.l.b16 %v4751
        %v4868 = vunpack.c.l.b16 %v4752
        %v4869 = vunpack.c.l.b16 %v4753
        %v4870 = vunpack.c.l.b16 %v4754
        %v4871 = vunpack.c.l.b16 %v4755
        %v4872 = vunpack.c.l.b16 %v4756
        %v4873 = vpack.c.b16 %v4842, %v4841
        %v4874 = vpack.c.b16 %v4844, %v4843
        %v4875 = vpack.c.b16 %v4846, %v4845
        %v4876 = vpack.c.b16 %v4848, %v4847
        %v4877 = vpack.c.b16 %v4850, %v4849
        %v4878 = vpack.c.b16 %v4852, %v4851
        %v4879 = vpack.c.b16 %v4854, %v4853
        %v4880 = vpack.c.b16 %v4856, %v4855
        %v4881 = vpack.c.b16 %v4858, %v4857
        %v4882 = vpack.c.b16 %v4860, %v4859
        %v4883 = vpack.c.b16 %v4862, %v4861
        %v4884 = vpack.c.b16 %v4864, %v4863
        %v4885 = vpack.c.b16 %v4866, %v4865
        %v4886 = vpack.c.b16 %v4868, %v4867
        %v4887 = vpack.c.b16 %v4870, %v4869
        %v4888 = vpack.c.b16 %v4872, %v4871
        %4905 = vmatprep.subr.bf16.mxu0 0
        %4906 = vmatpush1.bf16.msra.mxu0 %v4873
        %4907 = vmatprep.subr.bf16.mxu0 0
        %4908 = vmatpush1.bf16.msra.mxu0 %v4874
        %4909 = vmatprep.subr.bf16.mxu0 0
        %4910 = vmatpush1.bf16.msra.mxu0 %v4875
        %4911 = vmatprep.subr.bf16.mxu0 0
        %4912 = vmatpush1.bf16.msra.mxu0 %v4876
        %4913 = vmatprep.subr.bf16.mxu0 0
        %4914 = vmatpush1.bf16.msra.mxu0 %v4877
        %4915 = vmatprep.subr.bf16.mxu0 0
        %4916 = vmatpush1.bf16.msra.mxu0 %v4878
        %4917 = vmatprep.subr.bf16.mxu0 0
        %4918 = vmatpush1.bf16.msra.mxu0 %v4879
        %4919 = vmatprep.subr.bf16.mxu0 0
        %4920 = vmatpush1.bf16.msra.mxu0 %v4880
        %4921 = vmatprep.subr.bf16.mxu0 0
        %4922 = vmatpush1.bf16.msra.mxu0 %v4881
        %4923 = vmatprep.subr.bf16.mxu0 0
        %4924 = vmatpush1.bf16.msra.mxu0 %v4882
        %4925 = vmatprep.subr.bf16.mxu0 0
        %4926 = vmatpush1.bf16.msra.mxu0 %v4883
        %4927 = vmatprep.subr.bf16.mxu0 0
        %4928 = vmatpush1.bf16.msra.mxu0 %v4884
        %4929 = vmatprep.subr.bf16.mxu0 0
        %4930 = vmatpush1.bf16.msra.mxu0 %v4885
        %4931 = vmatprep.subr.bf16.mxu0 0
        %4932 = vmatpush1.bf16.msra.mxu0 %v4886
        %4933 = vmatprep.subr.bf16.mxu0 0
        %4934 = vmatpush1.bf16.msra.mxu0 %v4887
        %4935 = vmatprep.subr.bf16.mxu0 0
        %4936 = vmatpush1.bf16.msra.mxu0 %v4888
        %4937 = vmatprep.mubr.bf16.mxu0 %v4764
        %4938 = vmatmul.mubr.bf16.gmra.mrb[0].mxu0 %v4761
        %v4939 = vpop.f32.mrb[0].mxu0
        %v4940 = vadd.f32 0.0, %v4939
        %v4941 = vpop.f32.mrb[0].mxu0
        %v4942 = vpop.f32.mrb[0].mxu0
        %v4943 = vadd.f32 0.0, %v4942
        %v4944 = vpop.f32.mrb[0].mxu0
        %4945 = vmatprep.mubr.bf16.mxu0 %v4768
        %4946 = vmatmul.mubr.bf16.gmra.mrb[0].mxu0 %v4766
        %v4947 = vpop.f32.mrb[0].mxu0
        %v4948 = vadd.f32 0.0, %v4947
        %v4949 = vpop.f32.mrb[0].mxu0
        %v4950 = vpop.f32.mrb[0].mxu0
        %v4951 = vadd.f32 0.0, %v4950
        %v4952 = vpop.f32.mrb[0].mxu0
        %4953 = vmatprep.mubr.bf16.mxu0 %v4772
        %4954 = vmatmul.mubr.bf16.gmra.mrb[0].mxu0 %v4770
        %v4955 = vpop.f32.mrb[0].mxu0
        %v4956 = vadd.f32 0.0, %v4955
        %v4957 = vpop.f32.mrb[0].mxu0
        %v4958 = vpop.f32.mrb[0].mxu0
        %v4959 = vadd.f32 0.0, %v4958
        %v4960 = vpop.f32.mrb[0].mxu0
        %4961 = vmatprep.mubr.bf16.mxu0 %v4776
        %4962 = vmatmul.mubr.bf16.gmra.mrb[0].mxu0 %v4774
        %v4963 = vpop.f32.mrb[0].mxu0
        %v4964 = vadd.f32 0.0, %v4963
        %v4965 = vpop.f32.mrb[0].mxu0
        %v4966 = vpop.f32.mrb[0].mxu0
        %v4967 = vadd.f32 0.0, %v4966
        %v4968 = vpop.f32.mrb[0].mxu0
        %4969 = vmatprep.mubr.bf16.mxu0 %v4780
        %4970 = vmatmul.mubr.bf16.gmra.mrb[0].mxu0 %v4778
        %v4971 = vpop.f32.mrb[0].mxu0
        %v4972 = vadd.f32 0.0, %v4971
        %v4973 = vpop.f32.mrb[0].mxu0
        %v4974 = vpop.f32.mrb[0].mxu0
        %v4975 = vadd.f32 0.0, %v4974
        %v4976 = vpop.f32.mrb[0].mxu0
        %4977 = vmatprep.mubr.bf16.mxu0 %v4784
        %4978 = vmatmul.mubr.bf16.gmra.mrb[0].mxu0 %v4782
        %v4979 = vpop.f32.mrb[0].mxu0
        %v4980 = vadd.f32 0.0, %v4979
        %v4981 = vpop.f32.mrb[0].mxu0
        %v4982 = vpop.f32.mrb[0].mxu0
        %v4983 = vadd.f32 0.0, %v4982
        %v4984 = vpop.f32.mrb[0].mxu0
        %4985 = vmatprep.mubr.bf16.mxu0 %v4788
        %4986 = vmatmul.mubr.bf16.gmra.mrb[0].mxu0 %v4786
        %v4987 = vpop.f32.mrb[0].mxu0
        %v4988 = vadd.f32 0.0, %v4987
        %v4989 = vpop.f32.mrb[0].mxu0
        %v4990 = vpop.f32.mrb[0].mxu0
        %v4991 = vadd.f32 0.0, %v4990
        %v4992 = vpop.f32.mrb[0].mxu0
        %4993 = vmatprep.mubr.bf16.mxu0 %v4792
        %4994 = vmatmul.mubr.bf16.gmra.mrb[0].mxu0 %v4790
        %v4995 = vpop.f32.mrb[0].mxu0
        %v4996 = vadd.f32 0.0, %v4995
        %v4997 = vpop.f32.mrb[0].mxu0
        %v4998 = vpop.f32.mrb[0].mxu0
        %v4999 = vadd.f32 0.0, %v4998
        %v5000 = vpop.f32.mrb[0].mxu0
        %5001 = vdwg.mxu0
        %v5002 = vadd.f32 %v4690, %v4940
        %v5003 = vadd.f32 %v4691, %v4943
        %v5004 = vadd.f32 %v4692, %v4948
        %v5005 = vadd.f32 %v4693, %v4951
        %v5006 = vadd.f32 %v4694, %v4956
        %v5007 = vadd.f32 %v4695, %v4959
        %v5008 = vadd.f32 %v4696, %v4964
        %v5009 = vadd.f32 %v4697, %v4967
        %v5010 = vadd.f32 %v4698, %v4972
        %v5011 = vadd.f32 %v4699, %v4975
        %v5012 = vadd.f32 %v4700, %v4980
        %v5013 = vadd.f32 %v4701, %v4983
        %v5014 = vadd.f32 %v4702, %v4988
        %v5015 = vadd.f32 %v4703, %v4991
        %v5016 = vadd.f32 %v4704, %v4996
        %v5017 = vadd.f32 %v4705, %v4999
        %v5018 = vld [vmem:[#allocation3] sm:$0xe0]
        %v5019 = vld [vmem:[#allocation3 + $0x40] sm:$0x3f]
        %v5021 = vshrl.u32 %v5018, 16
        %v5023 = vshll.u32 %v5018, 16
        %v5025 = vrot.slane %v5023, 1
        %v5026 = vor.u32 %v5021, %v5025
        %v5027 = vsel %vm782, %v5026, %v3488
        %v5029 = vshll.u32 %v5019, 16
        %v5031 = vrot.slane %v5029, 1
        %v5032 = vsel %vm782, %v3540, %v5031
        %v5033 = vshrl.u32 %v5019, 16
        %v5035 = vor.u32 %v5033, %v5031
        %s5036 = scalar_lea.vmem [#allocation8], 640
        %v5037 = vld [vmem:[%s5036] sm:$0xf]
        %v5038 = vld [vmem:[%s5036 + $0x4] sm:$0xf]
        %v5039 = vld [vmem:[%s5036 + $0x8] sm:$0xf]
        %v5040 = vld [vmem:[%s5036 + $0xc] sm:$0xf]
        %v5041 = vld [vmem:[%s5036 + $0x10] sm:$0xf]
        %v5042 = vld [vmem:[%s5036 + $0x14] sm:$0xf]
        %v5043 = vld [vmem:[%s5036 + $0x18] sm:$0xf]
        %v5044 = vld [vmem:[%s5036 + $0x1c] sm:$0xf]
        %v5045 = vld [vmem:[%s5036 + $0x20] sm:$0xf]
        %v5046 = vld [vmem:[%s5036 + $0x24] sm:$0xf]
        %v5047 = vld [vmem:[%s5036 + $0x28] sm:$0xf]
        %v5048 = vld [vmem:[%s5036 + $0x2c] sm:$0xf]
        %v5049 = vld [vmem:[%s5036 + $0x30] sm:$0xf]
        %v5050 = vld [vmem:[%s5036 + $0x34] sm:$0xf]
        %v5051 = vld [vmem:[%s5036 + $0x38] sm:$0xf]
        %v5052 = vld [vmem:[%s5036 + $0x3c] sm:$0xf]
        %v5053 = vld [vmem:[%s5036 + $0x40] sm:$0xf]
        %v5054 = vld [vmem:[%s5036 + $0x44] sm:$0xf]
        %v5055 = vld [vmem:[%s5036 + $0x48] sm:$0xf]
        %v5056 = vld [vmem:[%s5036 + $0x4c] sm:$0xf]
        %v5057 = vld [vmem:[%s5036 + $0x50] sm:$0xf]
        %v5058 = vld [vmem:[%s5036 + $0x54] sm:$0xf]
        %v5059 = vld [vmem:[%s5036 + $0x58] sm:$0xf]
        %v5060 = vld [vmem:[%s5036 + $0x5c] sm:$0xf]
        %v5061 = vld [vmem:[%s5036 + $0x60] sm:$0xf]
        %v5062 = vld [vmem:[%s5036 + $0x64] sm:$0xf]
        %v5063 = vld [vmem:[%s5036 + $0x68] sm:$0xf]
        %v5064 = vld [vmem:[%s5036 + $0x6c] sm:$0xf]
        %v5065 = vld [vmem:[%s5036 + $0x70] sm:$0xf]
        %v5066 = vld [vmem:[%s5036 + $0x74] sm:$0xf]
        %v5067 = vld [vmem:[%s5036 + $0x78] sm:$0xf]
        %v5068 = vld [vmem:[%s5036 + $0x7c] sm:$0xf]
        %v5071 = vrot.slane %v5018, 5
        %v5072 = vrot.slane %v3470, 5
        %v5073 = vsel %vm2379, %v5071, %v5072
        %v5074 = vrot.slane %v5027, 5
        %v5075 = vrot.slane %v3497, 5
        %v5076 = vsel %vm2379, %v5074, %v5075
        %v5077 = vrot.slane %v3471, 5
        %v5078 = vsel %vm2379, %v5072, %v5077
        %v5079 = vrot.slane %v3505, 5
        %v5080 = vsel %vm2379, %v5075, %v5079
        %v5081 = vrot.slane %v3472, 5
        %v5082 = vsel %vm2379, %v5077, %v5081
        %v5083 = vrot.slane %v3513, 5
        %v5084 = vsel %vm2379, %v5079, %v5083
        %v5085 = vrot.slane %v3473, 5
        %v5086 = vsel %vm2379, %v5081, %v5085
        %v5087 = vrot.slane %v3521, 5
        %v5088 = vsel %vm2379, %v5083, %v5087
        %v5089 = vrot.slane %v3474, 5
        %v5090 = vsel %vm2379, %v5085, %v5089
        %v5091 = vrot.slane %v3529, 5
        %v5092 = vsel %vm2379, %v5087, %v5091
        %v5093 = vrot.slane %v3475, 5
        %v5094 = vsel %vm2379, %v5089, %v5093
        %v5095 = vrot.slane %v3537, 5
        %v5096 = vsel %vm2379, %v5091, %v5095
        %v5097 = vrot.slane %v3476, 5
        %v5098 = vsel %vm2379, %v5093, %v5097
        %v5099 = vrot.slane %v5032, 5
        %v5100 = vsel %vm2379, %v5095, %v5099
        %v5101 = vrot.slane %v4707, 5
        %v5102 = vsel %vm2379, %v5097, %v5101
        %v5103 = vrot.slane %v5035, 5
        %v5104 = vsel %vm2379, %v5099, %v5103
        %v5153 = vunpack.c.l.b16 %v5037
        %v5154 = vunpack.c.l.b16 %v5038
        %v5155 = vunpack.c.l.b16 %v5039
        %v5156 = vunpack.c.l.b16 %v5040
        %v5157 = vunpack.c.l.b16 %v5041
        %v5158 = vunpack.c.l.b16 %v5042
        %v5159 = vunpack.c.l.b16 %v5043
        %v5160 = vunpack.c.l.b16 %v5044
        %v5161 = vunpack.c.l.b16 %v5045
        %v5162 = vunpack.c.l.b16 %v5046
        %v5163 = vunpack.c.l.b16 %v5047
        %v5164 = vunpack.c.l.b16 %v5048
        %v5165 = vunpack.c.l.b16 %v5049
        %v5166 = vunpack.c.l.b16 %v5050
        %v5167 = vunpack.c.l.b16 %v5051
        %v5168 = vunpack.c.l.b16 %v5052
        %v5169 = vunpack.c.l.b16 %v5053
        %v5170 = vunpack.c.l.b16 %v5054
        %v5171 = vunpack.c.l.b16 %v5055
        %v5172 = vunpack.c.l.b16 %v5056
        %v5173 = vunpack.c.l.b16 %v5057
        %v5174 = vunpack.c.l.b16 %v5058
        %v5175 = vunpack.c.l.b16 %v5059
        %v5176 = vunpack.c.l.b16 %v5060
        %v5177 = vunpack.c.l.b16 %v5061
        %v5178 = vunpack.c.l.b16 %v5062
        %v5179 = vunpack.c.l.b16 %v5063
        %v5180 = vunpack.c.l.b16 %v5064
        %v5181 = vunpack.c.l.b16 %v5065
        %v5182 = vunpack.c.l.b16 %v5066
        %v5183 = vunpack.c.l.b16 %v5067
        %v5184 = vunpack.c.l.b16 %v5068
        %v5185 = vpack.c.b16 %v5154, %v5153
        %v5186 = vpack.c.b16 %v5156, %v5155
        %v5187 = vpack.c.b16 %v5158, %v5157
        %v5188 = vpack.c.b16 %v5160, %v5159
        %v5189 = vpack.c.b16 %v5162, %v5161
        %v5190 = vpack.c.b16 %v5164, %v5163
        %v5191 = vpack.c.b16 %v5166, %v5165
        %v5192 = vpack.c.b16 %v5168, %v5167
        %v5193 = vpack.c.b16 %v5170, %v5169
        %v5194 = vpack.c.b16 %v5172, %v5171
        %v5195 = vpack.c.b16 %v5174, %v5173
        %v5196 = vpack.c.b16 %v5176, %v5175
        %v5197 = vpack.c.b16 %v5178, %v5177
        %v5198 = vpack.c.b16 %v5180, %v5179
        %v5199 = vpack.c.b16 %v5182, %v5181
        %v5200 = vpack.c.b16 %v5184, %v5183
        %5217 = vmatprep.subr.bf16.mxu0 0
        %5218 = vmatpush1.bf16.msra.mxu0 %v5185
        %5219 = vmatprep.subr.bf16.mxu0 0
        %5220 = vmatpush1.bf16.msra.mxu0 %v5186
        %5221 = vmatprep.subr.bf16.mxu0 0
        %5222 = vmatpush1.bf16.msra.mxu0 %v5187
        %5223 = vmatprep.subr.bf16.mxu0 0
        %5224 = vmatpush1.bf16.msra.mxu0 %v5188
        %5225 = vmatprep.subr.bf16.mxu0 0
        %5226 = vmatpush1.bf16.msra.mxu0 %v5189
        %5227 = vmatprep.subr.bf16.mxu0 0
        %5228 = vmatpush1.bf16.msra.mxu0 %v5190
        %5229 = vmatprep.subr.bf16.mxu0 0
        %5230 = vmatpush1.bf16.msra.mxu0 %v5191
        %5231 = vmatprep.subr.bf16.mxu0 0
        %5232 = vmatpush1.bf16.msra.mxu0 %v5192
        %5233 = vmatprep.subr.bf16.mxu0 0
        %5234 = vmatpush1.bf16.msra.mxu0 %v5193
        %5235 = vmatprep.subr.bf16.mxu0 0
        %5236 = vmatpush1.bf16.msra.mxu0 %v5194
        %5237 = vmatprep.subr.bf16.mxu0 0
        %5238 = vmatpush1.bf16.msra.mxu0 %v5195
        %5239 = vmatprep.subr.bf16.mxu0 0
        %5240 = vmatpush1.bf16.msra.mxu0 %v5196
        %5241 = vmatprep.subr.bf16.mxu0 0
        %5242 = vmatpush1.bf16.msra.mxu0 %v5197
        %5243 = vmatprep.subr.bf16.mxu0 0
        %5244 = vmatpush1.bf16.msra.mxu0 %v5198
        %5245 = vmatprep.subr.bf16.mxu0 0
        %5246 = vmatpush1.bf16.msra.mxu0 %v5199
        %5247 = vmatprep.subr.bf16.mxu0 0
        %5248 = vmatpush1.bf16.msra.mxu0 %v5200
        %5249 = vmatprep.mubr.bf16.mxu0 %v5076
        %5250 = vmatmul.mubr.bf16.gmra.mrb[0].mxu0 %v5073
        %v5251 = vpop.f32.mrb[0].mxu0
        %v5252 = vadd.f32 0.0, %v5251
        %v5253 = vpop.f32.mrb[0].mxu0
        %v5254 = vpop.f32.mrb[0].mxu0
        %v5255 = vadd.f32 0.0, %v5254
        %v5256 = vpop.f32.mrb[0].mxu0
        %5257 = vmatprep.mubr.bf16.mxu0 %v5080
        %5258 = vmatmul.mubr.bf16.gmra.mrb[0].mxu0 %v5078
        %v5259 = vpop.f32.mrb[0].mxu0
        %v5260 = vadd.f32 0.0, %v5259
        %v5261 = vpop.f32.mrb[0].mxu0
        %v5262 = vpop.f32.mrb[0].mxu0
        %v5263 = vadd.f32 0.0, %v5262
        %v5264 = vpop.f32.mrb[0].mxu0
        %5265 = vmatprep.mubr.bf16.mxu0 %v5084
        %5266 = vmatmul.mubr.bf16.gmra.mrb[0].mxu0 %v5082
        %v5267 = vpop.f32.mrb[0].mxu0
        %v5268 = vadd.f32 0.0, %v5267
        %v5269 = vpop.f32.mrb[0].mxu0
        %v5270 = vpop.f32.mrb[0].mxu0
        %v5271 = vadd.f32 0.0, %v5270
        %v5272 = vpop.f32.mrb[0].mxu0
        %5273 = vmatprep.mubr.bf16.mxu0 %v5088
        %5274 = vmatmul.mubr.bf16.gmra.mrb[0].mxu0 %v5086
        %v5275 = vpop.f32.mrb[0].mxu0
        %v5276 = vadd.f32 0.0, %v5275
        %v5277 = vpop.f32.mrb[0].mxu0
        %v5278 = vpop.f32.mrb[0].mxu0
        %v5279 = vadd.f32 0.0, %v5278
        %v5280 = vpop.f32.mrb[0].mxu0
        %5281 = vmatprep.mubr.bf16.mxu0 %v5092
        %5282 = vmatmul.mubr.bf16.gmra.mrb[0].mxu0 %v5090
        %v5283 = vpop.f32.mrb[0].mxu0
        %v5284 = vadd.f32 0.0, %v5283
        %v5285 = vpop.f32.mrb[0].mxu0
        %v5286 = vpop.f32.mrb[0].mxu0
        %v5287 = vadd.f32 0.0, %v5286
        %v5288 = vpop.f32.mrb[0].mxu0
        %5289 = vmatprep.mubr.bf16.mxu0 %v5096
        %5290 = vmatmul.mubr.bf16.gmra.mrb[0].mxu0 %v5094
        %v5291 = vpop.f32.mrb[0].mxu0
        %v5292 = vadd.f32 0.0, %v5291
        %v5293 = vpop.f32.mrb[0].mxu0
        %v5294 = vpop.f32.mrb[0].mxu0
        %v5295 = vadd.f32 0.0, %v5294
        %v5296 = vpop.f32.mrb[0].mxu0
        %5297 = vmatprep.mubr.bf16.mxu0 %v5100
        %5298 = vmatmul.mubr.bf16.gmra.mrb[0].mxu0 %v5098
        %v5299 = vpop.f32.mrb[0].mxu0
        %v5300 = vadd.f32 0.0, %v5299
        %v5301 = vpop.f32.mrb[0].mxu0
        %v5302 = vpop.f32.mrb[0].mxu0
        %v5303 = vadd.f32 0.0, %v5302
        %v5304 = vpop.f32.mrb[0].mxu0
        %5305 = vmatprep.mubr.bf16.mxu0 %v5104
        %5306 = vmatmul.mubr.bf16.gmra.mrb[0].mxu0 %v5102
        %v5307 = vpop.f32.mrb[0].mxu0
        %v5308 = vadd.f32 0.0, %v5307
        %v5309 = vpop.f32.mrb[0].mxu0
        %v5310 = vpop.f32.mrb[0].mxu0
        %v5311 = vadd.f32 0.0, %v5310
        %v5312 = vpop.f32.mrb[0].mxu0
        %5313 = vdwg.mxu0
        %v5314 = vadd.f32 %v5002, %v5252
        %v5315 = vadd.f32 %v5003, %v5255
        %v5316 = vadd.f32 %v5004, %v5260
        %v5317 = vadd.f32 %v5005, %v5263
        %v5318 = vadd.f32 %v5006, %v5268
        %v5319 = vadd.f32 %v5007, %v5271
        %v5320 = vadd.f32 %v5008, %v5276
        %v5321 = vadd.f32 %v5009, %v5279
        %v5322 = vadd.f32 %v5010, %v5284
        %v5323 = vadd.f32 %v5011, %v5287
        %v5324 = vadd.f32 %v5012, %v5292
        %v5325 = vadd.f32 %v5013, %v5295
        %v5326 = vadd.f32 %v5014, %v5300
        %v5327 = vadd.f32 %v5015, %v5303
        %v5328 = vadd.f32 %v5016, %v5308
        %v5329 = vadd.f32 %v5017, %v5311
        %v5330 = vld [vmem:[#allocation3] sm:$0xc0]
        %v5331 = vld [vmem:[#allocation3 + $0x40] sm:$0x7f]
        %v5333 = vshrl.u32 %v5330, 16
        %v5335 = vshll.u32 %v5330, 16
        %v5337 = vrot.slane %v5335, 1
        %v5338 = vor.u32 %v5333, %v5337
        %v5339 = vsel %vm782, %v5338, %v3488
        %v5341 = vshll.u32 %v5331, 16
        %v5343 = vrot.slane %v5341, 1
        %v5344 = vsel %vm782, %v3540, %v5343
        %v5345 = vshrl.u32 %v5331, 16
        %v5347 = vor.u32 %v5345, %v5343
        %s5348 = scalar_lea.vmem [#allocation8], 768
        %v5349 = vld [vmem:[%s5348] sm:$0xf]
        %v5350 = vld [vmem:[%s5348 + $0x4] sm:$0xf]
        %v5351 = vld [vmem:[%s5348 + $0x8] sm:$0xf]
        %v5352 = vld [vmem:[%s5348 + $0xc] sm:$0xf]
        %v5353 = vld [vmem:[%s5348 + $0x10] sm:$0xf]
        %v5354 = vld [vmem:[%s5348 + $0x14] sm:$0xf]
        %v5355 = vld [vmem:[%s5348 + $0x18] sm:$0xf]
        %v5356 = vld [vmem:[%s5348 + $0x1c] sm:$0xf]
        %v5357 = vld [vmem:[%s5348 + $0x20] sm:$0xf]
        %v5358 = vld [vmem:[%s5348 + $0x24] sm:$0xf]
        %v5359 = vld [vmem:[%s5348 + $0x28] sm:$0xf]
        %v5360 = vld [vmem:[%s5348 + $0x2c] sm:$0xf]
        %v5361 = vld [vmem:[%s5348 + $0x30] sm:$0xf]
        %v5362 = vld [vmem:[%s5348 + $0x34] sm:$0xf]
        %v5363 = vld [vmem:[%s5348 + $0x38] sm:$0xf]
        %v5364 = vld [vmem:[%s5348 + $0x3c] sm:$0xf]
        %v5365 = vld [vmem:[%s5348 + $0x40] sm:$0xf]
        %v5366 = vld [vmem:[%s5348 + $0x44] sm:$0xf]
        %v5367 = vld [vmem:[%s5348 + $0x48] sm:$0xf]
        %v5368 = vld [vmem:[%s5348 + $0x4c] sm:$0xf]
        %v5369 = vld [vmem:[%s5348 + $0x50] sm:$0xf]
        %v5370 = vld [vmem:[%s5348 + $0x54] sm:$0xf]
        %v5371 = vld [vmem:[%s5348 + $0x58] sm:$0xf]
        %v5372 = vld [vmem:[%s5348 + $0x5c] sm:$0xf]
        %v5373 = vld [vmem:[%s5348 + $0x60] sm:$0xf]
        %v5374 = vld [vmem:[%s5348 + $0x64] sm:$0xf]
        %v5375 = vld [vmem:[%s5348 + $0x68] sm:$0xf]
        %v5376 = vld [vmem:[%s5348 + $0x6c] sm:$0xf]
        %v5377 = vld [vmem:[%s5348 + $0x70] sm:$0xf]
        %v5378 = vld [vmem:[%s5348 + $0x74] sm:$0xf]
        %v5379 = vld [vmem:[%s5348 + $0x78] sm:$0xf]
        %v5380 = vld [vmem:[%s5348 + $0x7c] sm:$0xf]
        %v5383 = vrot.slane %v5330, 6
        %v5384 = vrot.slane %v3470, 6
        %v5385 = vsel %vm2692, %v5383, %v5384
        %v5386 = vrot.slane %v5339, 6
        %v5387 = vrot.slane %v3497, 6
        %v5388 = vsel %vm2692, %v5386, %v5387
        %v5389 = vrot.slane %v3471, 6
        %v5390 = vsel %vm2692, %v5384, %v5389
        %v5391 = vrot.slane %v3505, 6
        %v5392 = vsel %vm2692, %v5387, %v5391
        %v5393 = vrot.slane %v3472, 6
        %v5394 = vsel %vm2692, %v5389, %v5393
        %v5395 = vrot.slane %v3513, 6
        %v5396 = vsel %vm2692, %v5391, %v5395
        %v5397 = vrot.slane %v3473, 6
        %v5398 = vsel %vm2692, %v5393, %v5397
        %v5399 = vrot.slane %v3521, 6
        %v5400 = vsel %vm2692, %v5395, %v5399
        %v5401 = vrot.slane %v3474, 6
        %v5402 = vsel %vm2692, %v5397, %v5401
        %v5403 = vrot.slane %v3529, 6
        %v5404 = vsel %vm2692, %v5399, %v5403
        %v5405 = vrot.slane %v3475, 6
        %v5406 = vsel %vm2692, %v5401, %v5405
        %v5407 = vrot.slane %v3537, 6
        %v5408 = vsel %vm2692, %v5403, %v5407
        %v5409 = vrot.slane %v3476, 6
        %v5410 = vsel %vm2692, %v5405, %v5409
        %v5411 = vrot.slane %v5344, 6
        %v5412 = vsel %vm2692, %v5407, %v5411
        %v5413 = vrot.slane %v5019, 6
        %v5414 = vsel %vm2692, %v5409, %v5413
        %v5415 = vrot.slane %v5347, 6
        %v5416 = vsel %vm2692, %v5411, %v5415
        %v5465 = vunpack.c.l.b16 %v5349
        %v5466 = vunpack.c.l.b16 %v5350
        %v5467 = vunpack.c.l.b16 %v5351
        %v5468 = vunpack.c.l.b16 %v5352
        %v5469 = vunpack.c.l.b16 %v5353
        %v5470 = vunpack.c.l.b16 %v5354
        %v5471 = vunpack.c.l.b16 %v5355
        %v5472 = vunpack.c.l.b16 %v5356
        %v5473 = vunpack.c.l.b16 %v5357
        %v5474 = vunpack.c.l.b16 %v5358
        %v5475 = vunpack.c.l.b16 %v5359
        %v5476 = vunpack.c.l.b16 %v5360
        %v5477 = vunpack.c.l.b16 %v5361
        %v5478 = vunpack.c.l.b16 %v5362
        %v5479 = vunpack.c.l.b16 %v5363
        %v5480 = vunpack.c.l.b16 %v5364
        %v5481 = vunpack.c.l.b16 %v5365
        %v5482 = vunpack.c.l.b16 %v5366
        %v5483 = vunpack.c.l.b16 %v5367
        %v5484 = vunpack.c.l.b16 %v5368
        %v5485 = vunpack.c.l.b16 %v5369
        %v5486 = vunpack.c.l.b16 %v5370
        %v5487 = vunpack.c.l.b16 %v5371
        %v5488 = vunpack.c.l.b16 %v5372
        %v5489 = vunpack.c.l.b16 %v5373
        %v5490 = vunpack.c.l.b16 %v5374
        %v5491 = vunpack.c.l.b16 %v5375
        %v5492 = vunpack.c.l.b16 %v5376
        %v5493 = vunpack.c.l.b16 %v5377
        %v5494 = vunpack.c.l.b16 %v5378
        %v5495 = vunpack.c.l.b16 %v5379
        %v5496 = vunpack.c.l.b16 %v5380
        %v5497 = vpack.c.b16 %v5466, %v5465
        %v5498 = vpack.c.b16 %v5468, %v5467
        %v5499 = vpack.c.b16 %v5470, %v5469
        %v5500 = vpack.c.b16 %v5472, %v5471
        %v5501 = vpack.c.b16 %v5474, %v5473
        %v5502 = vpack.c.b16 %v5476, %v5475
        %v5503 = vpack.c.b16 %v5478, %v5477
        %v5504 = vpack.c.b16 %v5480, %v5479
        %v5505 = vpack.c.b16 %v5482, %v5481
        %v5506 = vpack.c.b16 %v5484, %v5483
        %v5507 = vpack.c.b16 %v5486, %v5485
        %v5508 = vpack.c.b16 %v5488, %v5487
        %v5509 = vpack.c.b16 %v5490, %v5489
        %v5510 = vpack.c.b16 %v5492, %v5491
        %v5511 = vpack.c.b16 %v5494, %v5493
        %v5512 = vpack.c.b16 %v5496, %v5495
        %5529 = vmatprep.subr.bf16.mxu0 0
        %5530 = vmatpush1.bf16.msra.mxu0 %v5497
        %5531 = vmatprep.subr.bf16.mxu0 0
        %5532 = vmatpush1.bf16.msra.mxu0 %v5498
        %5533 = vmatprep.subr.bf16.mxu0 0
        %5534 = vmatpush1.bf16.msra.mxu0 %v5499
        %5535 = vmatprep.subr.bf16.mxu0 0
        %5536 = vmatpush1.bf16.msra.mxu0 %v5500
        %5537 = vmatprep.subr.bf16.mxu0 0
        %5538 = vmatpush1.bf16.msra.mxu0 %v5501
        %5539 = vmatprep.subr.bf16.mxu0 0
        %5540 = vmatpush1.bf16.msra.mxu0 %v5502
        %5541 = vmatprep.subr.bf16.mxu0 0
        %5542 = vmatpush1.bf16.msra.mxu0 %v5503
        %5543 = vmatprep.subr.bf16.mxu0 0
        %5544 = vmatpush1.bf16.msra.mxu0 %v5504
        %5545 = vmatprep.subr.bf16.mxu0 0
        %5546 = vmatpush1.bf16.msra.mxu0 %v5505
        %5547 = vmatprep.subr.bf16.mxu0 0
        %5548 = vmatpush1.bf16.msra.mxu0 %v5506
        %5549 = vmatprep.subr.bf16.mxu0 0
        %5550 = vmatpush1.bf16.msra.mxu0 %v5507
        %5551 = vmatprep.subr.bf16.mxu0 0
        %5552 = vmatpush1.bf16.msra.mxu0 %v5508
        %5553 = vmatprep.subr.bf16.mxu0 0
        %5554 = vmatpush1.bf16.msra.mxu0 %v5509
        %5555 = vmatprep.subr.bf16.mxu0 0
        %5556 = vmatpush1.bf16.msra.mxu0 %v5510
        %5557 = vmatprep.subr.bf16.mxu0 0
        %5558 = vmatpush1.bf16.msra.mxu0 %v5511
        %5559 = vmatprep.subr.bf16.mxu0 0
        %5560 = vmatpush1.bf16.msra.mxu0 %v5512
        %5561 = vmatprep.mubr.bf16.mxu0 %v5388
        %5562 = vmatmul.mubr.bf16.gmra.mrb[0].mxu0 %v5385
        %v5563 = vpop.f32.mrb[0].mxu0
        %v5564 = vadd.f32 0.0, %v5563
        %v5565 = vpop.f32.mrb[0].mxu0
        %v5566 = vpop.f32.mrb[0].mxu0
        %v5567 = vadd.f32 0.0, %v5566
        %v5568 = vpop.f32.mrb[0].mxu0
        %5569 = vmatprep.mubr.bf16.mxu0 %v5392
        %5570 = vmatmul.mubr.bf16.gmra.mrb[0].mxu0 %v5390
        %v5571 = vpop.f32.mrb[0].mxu0
        %v5572 = vadd.f32 0.0, %v5571
        %v5573 = vpop.f32.mrb[0].mxu0
        %v5574 = vpop.f32.mrb[0].mxu0
        %v5575 = vadd.f32 0.0, %v5574
        %v5576 = vpop.f32.mrb[0].mxu0
        %5577 = vmatprep.mubr.bf16.mxu0 %v5396
        %5578 = vmatmul.mubr.bf16.gmra.mrb[0].mxu0 %v5394
        %v5579 = vpop.f32.mrb[0].mxu0
        %v5580 = vadd.f32 0.0, %v5579
        %v5581 = vpop.f32.mrb[0].mxu0
        %v5582 = vpop.f32.mrb[0].mxu0
        %v5583 = vadd.f32 0.0, %v5582
        %v5584 = vpop.f32.mrb[0].mxu0
        %5585 = vmatprep.mubr.bf16.mxu0 %v5400
        %5586 = vmatmul.mubr.bf16.gmra.mrb[0].mxu0 %v5398
        %v5587 = vpop.f32.mrb[0].mxu0
        %v5588 = vadd.f32 0.0, %v5587
        %v5589 = vpop.f32.mrb[0].mxu0
        %v5590 = vpop.f32.mrb[0].mxu0
        %v5591 = vadd.f32 0.0, %v5590
        %v5592 = vpop.f32.mrb[0].mxu0
        %5593 = vmatprep.mubr.bf16.mxu0 %v5404
        %5594 = vmatmul.mubr.bf16.gmra.mrb[0].mxu0 %v5402
        %v5595 = vpop.f32.mrb[0].mxu0
        %v5596 = vadd.f32 0.0, %v5595
        %v5597 = vpop.f32.mrb[0].mxu0
        %v5598 = vpop.f32.mrb[0].mxu0
        %v5599 = vadd.f32 0.0, %v5598
        %v5600 = vpop.f32.mrb[0].mxu0
        %5601 = vmatprep.mubr.bf16.mxu0 %v5408
        %5602 = vmatmul.mubr.bf16.gmra.mrb[0].mxu0 %v5406
        %v5603 = vpop.f32.mrb[0].mxu0
        %v5604 = vadd.f32 0.0, %v5603
        %v5605 = vpop.f32.mrb[0].mxu0
        %v5606 = vpop.f32.mrb[0].mxu0
        %v5607 = vadd.f32 0.0, %v5606
        %v5608 = vpop.f32.mrb[0].mxu0
        %5609 = vmatprep.mubr.bf16.mxu0 %v5412
        %5610 = vmatmul.mubr.bf16.gmra.mrb[0].mxu0 %v5410
        %v5611 = vpop.f32.mrb[0].mxu0
        %v5612 = vadd.f32 0.0, %v5611
        %v5613 = vpop.f32.mrb[0].mxu0
        %v5614 = vpop.f32.mrb[0].mxu0
        %v5615 = vadd.f32 0.0, %v5614
        %v5616 = vpop.f32.mrb[0].mxu0
        %5617 = vmatprep.mubr.bf16.mxu0 %v5416
        %5618 = vmatmul.mubr.bf16.gmra.mrb[0].mxu0 %v5414
        %v5619 = vpop.f32.mrb[0].mxu0
        %v5620 = vadd.f32 0.0, %v5619
        %v5621 = vpop.f32.mrb[0].mxu0
        %v5622 = vpop.f32.mrb[0].mxu0
        %v5623 = vadd.f32 0.0, %v5622
        %v5624 = vpop.f32.mrb[0].mxu0
        %5625 = vdwg.mxu0
        %v5626 = vadd.f32 %v5314, %v5564
        %v5627 = vadd.f32 %v5315, %v5567
        %v5628 = vadd.f32 %v5316, %v5572
        %v5629 = vadd.f32 %v5317, %v5575
        %v5630 = vadd.f32 %v5318, %v5580
        %v5631 = vadd.f32 %v5319, %v5583
        %v5632 = vadd.f32 %v5320, %v5588
        %v5633 = vadd.f32 %v5321, %v5591
        %v5634 = vadd.f32 %v5322, %v5596
        %v5635 = vadd.f32 %v5323, %v5599
        %v5636 = vadd.f32 %v5324, %v5604
        %v5637 = vadd.f32 %v5325, %v5607
        %v5638 = vadd.f32 %v5326, %v5612
        %v5639 = vadd.f32 %v5327, %v5615
        %v5640 = vadd.f32 %v5328, %v5620
        %v5641 = vadd.f32 %v5329, %v5623
        %v5642 = vld [vmem:[#allocation3] sm:$0x80]
        %v5643 = vld [vmem:[#allocation3 + $0x40] sm:$0xff]
        %v5645 = vshrl.u32 %v5642, 16
        %v5647 = vsel %vm782, %v5645, %v3488
        %v5649 = vshll.u32 %v5643, 16
        %v5651 = vrot.slane %v5649, 1
        %v5652 = vsel %vm782, %v3540, %v5651
        %v5653 = vshrl.u32 %v5643, 16
        %v5655 = vor.u32 %v5653, %v5651
        %s5656 = scalar_lea.vmem [#allocation8], 896
        %v5657 = vld [vmem:[%s5656] sm:$0xf]
        %v5658 = vld [vmem:[%s5656 + $0x4] sm:$0xf]
        %v5659 = vld [vmem:[%s5656 + $0x8] sm:$0xf]
        %v5660 = vld [vmem:[%s5656 + $0xc] sm:$0xf]
        %v5661 = vld [vmem:[%s5656 + $0x10] sm:$0xf]
        %v5662 = vld [vmem:[%s5656 + $0x14] sm:$0xf]
        %v5663 = vld [vmem:[%s5656 + $0x18] sm:$0xf]
        %v5664 = vld [vmem:[%s5656 + $0x1c] sm:$0xf]
        %v5665 = vld [vmem:[%s5656 + $0x20] sm:$0xf]
        %v5666 = vld [vmem:[%s5656 + $0x24] sm:$0xf]
        %v5667 = vld [vmem:[%s5656 + $0x28] sm:$0xf]
        %v5668 = vld [vmem:[%s5656 + $0x2c] sm:$0xf]
        %v5669 = vld [vmem:[%s5656 + $0x30] sm:$0xf]
        %v5670 = vld [vmem:[%s5656 + $0x34] sm:$0xf]
        %v5671 = vld [vmem:[%s5656 + $0x38] sm:$0xf]
        %v5672 = vld [vmem:[%s5656 + $0x3c] sm:$0xf]
        %v5673 = vld [vmem:[%s5656 + $0x40] sm:$0xf]
        %v5674 = vld [vmem:[%s5656 + $0x44] sm:$0xf]
        %v5675 = vld [vmem:[%s5656 + $0x48] sm:$0xf]
        %v5676 = vld [vmem:[%s5656 + $0x4c] sm:$0xf]
        %v5677 = vld [vmem:[%s5656 + $0x50] sm:$0xf]
        %v5678 = vld [vmem:[%s5656 + $0x54] sm:$0xf]
        %v5679 = vld [vmem:[%s5656 + $0x58] sm:$0xf]
        %v5680 = vld [vmem:[%s5656 + $0x5c] sm:$0xf]
        %v5681 = vld [vmem:[%s5656 + $0x60] sm:$0xf]
        %v5682 = vld [vmem:[%s5656 + $0x64] sm:$0xf]
        %v5683 = vld [vmem:[%s5656 + $0x68] sm:$0xf]
        %v5684 = vld [vmem:[%s5656 + $0x6c] sm:$0xf]
        %v5685 = vld [vmem:[%s5656 + $0x70] sm:$0xf]
        %v5686 = vld [vmem:[%s5656 + $0x74] sm:$0xf]
        %v5687 = vld [vmem:[%s5656 + $0x78] sm:$0xf]
        %v5688 = vld [vmem:[%s5656 + $0x7c] sm:$0xf]
        %v5691 = vrot.slane %v5642, 7
        %v5692 = vrot.slane %v3470, 7
        %v5693 = vsel %vm3001, %v5691, %v5692
        %v5694 = vrot.slane %v5647, 7
        %v5695 = vrot.slane %v3497, 7
        %v5696 = vsel %vm3001, %v5694, %v5695
        %v5697 = vrot.slane %v3471, 7
        %v5698 = vsel %vm3001, %v5692, %v5697
        %v5699 = vrot.slane %v3505, 7
        %v5700 = vsel %vm3001, %v5695, %v5699
        %v5701 = vrot.slane %v3472, 7
        %v5702 = vsel %vm3001, %v5697, %v5701
        %v5703 = vrot.slane %v3513, 7
        %v5704 = vsel %vm3001, %v5699, %v5703
        %v5705 = vrot.slane %v3473, 7
        %v5706 = vsel %vm3001, %v5701, %v5705
        %v5707 = vrot.slane %v3521, 7
        %v5708 = vsel %vm3001, %v5703, %v5707
        %v5709 = vrot.slane %v3474, 7
        %v5710 = vsel %vm3001, %v5705, %v5709
        %v5711 = vrot.slane %v3529, 7
        %v5712 = vsel %vm3001, %v5707, %v5711
        %v5713 = vrot.slane %v3475, 7
        %v5714 = vsel %vm3001, %v5709, %v5713
        %v5715 = vrot.slane %v3537, 7
        %v5716 = vsel %vm3001, %v5711, %v5715
        %v5717 = vrot.slane %v3476, 7
        %v5718 = vsel %vm3001, %v5713, %v5717
        %v5719 = vrot.slane %v5652, 7
        %v5720 = vsel %vm3001, %v5715, %v5719
        %v5721 = vrot.slane %v5331, 7
        %v5722 = vsel %vm3001, %v5717, %v5721
        %v5723 = vrot.slane %v5655, 7
        %v5724 = vsel %vm3001, %v5719, %v5723
        %v5773 = vunpack.c.l.b16 %v5657
        %v5774 = vunpack.c.l.b16 %v5658
        %v5775 = vunpack.c.l.b16 %v5659
        %v5776 = vunpack.c.l.b16 %v5660
        %v5777 = vunpack.c.l.b16 %v5661
        %v5778 = vunpack.c.l.b16 %v5662
        %v5779 = vunpack.c.l.b16 %v5663
        %v5780 = vunpack.c.l.b16 %v5664
        %v5781 = vunpack.c.l.b16 %v5665
        %v5782 = vunpack.c.l.b16 %v5666
        %v5783 = vunpack.c.l.b16 %v5667
        %v5784 = vunpack.c.l.b16 %v5668
        %v5785 = vunpack.c.l.b16 %v5669
        %v5786 = vunpack.c.l.b16 %v5670
        %v5787 = vunpack.c.l.b16 %v5671
        %v5788 = vunpack.c.l.b16 %v5672
        %v5789 = vunpack.c.l.b16 %v5673
        %v5790 = vunpack.c.l.b16 %v5674
        %v5791 = vunpack.c.l.b16 %v5675
        %v5792 = vunpack.c.l.b16 %v5676
        %v5793 = vunpack.c.l.b16 %v5677
        %v5794 = vunpack.c.l.b16 %v5678
        %v5795 = vunpack.c.l.b16 %v5679
        %v5796 = vunpack.c.l.b16 %v5680
        %v5797 = vunpack.c.l.b16 %v5681
        %v5798 = vunpack.c.l.b16 %v5682
        %v5799 = vunpack.c.l.b16 %v5683
        %v5800 = vunpack.c.l.b16 %v5684
        %v5801 = vunpack.c.l.b16 %v5685
        %v5802 = vunpack.c.l.b16 %v5686
        %v5803 = vunpack.c.l.b16 %v5687
        %v5804 = vunpack.c.l.b16 %v5688
        %v5805 = vpack.c.b16 %v5774, %v5773
        %v5806 = vpack.c.b16 %v5776, %v5775
        %v5807 = vpack.c.b16 %v5778, %v5777
        %v5808 = vpack.c.b16 %v5780, %v5779
        %v5809 = vpack.c.b16 %v5782, %v5781
        %v5810 = vpack.c.b16 %v5784, %v5783
        %v5811 = vpack.c.b16 %v5786, %v5785
        %v5812 = vpack.c.b16 %v5788, %v5787
        %v5813 = vpack.c.b16 %v5790, %v5789
        %v5814 = vpack.c.b16 %v5792, %v5791
        %v5815 = vpack.c.b16 %v5794, %v5793
        %v5816 = vpack.c.b16 %v5796, %v5795
        %v5817 = vpack.c.b16 %v5798, %v5797
        %v5818 = vpack.c.b16 %v5800, %v5799
        %v5819 = vpack.c.b16 %v5802, %v5801
        %v5820 = vpack.c.b16 %v5804, %v5803
        %5837 = vmatprep.subr.bf16.mxu0 0
        %5838 = vmatpush1.bf16.msra.mxu0 %v5805
        %5839 = vmatprep.subr.bf16.mxu0 0
        %5840 = vmatpush1.bf16.msra.mxu0 %v5806
        %5841 = vmatprep.subr.bf16.mxu0 0
        %5842 = vmatpush1.bf16.msra.mxu0 %v5807
        %5843 = vmatprep.subr.bf16.mxu0 0
        %5844 = vmatpush1.bf16.msra.mxu0 %v5808
        %5845 = vmatprep.subr.bf16.mxu0 0
        %5846 = vmatpush1.bf16.msra.mxu0 %v5809
        %5847 = vmatprep.subr.bf16.mxu0 0
        %5848 = vmatpush1.bf16.msra.mxu0 %v5810
        %5849 = vmatprep.subr.bf16.mxu0 0
        %5850 = vmatpush1.bf16.msra.mxu0 %v5811
        %5851 = vmatprep.subr.bf16.mxu0 0
        %5852 = vmatpush1.bf16.msra.mxu0 %v5812
        %5853 = vmatprep.subr.bf16.mxu0 0
        %5854 = vmatpush1.bf16.msra.mxu0 %v5813
        %5855 = vmatprep.subr.bf16.mxu0 0
        %5856 = vmatpush1.bf16.msra.mxu0 %v5814
        %5857 = vmatprep.subr.bf16.mxu0 0
        %5858 = vmatpush1.bf16.msra.mxu0 %v5815
        %5859 = vmatprep.subr.bf16.mxu0 0
        %5860 = vmatpush1.bf16.msra.mxu0 %v5816
        %5861 = vmatprep.subr.bf16.mxu0 0
        %5862 = vmatpush1.bf16.msra.mxu0 %v5817
        %5863 = vmatprep.subr.bf16.mxu0 0
        %5864 = vmatpush1.bf16.msra.mxu0 %v5818
        %5865 = vmatprep.subr.bf16.mxu0 0
        %5866 = vmatpush1.bf16.msra.mxu0 %v5819
        %5867 = vmatprep.subr.bf16.mxu0 0
        %5868 = vmatpush1.bf16.msra.mxu0 %v5820
        %5869 = vmatprep.mubr.bf16.mxu0 %v5696
        %5870 = vmatmul.mubr.bf16.gmra.mrb[0].mxu0 %v5693
        %v5871 = vpop.f32.mrb[0].mxu0
        %v5872 = vadd.f32 0.0, %v5871
        %v5873 = vpop.f32.mrb[0].mxu0
        %v5874 = vpop.f32.mrb[0].mxu0
        %v5875 = vadd.f32 0.0, %v5874
        %v5876 = vpop.f32.mrb[0].mxu0
        %5877 = vmatprep.mubr.bf16.mxu0 %v5700
        %5878 = vmatmul.mubr.bf16.gmra.mrb[0].mxu0 %v5698
        %v5879 = vpop.f32.mrb[0].mxu0
        %v5880 = vadd.f32 0.0, %v5879
        %v5881 = vpop.f32.mrb[0].mxu0
        %v5882 = vpop.f32.mrb[0].mxu0
        %v5883 = vadd.f32 0.0, %v5882
        %v5884 = vpop.f32.mrb[0].mxu0
        %5885 = vmatprep.mubr.bf16.mxu0 %v5704
        %5886 = vmatmul.mubr.bf16.gmra.mrb[0].mxu0 %v5702
        %v5887 = vpop.f32.mrb[0].mxu0
        %v5888 = vadd.f32 0.0, %v5887
        %v5889 = vpop.f32.mrb[0].mxu0
        %v5890 = vpop.f32.mrb[0].mxu0
        %v5891 = vadd.f32 0.0, %v5890
        %v5892 = vpop.f32.mrb[0].mxu0
        %5893 = vmatprep.mubr.bf16.mxu0 %v5708
        %5894 = vmatmul.mubr.bf16.gmra.mrb[0].mxu0 %v5706
        %v5895 = vpop.f32.mrb[0].mxu0
        %v5896 = vadd.f32 0.0, %v5895
        %v5897 = vpop.f32.mrb[0].mxu0
        %v5898 = vpop.f32.mrb[0].mxu0
        %v5899 = vadd.f32 0.0, %v5898
        %v5900 = vpop.f32.mrb[0].mxu0
        %5901 = vmatprep.mubr.bf16.mxu0 %v5712
        %5902 = vmatmul.mubr.bf16.gmra.mrb[0].mxu0 %v5710
        %v5903 = vpop.f32.mrb[0].mxu0
        %v5904 = vadd.f32 0.0, %v5903
        %v5905 = vpop.f32.mrb[0].mxu0
        %v5906 = vpop.f32.mrb[0].mxu0
        %v5907 = vadd.f32 0.0, %v5906
        %v5908 = vpop.f32.mrb[0].mxu0
        %5909 = vmatprep.mubr.bf16.mxu0 %v5716
        %5910 = vmatmul.mubr.bf16.gmra.mrb[0].mxu0 %v5714
        %v5911 = vpop.f32.mrb[0].mxu0
        %v5912 = vadd.f32 0.0, %v5911
        %v5913 = vpop.f32.mrb[0].mxu0
        %v5914 = vpop.f32.mrb[0].mxu0
        %v5915 = vadd.f32 0.0, %v5914
        %v5916 = vpop.f32.mrb[0].mxu0
        %5917 = vmatprep.mubr.bf16.mxu0 %v5720
        %5918 = vmatmul.mubr.bf16.gmra.mrb[0].mxu0 %v5718
        %v5919 = vpop.f32.mrb[0].mxu0
        %v5920 = vadd.f32 0.0, %v5919
        %v5921 = vpop.f32.mrb[0].mxu0
        %v5922 = vpop.f32.mrb[0].mxu0
        %v5923 = vadd.f32 0.0, %v5922
        %v5924 = vpop.f32.mrb[0].mxu0
        %5925 = vmatprep.mubr.bf16.mxu0 %v5724
        %5926 = vmatmul.mubr.bf16.gmra.mrb[0].mxu0 %v5722
        %v5927 = vpop.f32.mrb[0].mxu0
        %v5928 = vadd.f32 0.0, %v5927
        %v5929 = vpop.f32.mrb[0].mxu0
        %v5930 = vpop.f32.mrb[0].mxu0
        %v5931 = vadd.f32 0.0, %v5930
        %v5932 = vpop.f32.mrb[0].mxu0
        %5933 = vdwg.mxu0
        %v5934 = vadd.f32 %v5626, %v5872
        %v5935 = vadd.f32 %v5627, %v5875
        %v5936 = vadd.f32 %v5628, %v5880
        %v5937 = vadd.f32 %v5629, %v5883
        %v5938 = vadd.f32 %v5630, %v5888
        %v5939 = vadd.f32 %v5631, %v5891
        %v5940 = vadd.f32 %v5632, %v5896
        %v5941 = vadd.f32 %v5633, %v5899
        %v5942 = vadd.f32 %v5634, %v5904
        %v5943 = vadd.f32 %v5635, %v5907
        %v5944 = vadd.f32 %v5636, %v5912
        %v5945 = vadd.f32 %v5637, %v5915
        %v5946 = vadd.f32 %v5638, %v5920
        %v5947 = vadd.f32 %v5639, %v5923
        %v5948 = vadd.f32 %v5640, %v5928
        %v5949 = vadd.f32 %v5641, %v5931
        %v5950 = vld [vmem:[%s7] sm:$0x1]
        %v5952 = vlaneseq
        %v5953 = vshrl.u32 %v5952, 7
        %v5954 = vsub.s32 0, %v5953
        %v5955 = vrot.slane %v5950, %v5954
        %v5957 = vadd.f32 %v5934, %v5955
        %v5958 = vadd.f32 %v5935, %v5955
        %v5959 = vadd.f32 %v5936, %v5955
        %v5960 = vadd.f32 %v5937, %v5955
        %v5961 = vadd.f32 %v5938, %v5955
        %v5962 = vadd.f32 %v5939, %v5955
        %v5963 = vadd.f32 %v5940, %v5955
        %v5964 = vadd.f32 %v5941, %v5955
        %v5965 = vadd.f32 %v5942, %v5955
        %v5966 = vadd.f32 %v5943, %v5955
        %v5967 = vadd.f32 %v5944, %v5955
        %v5968 = vadd.f32 %v5945, %v5955
        %v5969 = vadd.f32 %v5946, %v5955
        %v5970 = vadd.f32 %v5947, %v5955
        %v5971 = vadd.f32 %v5948, %v5955
        %v5972 = vadd.f32 %v5949, %v5955
        %v5973 = vmax.f32 %v5957, 0.0
        %v5974 = vmax.f32 %v5958, 0.0
        %v5975 = vmax.f32 %v5959, 0.0
        %v5976 = vmax.f32 %v5960, 0.0
        %v5977 = vmax.f32 %v5961, 0.0
        %v5978 = vmax.f32 %v5962, 0.0
        %v5979 = vmax.f32 %v5963, 0.0
        %v5980 = vmax.f32 %v5964, 0.0
        %v5981 = vmax.f32 %v5965, 0.0
        %v5982 = vmax.f32 %v5966, 0.0
        %v5983 = vmax.f32 %v5967, 0.0
        %v5984 = vmax.f32 %v5968, 0.0
        %v5985 = vmax.f32 %v5969, 0.0
        %v5986 = vmax.f32 %v5970, 0.0
        %v5987 = vmax.f32 %v5971, 0.0
        %v5988 = vmax.f32 %v5972, 0.0
        %v5989 = vld [vmem:[%s8] sm:$0xff]
        %5990 = vmatprep.subr.mxu0 0.0
        %5991 = vmatpush1.xpose.msra.mxu0 %v5973
        %5992 = vmatprep.subr.mxu0 0.0
        %5993 = vmatpush1.xpose.msra.mxu0 %v5974
        %5994 = vmatprep.subr.mxu0 0.0
        %5995 = vmatpush1.xpose.msra.mxu0 %v5975
        %5996 = vmatprep.subr.mxu0 0.0
        %5997 = vmatpush1.xpose.msra.mxu0 %v5976
        %5998 = vmatprep.subr.mxu0 0.0
        %5999 = vmatpush1.xpose.msra.mxu0 %v5977
        %6000 = vmatprep.subr.mxu0 0.0
        %6001 = vmatpush1.xpose.msra.mxu0 %v5978
        %6002 = vmatprep.subr.mxu0 0.0
        %6003 = vmatpush1.xpose.msra.mxu0 %v5979
        %6004 = vmatprep.subr.mxu0 0.0
        %6005 = vmatpush1.xpose.msra.mxu0 %v5980
        %6006 = vmatprep.subr.mxu0 0.0
        %6007 = vmatpush1.xpose.msra.mxu0 %v5981
        %6008 = vmatprep.subr.mxu0 0.0
        %6009 = vmatpush1.xpose.msra.mxu0 %v5982
        %6010 = vmatprep.subr.mxu0 0.0
        %6011 = vmatpush1.xpose.msra.mxu0 %v5983
        %6012 = vmatprep.subr.mxu0 0.0
        %6013 = vmatpush1.xpose.msra.mxu0 %v5984
        %6014 = vmatprep.subr.mxu0 0.0
        %6015 = vmatpush1.xpose.msra.mxu0 %v5985
        %6016 = vmatprep.subr.mxu0 0.0
        %6017 = vmatpush1.xpose.msra.mxu0 %v5986
        %6018 = vmatprep.subr.mxu0 0.0
        %6019 = vmatpush1.xpose.msra.mxu0 %v5987
        %6020 = vmatprep.subr.mxu0 0.0
        %6021 = vmatpush1.xpose.msra.mxu0 %v5988
        %6022 = vmatprep.subr.mxu0 0.0
        %6023 = vmatpush1.xpose.msra.mxu0 0.0
        %6024 = vmatprep.subr.mxu0 0.0
        %6025 = vmatpush1.xpose.msra.mxu0 0.0
        %6026 = vmatprep.subr.mxu0 0.0
        %6027 = vmatpush1.xpose.msra.mxu0 0.0
        %6028 = vmatprep.subr.mxu0 0.0
        %6029 = vmatpush1.xpose.msra.mxu0 0.0
        %6030 = vmatprep.subr.mxu0 0.0
        %6031 = vmatpush1.xpose.msra.mxu0 0.0
        %6032 = vmatprep.subr.mxu0 0.0
        %6033 = vmatpush1.xpose.msra.mxu0 0.0
        %6034 = vmatprep.subr.mxu0 0.0
        %6035 = vmatpush1.xpose.msra.mxu0 0.0
        %6036 = vmatprep.subr.mxu0 0.0
        %6037 = vmatpush1.xpose.msra.mxu0 0.0
        %6038 = vmatprep.subr.mxu0 0.0
        %6039 = vmatpush1.xpose.msra.mxu0 0.0
        %6040 = vmatprep.subr.mxu0 0.0
        %6041 = vmatpush1.xpose.msra.mxu0 0.0
        %6042 = vmatprep.subr.mxu0 0.0
        %6043 = vmatpush1.xpose.msra.mxu0 0.0
        %6044 = vmatprep.subr.mxu0 0.0
        %6045 = vmatpush1.xpose.msra.mxu0 0.0
        %6046 = vmatprep.subr.mxu0 0.0
        %6047 = vmatpush1.xpose.msra.mxu0 0.0
        %6048 = vmatprep.subr.mxu0 0.0
        %6049 = vmatpush1.xpose.msra.mxu0 0.0
        %6050 = vmatprep.subr.mxu0 0.0
        %6051 = vmatpush1.xpose.msra.mxu0 0.0
        %6052 = vmatprep.subr.mxu0 0.0
        %6053 = vmatpush1.xpose.msra.mxu0 0.0
        %6054 = vmatprep.mubr.f32.mxu0 0.0
        %6055 = vmatmul.mubr.f32.gmra.mrb[0].mxu0 %v5989
        %v6056 = vpop.f32.mrb[0].mxu0
        %v6057 = vadd.f32 0.0, %v6056
        %v6058 = vpop.f32.mrb[0].mxu0
        %6059 = vdwg.mxu0
        %v6060 = vld [vmem:[#allocation4] sm:$0x1]
        %6062 = vset.pattern.permute.xlu0 0
        %6063 = vperm.xlu0 %6062, %v6060
        %v6064 = vpop.permute.xlu0 %6063
        %v6066 = vlaneseq
        %v6067 = vshrl.u32 %v6066, 7
        %v6068 = vsub.s32 0, %v6067
        %v6069 = vrot.slane %v6064, %v6068
        %v6070 = vadd.f32 %v6057, %v6069
        %6071 = vst [vmem:[%s383] sm:$0x1] %v6070
        %s6072 = sand.u32 %s251, 1
        %s6073 = scalar_lea.sflag [#allocation7], %s6072
        %s6074 = sand.u32 %s251, 1
        %s6075 = scalar_lea.vmem [#allocation10], %s6074
        // Predicated region
        $region69: #{tpu_custom_call.1} parent=59 // pred_check
          %p6076 = pneg %p261
        $region70: #{tpu_custom_call.1} parent=59 // pred_check_branch
          %6078 = sbr.rel (%p6076) target = $region72
        $region71: #{tpu_custom_call.1} parent=59 // pred_region
          %s6080 = ssub.s32 16, 16
          %6081 = vsyncadd %s6073, %s6080
          %s6082 = smul.addr %s28, 16
          %s6083 = scalar_lea.hbm %s10, %s6082
          %s6085 = sshll.u32 %s6075, 4
          %s6086 = int_to_ptr.vmem [resolvable:$true] %s6085
          %6088 = dma.vmem_to_hbm [thread:$0]  %s6086, 16, %s6083, %s6073
        $region72: #{tpu_custom_call.1} parent=59 // pred_fallthru
          _
      $region60: #{tpu_custom_call.1} parent=5 // pred_fallthru
        _
      %p6089 = scmp.le.s32.totalorder 2, %s23
      // Predicated region
      $region73: #{tpu_custom_call.1} parent=5 // pred_check
        %p6090 = pneg %p6089
      $region74: #{tpu_custom_call.1} parent=5 // pred_check_branch
        %6092 = sbr.rel (%p6090) target = $region76
      $region75: #{tpu_custom_call.1} parent=5 // pred_region
        %s6093 = ssub.s32 %s23, 2
        // Predicated region
        $region77: #{tpu_custom_call.1} parent=75 // pred_check
          %p6094 = pneg %p267
        $region78: #{tpu_custom_call.1} parent=75 // pred_check_branch
          %6096 = sbr.rel (%p6094) target = $region80
        $region79: #{tpu_custom_call.1} parent=75 // pred_region
          %s6097 = sand.u32 %s252, 1
          %s6098 = scalar_lea.sflag [#allocation7], %s6097
          %s6099 = sand.u32 %s252, 1
          %s6100 = scalar_lea.vmem [#allocation10], %s6099
          %6101 = dma.done %s6098, 16
        $region80: #{tpu_custom_call.1} parent=75 // pred_fallthru
          _
      $region76: #{tpu_custom_call.1} parent=5 // pred_fallthru
        _
    $region6: #{tpu_custom_call.1} parent=1 // loop_footer
      %s27 = sadd.s32 1, %s23
    $region7: #{tpu_custom_call.1} parent=1 // loop_footer_branch
      %22 = sbr.rel target = $region3
    $region8: #{tpu_custom_call.1} parent=1 // loop_exit
      _
    %6102 = vsyncpa [#allocation6], 1
    %s6103 = scalar_lea.sflag [#allocation6], 1
    %6104 = vsyncpa %s6103, 1
    %6105 = vsyncpa [#allocation9], 1
    %6106 = vsyncpa [#allocation7], 1
    %s6107 = scalar_lea.sflag [#allocation7], 1
    %6108 = vsyncpa %s6107, 1

</llo_original>
